<compile_context>
chip_gen: v7x
topology: tpu7x:2x2x1
jax: 0.10.0
libtpu: 0.0.40
codegen_flags: <defaults>
</compile_context>

<pallas_src>
import functools
import math

import jax
import jax.numpy as jnp
from jax import lax
from jax.experimental import pallas as pl
from jax.experimental.pallas import tpu as pltpu


# ------------------------------------------------------------- TPU budgeting

@functools.lru_cache(maxsize=None)
def _vmem_capacity_bytes():
    try:
        info = pltpu.get_tpu_info()
        cap = getattr(info, "vmem_capacity_bytes", None)
        if cap:
            return int(cap)
    except Exception:
        pass
    return 64 * 1024 * 1024  # conservative default (v7x physical per-TC)


@functools.lru_cache(maxsize=None)
def _vmem_limit_bytes():
    cap = _vmem_capacity_bytes()
    if cap >= 128 * 1024 * 1024:                 # v5e / v6e: 128 MiB physical
        return 100 * 1024 * 1024
    # v7x: leave headroom under 64 MiB for compiler scratch / double buffers
    return max(cap - 16 * 1024 * 1024, 32 * 1024 * 1024)


@functools.lru_cache(maxsize=None)
def _row_tile_max():
    return 1024 if _vmem_capacity_bytes() >= 128 * 1024 * 1024 else 512


_COL_TILE_MAX = 512  # weight / FFN-hidden column tile (multiple of 128)


def _cparams(semantics):
    return pltpu.CompilerParams(
        dimension_semantics=semantics,
        vmem_limit_bytes=_vmem_limit_bytes(),
    )


def _pick_tile(m, max_tile):
    """Largest nice divisor of m that is <= max_tile (full block if small)."""
    if m <= max_tile:
        return m
    for t in (1024, 512, 256, 128, 64, 32, 16, 8):
        if t <= max_tile and m % t == 0:
            return t
    return m  # fallback: full block (still a valid BlockSpec)


# ------------------------------------------------------------ Pallas kernels

def _matmul_bias_kernel(x_ref, w_ref, b_ref, o_ref):
    # y = x @ W + b     bf16 MXU operands, f32 accumulate.
    x = x_ref[...].astype(jnp.bfloat16)
    o_ref[...] = (
        jnp.dot(x, w_ref[...], preferred_element_type=jnp.float32) + b_ref[...]
    )


def _matmul_bias_residual_kernel(x_ref, w_ref, b_ref, r_ref, o_ref):
    # y = residual + x @ W + b
    x = x_ref[...].astype(jnp.bfloat16)
    o_ref[...] = (
        r_ref[...]
        + jnp.dot(x, w_ref[...], preferred_element_type=jnp.float32)
        + b_ref[...]
    )


def _ln_matmul_kernel(x_ref, g_ref, bln_ref, w_ref, b_ref, o_ref, hln_ref):
    # y = LayerNorm(x) @ W + b.  LN stats in f32 (eps=1e-5, torch default).
    # The normalized activation is cached (bf16) in scratch at j==0 and reused
    # for every output-column tile j (j axis is "arbitrary" so megacore never
    # splits it away from its j==0 step).
    @pl.when(pl.program_id(1) == 0)
    def _():
        x = x_ref[...]
        mu = jnp.mean(x, axis=-1, keepdims=True)
        var = jnp.mean((x - mu) ** 2, axis=-1, keepdims=True)
        h = (x - mu) * lax.rsqrt(var + 1e-5) * g_ref[...] + bln_ref[...]
        hln_ref[...] = h.astype(jnp.bfloat16)

    o_ref[...] = (
        jnp.dot(hln_ref[...], w_ref[...], preferred_element_type=jnp.float32)
        + b_ref[...]
    )


def _ln_ffn_residual_kernel(x_ref, g_ref, bln_ref, w1_ref, b1_ref,
                            w2_ref, b2_ref, o_ref, hln_ref, acc_ref):
    # y = x + Linear2(ReLU(Linear1(LayerNorm(x))))      (Dropout = identity)
    # FFN hidden dim is tiled along grid axis 1 ("arbitrary" reduction) so the
    # [D,4D]/[4D,D] weights are never fully VMEM-resident.
    j = pl.program_id(1)

    @pl.when(j == 0)
    def _():
        x = x_ref[...]
        mu = jnp.mean(x, axis=-1, keepdims=True)
        var = jnp.mean((x - mu) ** 2, axis=-1, keepdims=True)
        h = (x - mu) * lax.rsqrt(var + 1e-5) * g_ref[...] + bln_ref[...]
        hln_ref[...] = h.astype(jnp.bfloat16)
        acc_ref[...] = x + b2_ref[...]          # residual + final bias

    h1 = (
        jnp.dot(hln_ref[...], w1_ref[...], preferred_element_type=jnp.float32)
        + b1_ref[...]
    )
    h1 = jnp.maximum(h1, 0.0)
    acc_ref[...] += jnp.dot(
        h1.astype(jnp.bfloat16), w2_ref[...], preferred_element_type=jnp.float32
    )

    @pl.when(j == pl.num_programs(1) - 1)
    def _():
        o_ref[...] = acc_ref[...]


def _attn_kernel(q_ref, k_ref, v_ref, bias_ref, o_ref, *, n_heads, dh, scale):
    # One (batch, q-tile) per grid step; heads via a static unrolled loop so
    # the live score tensor is only [tq, S] per head.
    #   q_ref : [1, tq, D]   k_ref, v_ref : [1, S, D]   bias_ref : [1, 1, S]
    #   o_ref : [1, tq, D]   (lane-dense store, heads merged in-kernel)
    bias = bias_ref[0]                                       # [1, S] additive
    outs = []
    for h in range(n_heads):
        sl = slice(h * dh, (h + 1) * dh)
        q = (q_ref[0, :, sl] * scale).astype(jnp.bfloat16)   # [tq, Dh]
        k = k_ref[0, :, sl].astype(jnp.bfloat16)             # [S, Dh]
        v = v_ref[0, :, sl].astype(jnp.bfloat16)             # [S, Dh]
        s = lax.dot_general(
            q, k, dimension_numbers=(((1,), (1,)), ((), ())),
            preferred_element_type=jnp.float32)              # [tq, S]
        s = s + bias
        m = jnp.max(s, axis=-1, keepdims=True)
        p = jnp.exp(s - m)
        denom = jnp.sum(p, axis=-1, keepdims=True)
        p = p * pl.reciprocal(denom, approx=True)            # EUP slot
        o = jnp.dot(p.astype(jnp.bfloat16), v,
                    preferred_element_type=jnp.float32)      # [tq, Dh]
        outs.append(o)
    o_ref[0] = jnp.concatenate(outs, axis=-1)                # [tq, D] lane-dense
    # TODO(synk): online-softmax (flash) KV-tile grid axis + m/l/acc scratch so
    # the [tq, S] scores stay bounded for very long S on v7x's 64 MiB VMEM.


# ----------------------------------------------------------- Pallas wrappers

def linear(x2d, w, b):
    M, Din = x2d.shape
    Dout = w.shape[1]
    tm = _pick_tile(M, _row_tile_max())
    tn = _pick_tile(Dout, _COL_TILE_MAX)
    return pl.pallas_call(
        _matmul_bias_kernel,
        out_shape=jax.ShapeDtypeStruct((M, Dout), jnp.float32),
        grid=(M // tm, Dout // tn),
        in_specs=[
            pl.BlockSpec((tm, Din), lambda i, j: (i, 0)),
            pl.BlockSpec((Din, tn), lambda i, j: (0, j)),
            pl.BlockSpec((1, tn), lambda i, j: (0, j)),
        ],
        out_specs=pl.BlockSpec((tm, tn), lambda i, j: (i, j)),
        compiler_params=_cparams(("parallel", "parallel")),
    )(x2d, w, b[None, :])


def linear_residual(x2d, w, b, res2d):
    M, Din = x2d.shape
    Dout = w.shape[1]
    tm = _pick_tile(M, _row_tile_max())
    tn = _pick_tile(Dout, _COL_TILE_MAX)
    return pl.pallas_call(
        _matmul_bias_residual_kernel,
        out_shape=jax.ShapeDtypeStruct((M, Dout), jnp.float32),
        grid=(M // tm, Dout // tn),
        in_specs=[
            pl.BlockSpec((tm, Din), lambda i, j: (i, 0)),
            pl.BlockSpec((Din, tn), lambda i, j: (0, j)),
            pl.BlockSpec((1, tn), lambda i, j: (0, j)),
            pl.BlockSpec((tm, tn), lambda i, j: (i, j)),
        ],
        out_specs=pl.BlockSpec((tm, tn), lambda i, j: (i, j)),
        compiler_params=_cparams(("parallel", "parallel")),
    )(x2d, w, b[None, :], res2d)


def ln_linear(x2d, g, beta, w, b):
    M, Din = x2d.shape
    Dout = w.shape[1]
    tm = _pick_tile(M, _row_tile_max())
    tn = _pick_tile(Dout, _COL_TILE_MAX)
    return pl.pallas_call(
        _ln_matmul_kernel,
        out_shape=jax.ShapeDtypeStruct((M, Dout), jnp.float32),
        grid=(M // tm, Dout // tn),
        in_specs=[
            pl.BlockSpec((tm, Din), lambda i, j: (i, 0)),
            pl.BlockSpec((1, Din), lambda i, j: (0, 0)),
            pl.BlockSpec((1, Din), lambda i, j: (0, 0)),
            pl.BlockSpec((Din, tn), lambda i, j: (0, j)),
            pl.BlockSpec((1, tn), lambda i, j: (0, j)),
        ],
        out_specs=pl.BlockSpec((tm, tn), lambda i, j: (i, j)),
        scratch_shapes=[pltpu.VMEM((tm, Din), jnp.bfloat16)],
        compiler_params=_cparams(("parallel", "arbitrary")),
    )(x2d, g[None, :], beta[None, :], w, b[None, :])


def ln_ffn_residual(x2d, g, beta, w1, b1, w2, b2):
    M, D = x2d.shape
    Hd = w1.shape[1]
    tm = _pick_tile(M, _row_tile_max())
    th = _pick_tile(Hd, _COL_TILE_MAX)
    return pl.pallas_call(
        _ln_ffn_residual_kernel,
        out_shape=jax.ShapeDtypeStruct((M, D), jnp.float32),
        grid=(M // tm, Hd // th),
        in_specs=[
            pl.BlockSpec((tm, D), lambda i, j: (i, 0)),
            pl.BlockSpec((1, D), lambda i, j: (0, 0)),
            pl.BlockSpec((1, D), lambda i, j: (0, 0)),
            pl.BlockSpec((D, th), lambda i, j: (0, j)),
            pl.BlockSpec((1, th), lambda i, j: (0, j)),
            pl.BlockSpec((th, D), lambda i, j: (j, 0)),
            pl.BlockSpec((1, D), lambda i, j: (0, 0)),
        ],
        out_specs=pl.BlockSpec((tm, D), lambda i, j: (i, 0)),
        scratch_shapes=[
            pltpu.VMEM((tm, D), jnp.bfloat16),   # cached LayerNorm(x)
            pltpu.VMEM((tm, D), jnp.float32),    # output accumulator
        ],
        compiler_params=_cparams(("parallel", "arbitrary")),
    )(x2d, g[None, :], beta[None, :], w1, b1[None, :], w2, b2[None, :])


def attention(q, k, v, bias, n_heads, *, tq_max=256):
    # q: [B, T, D]   k, v: [B, S, D]   bias: [B, 1, S]  ->  [B, T, D]
    B, T, D = q.shape
    S = k.shape[1]
    dh = D // n_heads
    tq = _pick_tile(T, tq_max)
    kernel = functools.partial(_attn_kernel, n_heads=n_heads, dh=dh,
                               scale=1.0 / math.sqrt(dh))
    return pl.pallas_call(
        kernel,
        out_shape=jax.ShapeDtypeStruct((B, T, D), jnp.float32),
        grid=(B, T // tq),
        in_specs=[
            pl.BlockSpec((1, tq, D), lambda b, t: (b, t, 0)),
            pl.BlockSpec((1, S, D), lambda b, t: (b, 0, 0)),
            pl.BlockSpec((1, S, D), lambda b, t: (b, 0, 0)),
            pl.BlockSpec((1, 1, S), lambda b, t: (b, 0, 0)),
        ],
        out_specs=pl.BlockSpec((1, tq, D), lambda b, t: (b, t, 0)),
        compiler_params=_cparams(("parallel", "parallel")),
    )(q, k, v, bias)


# ------------------------------------------------------------------ JAX glue

def rope_tables(length, dh, base=10000.0):
    pos = jnp.arange(length, dtype=jnp.float32)[:, None]                    # [L,1]
    inv = 1.0 / (base ** (jnp.arange(0, dh, 2, dtype=jnp.float32) / dh))    # [dh/2]
    freqs = pos * inv[None, :]                                              # [L,dh/2]
    return jnp.cos(freqs), jnp.sin(freqs)


def apply_rope(x, cos, sin, n_heads):
    # torchtune-style interleaved RoPE on channel-last x: [B, L, D] -> [B, L, D]
    # TODO(synk): fold into the attention kernel (pltpu.roll pair-swap) to
    # remove this HBM round trip.
    B, L, D = x.shape
    dh = D // n_heads
    xr = x.reshape(B, L, n_heads, dh // 2, 2)
    x0, x1 = xr[..., 0], xr[..., 1]
    c = cos[None, :, None, :]
    s = sin[None, :, None, :]
    o0 = x0 * c - x1 * s
    o1 = x1 * c + x0 * s
    return jnp.stack([o0, o1], axis=-1).reshape(B, L, D)


def self_attention_block(x, mask_bias, p, n_heads, ln_g, ln_b, cos_t, sin_t):
    # LN -> fused QKV proj -> RoPE -> SDPA -> out-proj (+ residual)
    B, T, D = x.shape
    x2d = x.reshape(B * T, D)
    qkv = ln_linear(x2d, ln_g, ln_b, p["wqkv"], p["bqkv"]).reshape(B, T, 3 * D)
    q = apply_rope(qkv[..., 0:D], cos_t, sin_t, n_heads)
    k = apply_rope(qkv[..., D:2 * D], cos_t, sin_t, n_heads)
    v = qkv[..., 2 * D:3 * D]
    o = attention(q, k, v, mask_bias, n_heads)                # [B, T, D]
    return linear_residual(o.reshape(B * T, D), p["wo"], p["bo"],
                           x2d).reshape(B, T, D)


def cross_attention_block(x, ctx, mask_bias, p, n_heads, ln_g, ln_b,
                          cos_t, sin_t, cos_s, sin_s):
    # LN -> Q proj ; fused KV proj on context ; RoPE ; SDPA ; out-proj(+res)
    B, T, D = x.shape
    S = ctx.shape[1]
    x2d = x.reshape(B * T, D)
    c2d = ctx.reshape(B * S, D)
    q = ln_linear(x2d, ln_g, ln_b, p["wq"], p["bq"]).reshape(B, T, D)
    kv = linear(c2d, p["wkv"], p["bkv"]).reshape(B, S, 2 * D)
    q = apply_rope(q, cos_t, sin_t, n_heads)
    k = apply_rope(kv[..., 0:D], cos_s, sin_s, n_heads)
    v = kv[..., D:2 * D]
    o = attention(q, k, v, mask_bias, n_heads)
    return linear_residual(o.reshape(B * T, D), p["wo"], p["bo"],
                           x2d).reshape(B, T, D)


def decoder_layer(x, ctx, dec_bias, enc_bias, p, n_heads,
                  cos_t, sin_t, cos_s, sin_s):
    x = self_attention_block(x, dec_bias, p["self_attn"], n_heads,
                             p["ln1_g"], p["ln1_b"], cos_t, sin_t)
    x = cross_attention_block(x, ctx, enc_bias, p["cross_attn"], n_heads,
                              p["ln2_g"], p["ln2_b"],
                              cos_t, sin_t, cos_s, sin_s)
    B, T, D = x.shape
    x = ln_ffn_residual(x.reshape(B * T, D), p["ln3_g"], p["ln3_b"],
                        p["w1"], p["b1"], p["w2"], p["b2"]).reshape(B, T, D)
    return x


def decoder_forward(x, ctx, dec_mask, enc_mask, params, n_heads):
    B, T, D = x.shape
    S = ctx.shape[1]
    dh = D // n_heads
    # additive key-padding bias (0 keep / -1e30 drop); no per-head duplication,
    # no NaN for fully-masked rows (uniform instead of torch's -inf NaN).
    dec_bias = jnp.where(dec_mask, 0.0, -1e30).astype(jnp.float32)[:, None, :]
    enc_bias = jnp.where(enc_mask, 0.0, -1e30).astype(jnp.float32)[:, None, :]
    # RoPE tables: built once, reused across layers and across q/k.
    cos_t, sin_t = rope_tables(T, dh)
    cos_s, sin_s = rope_tables(S, dh)
    for p in params:
        x = decoder_layer(x, ctx, dec_bias, enc_bias, p, n_heads,
                          cos_t, sin_t, cos_s, sin_s)
    return x


# --------------------------------------------------------- parameter init

def _init_linear(key, din, dout):
    kw, kb = jax.random.split(key)
    bound = 1.0 / math.sqrt(din)
    w = jax.random.uniform(kw, (din, dout), jnp.float32, -bound, bound)
    b = jax.random.uniform(kb, (dout,), jnp.float32, -bound, bound)
    return w, b


def _init_self_mha(key, d_model):
    ks = jax.random.split(key, 4)
    wq, bq = _init_linear(ks[0], d_model, d_model)
    wk, bk = _init_linear(ks[1], d_model, d_model)
    wv, bv = _init_linear(ks[2], d_model, d_model)
    wo, bo = _init_linear(ks[3], d_model, d_model)
    return dict(
        wqkv=jnp.concatenate([wq, wk, wv], axis=1).astype(jnp.bfloat16),
        bqkv=jnp.concatenate([bq, bk, bv], axis=0),
        wo=wo.astype(jnp.bfloat16), bo=bo,
    )


def _init_cross_mha(key, d_model):
    ks = jax.random.split(key, 4)
    wq, bq = _init_linear(ks[0], d_model, d_model)
    wk, bk = _init_linear(ks[1], d_model, d_model)
    wv, bv = _init_linear(ks[2], d_model, d_model)
    wo, bo = _init_linear(ks[3], d_model, d_model)
    return dict(
        wq=wq.astype(jnp.bfloat16), bq=bq,
        wkv=jnp.concatenate([wk, wv], axis=1).astype(jnp.bfloat16),
        bkv=jnp.concatenate([bk, bv], axis=0),
        wo=wo.astype(jnp.bfloat16), bo=bo,
    )


def init_decoder_params(key, n_layers, d_model):
    params = []
    for _ in range(n_layers):
        key, k1, k2, k3, k4 = jax.random.split(key, 5)
        w1, b1 = _init_linear(k3, d_model, 4 * d_model)
        w2, b2 = _init_linear(k4, 4 * d_model, d_model)
        params.append(
            dict(
                self_attn=_init_self_mha(k1, d_model),
                cross_attn=_init_cross_mha(k2, d_model),
                w1=w1.astype(jnp.bfloat16), b1=b1,
                w2=w2.astype(jnp.bfloat16), b2=b2,
                ln1_g=jnp.ones((d_model,), jnp.float32),
                ln1_b=jnp.zeros((d_model,), jnp.float32),
                ln2_g=jnp.ones((d_model,), jnp.float32),
                ln2_b=jnp.zeros((d_model,), jnp.float32),
                ln3_g=jnp.ones((d_model,), jnp.float32),
                ln3_b=jnp.zeros((d_model,), jnp.float32),
            )
        )
    return params


# --------------------------------------------------------------------- main

if __name__ == "__main__":
    n_layers, d_model, n_heads = 2, 32, 4
    B, T, S = 2, 8, 16

    key = jax.random.PRNGKey(0)
    kx, kc, kp = jax.random.split(key, 3)
    x = jax.random.normal(kx, (B, T, d_model), jnp.float32)
    context = jax.random.normal(kc, (B, S, d_model), jnp.float32)

    # masks: True = attend (padding masks with at least one True per row)
    decoder_mask = jnp.ones((B, T), dtype=bool).at[1, T - 2:].set(False)
    encoder_mask = jnp.ones((B, S), dtype=bool).at[0, S - 4:].set(False)

    params = init_decoder_params(kp, n_layers, d_model)

    fwd = jax.jit(functools.partial(decoder_forward, n_heads=n_heads))
    out = fwd(x, context, decoder_mask, encoder_mask, params)
    out = jax.block_until_ready(out)

    assert out.shape == (B, T, d_model)
    assert bool(jnp.all(jnp.isfinite(out)))
    print("KERNEL_OK")
</pallas_src>

<mosaic_0001>
module attributes {stable_mosaic.version = 11 : i64} {
  func.func @_ln_matmul_kernel(%arg0: i32, %arg1: i32, %arg2: memref<16x32xf32, #tpu.memory_space<vmem>>, %arg3: memref<1x32xf32, #tpu.memory_space<vmem>>, %arg4: memref<1x32xf32, #tpu.memory_space<vmem>>, %arg5: memref<32x96xbf16, #tpu.memory_space<vmem>>, %arg6: memref<1x96xf32, #tpu.memory_space<vmem>>, %arg7: memref<16x96xf32, #tpu.memory_space<vmem>>, %arg8: memref<16x32xbf16, #tpu.memory_space<vmem>>) attributes {dimension_semantics = [#tpu.dimension_semantics<parallel>, #tpu.dimension_semantics<arbitrary>], iteration_bounds = array<i64: 1, 1>, scalar_prefetch = 0 : i64, scratch_operands = 1 : i64, tpu.core_type = #tpu.core_type<tc>, window_params = [{transform_indices = @transform_0, window_bounds = array<i64: 16, 32>}, {pipeline_mode = #tpu.pipeline_mode<synchronous>, transform_indices = @transform_1, window_bounds = array<i64: 1, 32>}, {pipeline_mode = #tpu.pipeline_mode<synchronous>, transform_indices = @transform_2, window_bounds = array<i64: 1, 32>}, {transform_indices = @transform_3, window_bounds = array<i64: 32, 96>}, {transform_indices = @transform_4, window_bounds = array<i64: 1, 96>}, {transform_indices = @transform_5, window_bounds = array<i64: 16, 96>}]} {
    %c0_i32 = arith.constant 0 : i32
    %0 = arith.cmpi eq, %arg1, %c0_i32 : i32
    %1 = arith.extui %0 : i1 to i32
    %c0_i32_0 = arith.constant 0 : i32
    %2 = arith.cmpi ne, %1, %c0_i32_0 : i32
    scf.if %2 {
      %c0_8 = arith.constant 0 : index
      %c0_9 = arith.constant 0 : index
      %10 = vector.load %arg2[%c0_8, %c0_9] : memref<16x32xf32, #tpu.memory_space<vmem>>, vector<16x32xf32>
      %cst_10 = arith.constant dense<0.000000e+00> : vector<16xf32>
      %11 = vector.multi_reduction <add>, %10, %cst_10 [1] : vector<16x32xf32> to vector<16xf32>
      %12 = vector.shape_cast %11 : vector<16xf32> to vector<16x1xf32>
      %cst_11 = arith.constant 3.200000e+01 : f32
      %13 = vector.broadcast %cst_11 : f32 to vector<16x1xf32>
      %14 = arith.divf %12, %13 : vector<16x1xf32>
      %15 = vector.broadcast %14 : vector<16x1xf32> to vector<16x32xf32>
      %16 = arith.subf %10, %15 : vector<16x32xf32>
      %17 = arith.mulf %16, %16 : vector<16x32xf32>
      %cst_12 = arith.constant dense<0.000000e+00> : vector<16xf32>
      %18 = vector.multi_reduction <add>, %17, %cst_12 [1] : vector<16x32xf32> to vector<16xf32>
      %19 = vector.shape_cast %18 : vector<16xf32> to vector<16x1xf32>
      %cst_13 = arith.constant 3.200000e+01 : f32
      %20 = vector.broadcast %cst_13 : f32 to vector<16x1xf32>
      %21 = arith.divf %19, %20 : vector<16x1xf32>
      %22 = vector.broadcast %14 : vector<16x1xf32> to vector<16x32xf32>
      %23 = arith.subf %10, %22 : vector<16x32xf32>
      %cst_14 = arith.constant 9.99999974E-6 : f32
      %24 = vector.broadcast %cst_14 : f32 to vector<16x1xf32>
      %25 = arith.addf %21, %24 : vector<16x1xf32>
      %26 = math.rsqrt %25 : vector<16x1xf32>
      %27 = vector.broadcast %26 : vector<16x1xf32> to vector<16x32xf32>
      %28 = arith.mulf %23, %27 : vector<16x32xf32>
      %c0_15 = arith.constant 0 : index
      %c0_16 = arith.constant 0 : index
      %29 = vector.load %arg3[%c0_15, %c0_16] : memref<1x32xf32, #tpu.memory_space<vmem>>, vector<1x32xf32>
      %30 = vector.broadcast %29 : vector<1x32xf32> to vector<16x32xf32>
      %31 = arith.mulf %28, %30 : vector<16x32xf32>
      %c0_17 = arith.constant 0 : index
      %c0_18 = arith.constant 0 : index
      %32 = vector.load %arg4[%c0_17, %c0_18] : memref<1x32xf32, #tpu.memory_space<vmem>>, vector<1x32xf32>
      %33 = vector.broadcast %32 : vector<1x32xf32> to vector<16x32xf32>
      %34 = arith.addf %31, %33 : vector<16x32xf32>
      %35 = arith.truncf %34 : vector<16x32xf32> to vector<16x32xbf16>
      %c0_19 = arith.constant 0 : index
      %c0_20 = arith.constant 0 : index
      %36 = vector.load %arg8[%c0_19, %c0_20] : memref<16x32xbf16, #tpu.memory_space<vmem>>, vector<16x32xbf16>
      tpu.vector_store %arg8[%c0_19, %c0_20], %35 {strides = array<i32>} : memref<16x32xbf16, #tpu.memory_space<vmem>>, vector<16x32xbf16>,
    } else {
    }
    %c0 = arith.constant 0 : index
    %c0_1 = arith.constant 0 : index
    %3 = vector.load %arg8[%c0, %c0_1] : memref<16x32xbf16, #tpu.memory_space<vmem>>, vector<16x32xbf16>
    %c0_2 = arith.constant 0 : index
    %c0_3 = arith.constant 0 : index
    %4 = vector.load %arg5[%c0_2, %c0_3] : memref<32x96xbf16, #tpu.memory_space<vmem>>, vector<32x96xbf16>
    %cst = arith.constant dense<0.000000e+00> : vector<16x96xf32>
    %5 = tpu.matmul %3, %4, %cst {dimension_numbers = #tpu.dot_dimension_numbers<[1], [0], [0], [1], [0, 0, 1, 1], [], []>} : vector<16x32xbf16>, vector<32x96xbf16>, vector<16x96xf32> -> vector<16x96xf32>
    %c0_4 = arith.constant 0 : index
    %c0_5 = arith.constant 0 : index
    %6 = vector.load %arg6[%c0_4, %c0_5] : memref<1x96xf32, #tpu.memory_space<vmem>>, vector<1x96xf32>
    %7 = vector.broadcast %6 : vector<1x96xf32> to vector<16x96xf32>
    %8 = arith.addf %5, %7 : vector<16x96xf32>
    %c0_6 = arith.constant 0 : index
    %c0_7 = arith.constant 0 : index
    %9 = vector.load %arg7[%c0_6, %c0_7] : memref<16x96xf32, #tpu.memory_space<vmem>>, vector<16x96xf32>
    tpu.vector_store %arg7[%c0_6, %c0_7], %8 {strides = array<i32>} : memref<16x96xf32, #tpu.memory_space<vmem>>, vector<16x96xf32>,
    return
  }
  func.func @transform_0(%arg0: i32, %arg1: i32) -> (i32, i32) {
    %c0_i32 = arith.constant 0 : i32
    %c0_i32_0 = arith.constant 0 : i32
    return %arg0, %c0_i32 : i32, i32
  }
  func.func @transform_1(%arg0: i32, %arg1: i32) -> (i32, i32) {
    %c0_i32 = arith.constant 0 : i32
    %c0_i32_0 = arith.constant 0 : i32
    %c0_i32_1 = arith.constant 0 : i32
    return %c0_i32, %c0_i32_0 : i32, i32
  }
  func.func @transform_2(%arg0: i32, %arg1: i32) -> (i32, i32) {
    %c0_i32 = arith.constant 0 : i32
    %c0_i32_0 = arith.constant 0 : i32
    %c0_i32_1 = arith.constant 0 : i32
    return %c0_i32, %c0_i32_0 : i32, i32
  }
  func.func @transform_3(%arg0: i32, %arg1: i32) -> (i32, i32) {
    %c0_i32 = arith.constant 0 : i32
    %c0_i32_0 = arith.constant 0 : i32
    return %c0_i32, %arg1 : i32, i32
  }
  func.func @transform_4(%arg0: i32, %arg1: i32) -> (i32, i32) {
    %c0_i32 = arith.constant 0 : i32
    %c0_i32_0 = arith.constant 0 : i32
    return %c0_i32, %arg1 : i32, i32
  }
  func.func @transform_5(%arg0: i32, %arg1: i32) -> (i32, i32) {
    %c0_i32 = arith.constant 0 : i32
    return %arg0, %arg1 : i32, i32
  }
}

module attributes {stable_mosaic.version = 11 : i64} {
  func.func @_attn_kernel(%arg0: i32, %arg1: i32, %arg2: memref<1x8x32xf32, #tpu.memory_space<vmem>>, %arg3: memref<1x8x32xf32, #tpu.memory_space<vmem>>, %arg4: memref<1x8x32xf32, #tpu.memory_space<vmem>>, %arg5: memref<1x1x8xf32, #tpu.memory_space<vmem>>, %arg6: memref<1x8x32xf32, #tpu.memory_space<vmem>>) attributes {dimension_semantics = [#tpu.dimension_semantics<parallel>, #tpu.dimension_semantics<parallel>], iteration_bounds = array<i64: 2, 1>, scalar_prefetch = 0 : i64, scratch_operands = 0 : i64, tpu.core_type = #tpu.core_type<tc>, window_params = [{transform_indices = @transform_0, window_bounds = array<i64: 1, 8, 32>}, {transform_indices = @transform_1, window_bounds = array<i64: 1, 8, 32>}, {transform_indices = @transform_2, window_bounds = array<i64: 1, 8, 32>}, {transform_indices = @transform_3, window_bounds = array<i64: 1, 1, 8>}, {transform_indices = @transform_4, window_bounds = array<i64: 1, 8, 32>}]} {
    %c0 = arith.constant 0 : index
    %c0_0 = arith.constant 0 : index
    %c0_1 = arith.constant 0 : index
    %0 = vector.load %arg5[%c0, %c0_0, %c0_1] : memref<1x1x8xf32, #tpu.memory_space<vmem>>, vector<1x1x8xf32>
    %1 = vector.shape_cast %0 : vector<1x1x8xf32> to vector<1x8xf32>
    %c0_2 = arith.constant 0 : index
    %c0_3 = arith.constant 0 : index
    %c0_4 = arith.constant 0 : index
    %2 = vector.load %arg2[%c0_2, %c0_3, %c0_4] : memref<1x8x32xf32, #tpu.memory_space<vmem>>, vector<1x8x8xf32>
    %3 = vector.shape_cast %2 : vector<1x8x8xf32> to vector<8x8xf32>
    %cst = arith.constant 0.353553385 : f32
    %4 = vector.broadcast %cst : f32 to vector<8x8xf32>
    %5 = arith.mulf %3, %4 : vector<8x8xf32>
    %6 = arith.truncf %5 : vector<8x8xf32> to vector<8x8xbf16>
    %c0_5 = arith.constant 0 : index
    %c0_6 = arith.constant 0 : index
    %c0_7 = arith.constant 0 : index
    %7 = vector.load %arg3[%c0_5, %c0_6, %c0_7] : memref<1x8x32xf32, #tpu.memory_space<vmem>>, vector<1x8x8xf32>
    %8 = vector.shape_cast %7 : vector<1x8x8xf32> to vector<8x8xf32>
    %9 = arith.truncf %8 : vector<8x8xf32> to vector<8x8xbf16>
    %c0_8 = arith.constant 0 : index
    %c0_9 = arith.constant 0 : index
    %c0_10 = arith.constant 0 : index
    %10 = vector.load %arg4[%c0_8, %c0_9, %c0_10] : memref<1x8x32xf32, #tpu.memory_space<vmem>>, vector<1x8x8xf32>
    %11 = vector.shape_cast %10 : vector<1x8x8xf32> to vector<8x8xf32>
    %12 = arith.truncf %11 : vector<8x8xf32> to vector<8x8xbf16>
    %cst_11 = arith.constant dense<0.000000e+00> : vector<8x8xf32>
    %13 = tpu.matmul %6, %9, %cst_11 {dimension_numbers = #tpu.dot_dimension_numbers<[1], [1], [0], [0], [0, 0, 1, 0], [], []>} : vector<8x8xbf16>, vector<8x8xbf16>, vector<8x8xf32> -> vector<8x8xf32>
    %14 = vector.broadcast %1 : vector<1x8xf32> to vector<8x8xf32>
    %15 = arith.addf %13, %14 : vector<8x8xf32>
    %cst_12 = arith.constant dense<0xFF800000> : vector<8xf32>
    %16 = vector.multi_reduction <maximumf>, %15, %cst_12 [1] : vector<8x8xf32> to vector<8xf32>
    %17 = vector.shape_cast %16 : vector<8xf32> to vector<8x1xf32>
    %18 = vector.broadcast %17 : vector<8x1xf32> to vector<8x8xf32>
    %19 = arith.subf %15, %18 : vector<8x8xf32>
    %20 = math.exp %19 : vector<8x8xf32>
    %cst_13 = arith.constant dense<0.000000e+00> : vector<8xf32>
    %21 = vector.multi_reduction <add>, %20, %cst_13 [1] : vector<8x8xf32> to vector<8xf32>
    %22 = vector.shape_cast %21 : vector<8xf32> to vector<8x1xf32>
    %23 = tpu.reciprocal %22 {approx = true} : vector<8x1xf32> -> vector<8x1xf32>
    %24 = vector.broadcast %23 : vector<8x1xf32> to vector<8x8xf32>
    %25 = arith.mulf %20, %24 : vector<8x8xf32>
    %26 = arith.truncf %25 : vector<8x8xf32> to vector<8x8xbf16>
    %cst_14 = arith.constant dense<0.000000e+00> : vector<8x8xf32>
    %27 = tpu.matmul %26, %12, %cst_14 {dimension_numbers = #tpu.dot_dimension_numbers<[1], [0], [0], [1], [0, 0, 1, 1], [], []>} : vector<8x8xbf16>, vector<8x8xbf16>, vector<8x8xf32> -> vector<8x8xf32>
    %c0_15 = arith.constant 0 : index
    %c0_16 = arith.constant 0 : index
    %c8 = arith.constant 8 : index
    %28 = vector.load %arg2[%c0_15, %c0_16, %c8] : memref<1x8x32xf32, #tpu.memory_space<vmem>>, vector<1x8x8xf32>
    %29 = vector.shape_cast %28 : vector<1x8x8xf32> to vector<8x8xf32>
    %cst_17 = arith.constant 0.353553385 : f32
    %30 = vector.broadcast %cst_17 : f32 to vector<8x8xf32>
    %31 = arith.mulf %29, %30 : vector<8x8xf32>
    %32 = arith.truncf %31 : vector<8x8xf32> to vector<8x8xbf16>
    %c0_18 = arith.constant 0 : index
    %c0_19 = arith.constant 0 : index
    %c8_20 = arith.constant 8 : index
    %33 = vector.load %arg3[%c0_18, %c0_19, %c8_20] : memref<1x8x32xf32, #tpu.memory_space<vmem>>, vector<1x8x8xf32>
    %34 = vector.shape_cast %33 : vector<1x8x8xf32> to vector<8x8xf32>
    %35 = arith.truncf %34 : vector<8x8xf32> to vector<8x8xbf16>
    %c0_21 = arith.constant 0 : index
    %c0_22 = arith.constant 0 : index
    %c8_23 = arith.constant 8 : index
    %36 = vector.load %arg4[%c0_21, %c0_22, %c8_23] : memref<1x8x32xf32, #tpu.memory_space<vmem>>, vector<1x8x8xf32>
    %37 = vector.shape_cast %36 : vector<1x8x8xf32> to vector<8x8xf32>
    %38 = arith.truncf %37 : vector<8x8xf32> to vector<8x8xbf16>
    %cst_24 = arith.constant dense<0.000000e+00> : vector<8x8xf32>
    %39 = tpu.matmul %32, %35, %cst_24 {dimension_numbers = #tpu.dot_dimension_numbers<[1], [1], [0], [0], [0, 0, 1, 0], [], []>} : vector<8x8xbf16>, vector<8x8xbf16>, vector<8x8xf32> -> vector<8x8xf32>
    %40 = vector.broadcast %1 : vector<1x8xf32> to vector<8x8xf32>
    %41 = arith.addf %39, %40 : vector<8x8xf32>
    %cst_25 = arith.constant dense<0xFF800000> : vector<8xf32>
    %42 = vector.multi_reduction <maximumf>, %41, %cst_25 [1] : vector<8x8xf32> to vector<8xf32>
    %43 = vector.shape_cast %42 : vector<8xf32> to vector<8x1xf32>
    %44 = vector.broadcast %43 : vector<8x1xf32> to vector<8x8xf32>
    %45 = arith.subf %41, %44 : vector<8x8xf32>
    %46 = math.exp %45 : vector<8x8xf32>
    %cst_26 = arith.constant dense<0.000000e+00> : vector<8xf32>
    %47 = vector.multi_reduction <add>, %46, %cst_26 [1] : vector<8x8xf32> to vector<8xf32>
    %48 = vector.shape_cast %47 : vector<8xf32> to vector<8x1xf32>
    %49 = tpu.reciprocal %48 {approx = true} : vector<8x1xf32> -> vector<8x1xf32>
    %50 = vector.broadcast %49 : vector<8x1xf32> to vector<8x8xf32>
    %51 = arith.mulf %46, %50 : vector<8x8xf32>
    %52 = arith.truncf %51 : vector<8x8xf32> to vector<8x8xbf16>
    %cst_27 = arith.constant dense<0.000000e+00> : vector<8x8xf32>
    %53 = tpu.matmul %52, %38, %cst_27 {dimension_numbers = #tpu.dot_dimension_numbers<[1], [0], [0], [1], [0, 0, 1, 1], [], []>} : vector<8x8xbf16>, vector<8x8xbf16>, vector<8x8xf32> -> vector<8x8xf32>
    %c0_28 = arith.constant 0 : index
    %c0_29 = arith.constant 0 : index
    %c16 = arith.constant 16 : index
    %54 = vector.load %arg2[%c0_28, %c0_29, %c16] : memref<1x8x32xf32, #tpu.memory_space<vmem>>, vector<1x8x8xf32>
    %55 = vector.shape_cast %54 : vector<1x8x8xf32> to vector<8x8xf32>
    %cst_30 = arith.constant 0.353553385 : f32
    %56 = vector.broadcast %cst_30 : f32 to vector<8x8xf32>
    %57 = arith.mulf %55, %56 : vector<8x8xf32>
    %58 = arith.truncf %57 : vector<8x8xf32> to vector<8x8xbf16>
    %c0_31 = arith.constant 0 : index
    %c0_32 = arith.constant 0 : index
    %c16_33 = arith.constant 16 : index
    %59 = vector.load %arg3[%c0_31, %c0_32, %c16_33] : memref<1x8x32xf32, #tpu.memory_space<vmem>>, vector<1x8x8xf32>
    %60 = vector.shape_cast %59 : vector<1x8x8xf32> to vector<8x8xf32>
    %61 = arith.truncf %60 : vector<8x8xf32> to vector<8x8xbf16>
    %c0_34 = arith.constant 0 : index
    %c0_35 = arith.constant 0 : index
    %c16_36 = arith.constant 16 : index
    %62 = vector.load %arg4[%c0_34, %c0_35, %c16_36] : memref<1x8x32xf32, #tpu.memory_space<vmem>>, vector<1x8x8xf32>
    %63 = vector.shape_cast %62 : vector<1x8x8xf32> to vector<8x8xf32>
    %64 = arith.truncf %63 : vector<8x8xf32> to vector<8x8xbf16>
    %cst_37 = arith.constant dense<0.000000e+00> : vector<8x8xf32>
    %65 = tpu.matmul %58, %61, %cst_37 {dimension_numbers = #tpu.dot_dimension_numbers<[1], [1], [0], [0], [0, 0, 1, 0], [], []>} : vector<8x8xbf16>, vector<8x8xbf16>, vector<8x8xf32> -> vector<8x8xf32>
    %66 = vector.broadcast %1 : vector<1x8xf32> to vector<8x8xf32>
    %67 = arith.addf %65, %66 : vector<8x8xf32>
    %cst_38 = arith.constant dense<0xFF800000> : vector<8xf32>
    %68 = vector.multi_reduction <maximumf>, %67, %cst_38 [1] : vector<8x8xf32> to vector<8xf32>
    %69 = vector.shape_cast %68 : vector<8xf32> to vector<8x1xf32>
    %70 = vector.broadcast %69 : vector<8x1xf32> to vector<8x8xf32>
    %71 = arith.subf %67, %70 : vector<8x8xf32>
    %72 = math.exp %71 : vector<8x8xf32>
    %cst_39 = arith.constant dense<0.000000e+00> : vector<8xf32>
    %73 = vector.multi_reduction <add>, %72, %cst_39 [1] : vector<8x8xf32> to vector<8xf32>
    %74 = vector.shape_cast %73 : vector<8xf32> to vector<8x1xf32>
    %75 = tpu.reciprocal %74 {approx = true} : vector<8x1xf32> -> vector<8x1xf32>
    %76 = vector.broadcast %75 : vector<8x1xf32> to vector<8x8xf32>
    %77 = arith.mulf %72, %76 : vector<8x8xf32>
    %78 = arith.truncf %77 : vector<8x8xf32> to vector<8x8xbf16>
    %cst_40 = arith.constant dense<0.000000e+00> : vector<8x8xf32>
    %79 = tpu.matmul %78, %64, %cst_40 {dimension_numbers = #tpu.dot_dimension_numbers<[1], [0], [0], [1], [0, 0, 1, 1], [], []>} : vector<8x8xbf16>, vector<8x8xbf16>, vector<8x8xf32> -> vector<8x8xf32>
    %c0_41 = arith.constant 0 : index
    %c0_42 = arith.constant 0 : index
    %c24 = arith.constant 24 : index
    %80 = vector.load %arg2[%c0_41, %c0_42, %c24] : memref<1x8x32xf32, #tpu.memory_space<vmem>>, vector<1x8x8xf32>
    %81 = vector.shape_cast %80 : vector<1x8x8xf32> to vector<8x8xf32>
    %cst_43 = arith.constant 0.353553385 : f32
    %82 = vector.broadcast %cst_43 : f32 to vector<8x8xf32>
    %83 = arith.mulf %81, %82 : vector<8x8xf32>
    %84 = arith.truncf %83 : vector<8x8xf32> to vector<8x8xbf16>
    %c0_44 = arith.constant 0 : index
    %c0_45 = arith.constant 0 : index
    %c24_46 = arith.constant 24 : index
    %85 = vector.load %arg3[%c0_44, %c0_45, %c24_46] : memref<1x8x32xf32, #tpu.memory_space<vmem>>, vector<1x8x8xf32>
    %86 = vector.shape_cast %85 : vector<1x8x8xf32> to vector<8x8xf32>
    %87 = arith.truncf %86 : vector<8x8xf32> to vector<8x8xbf16>
    %c0_47 = arith.constant 0 : index
    %c0_48 = arith.constant 0 : index
    %c24_49 = arith.constant 24 : index
    %88 = vector.load %arg4[%c0_47, %c0_48, %c24_49] : memref<1x8x32xf32, #tpu.memory_space<vmem>>, vector<1x8x8xf32>
    %89 = vector.shape_cast %88 : vector<1x8x8xf32> to vector<8x8xf32>
    %90 = arith.truncf %89 : vector<8x8xf32> to vector<8x8xbf16>
    %cst_50 = arith.constant dense<0.000000e+00> : vector<8x8xf32>
    %91 = tpu.matmul %84, %87, %cst_50 {dimension_numbers = #tpu.dot_dimension_numbers<[1], [1], [0], [0], [0, 0, 1, 0], [], []>} : vector<8x8xbf16>, vector<8x8xbf16>, vector<8x8xf32> -> vector<8x8xf32>
    %92 = vector.broadcast %1 : vector<1x8xf32> to vector<8x8xf32>
    %93 = arith.addf %91, %92 : vector<8x8xf32>
    %cst_51 = arith.constant dense<0xFF800000> : vector<8xf32>
    %94 = vector.multi_reduction <maximumf>, %93, %cst_51 [1] : vector<8x8xf32> to vector<8xf32>
    %95 = vector.shape_cast %94 : vector<8xf32> to vector<8x1xf32>
    %96 = vector.broadcast %95 : vector<8x1xf32> to vector<8x8xf32>
    %97 = arith.subf %93, %96 : vector<8x8xf32>
    %98 = math.exp %97 : vector<8x8xf32>
    %cst_52 = arith.constant dense<0.000000e+00> : vector<8xf32>
    %99 = vector.multi_reduction <add>, %98, %cst_52 [1] : vector<8x8xf32> to vector<8xf32>
    %100 = vector.shape_cast %99 : vector<8xf32> to vector<8x1xf32>
    %101 = tpu.reciprocal %100 {approx = true} : vector<8x1xf32> -> vector<8x1xf32>
    %102 = vector.broadcast %101 : vector<8x1xf32> to vector<8x8xf32>
    %103 = arith.mulf %98, %102 : vector<8x8xf32>
    %104 = arith.truncf %103 : vector<8x8xf32> to vector<8x8xbf16>
    %cst_53 = arith.constant dense<0.000000e+00> : vector<8x8xf32>
    %105 = tpu.matmul %104, %90, %cst_53 {dimension_numbers = #tpu.dot_dimension_numbers<[1], [0], [0], [1], [0, 0, 1, 1], [], []>} : vector<8x8xbf16>, vector<8x8xbf16>, vector<8x8xf32> -> vector<8x8xf32>
    %106 = tpu.concatenate %27, %53, %79, %105 in 1 : vector<8x8xf32>, vector<8x8xf32>, vector<8x8xf32>, vector<8x8xf32> -> vector<8x32xf32>
    %c0_54 = arith.constant 0 : index
    %c0_55 = arith.constant 0 : index
    %c0_56 = arith.constant 0 : index
    %107 = vector.load %arg6[%c0_54, %c0_55, %c0_56] : memref<1x8x32xf32, #tpu.memory_space<vmem>>, vector<1x8x32xf32>
    %108 = vector.shape_cast %107 : vector<1x8x32xf32> to vector<8x32xf32>
    %109 = vector.shape_cast %106 : vector<8x32xf32> to vector<1x8x32xf32>
    tpu.vector_store %arg6[%c0_54, %c0_55, %c0_56], %109 {strides = array<i32>} : memref<1x8x32xf32, #tpu.memory_space<vmem>>, vector<1x8x32xf32>,
    return
  }
  func.func @transform_0(%arg0: i32, %arg1: i32) -> (i32, i32, i32) {
    %c0_i32 = arith.constant 0 : i32
    %c0_i32_0 = arith.constant 0 : i32
    return %arg0, %arg1, %c0_i32 : i32, i32, i32
  }
  func.func @transform_1(%arg0: i32, %arg1: i32) -> (i32, i32, i32) {
    %c0_i32 = arith.constant 0 : i32
    %c0_i32_0 = arith.constant 0 : i32
    %c0_i32_1 = arith.constant 0 : i32
    return %arg0, %c0_i32, %c0_i32_0 : i32, i32, i32
  }
  func.func @transform_2(%arg0: i32, %arg1: i32) -> (i32, i32, i32) {
    %c0_i32 = arith.constant 0 : i32
    %c0_i32_0 = arith.constant 0 : i32
    %c0_i32_1 = arith.constant 0 : i32
    return %arg0, %c0_i32, %c0_i32_0 : i32, i32, i32
  }
  func.func @transform_3(%arg0: i32, %arg1: i32) -> (i32, i32, i32) {
    %c0_i32 = arith.constant 0 : i32
    %c0_i32_0 = arith.constant 0 : i32
    %c0_i32_1 = arith.constant 0 : i32
    return %arg0, %c0_i32, %c0_i32_0 : i32, i32, i32
  }
  func.func @transform_4(%arg0: i32, %arg1: i32) -> (i32, i32, i32) {
    %c0_i32 = arith.constant 0 : i32
    %c0_i32_0 = arith.constant 0 : i32
    return %arg0, %arg1, %c0_i32 : i32, i32, i32
  }
}

module attributes {stable_mosaic.version = 11 : i64} {
  func.func @_ln_matmul_kernel(%arg0: i32, %arg1: i32, %arg2: memref<16x32xf32, #tpu.memory_space<vmem>>, %arg3: memref<1x32xf32, #tpu.memory_space<vmem>>, %arg4: memref<1x32xf32, #tpu.memory_space<vmem>>, %arg5: memref<32x32xbf16, #tpu.memory_space<vmem>>, %arg6: memref<1x32xf32, #tpu.memory_space<vmem>>, %arg7: memref<16x32xf32, #tpu.memory_space<vmem>>, %arg8: memref<16x32xbf16, #tpu.memory_space<vmem>>) attributes {dimension_semantics = [#tpu.dimension_semantics<parallel>, #tpu.dimension_semantics<arbitrary>], iteration_bounds = array<i64: 1, 1>, scalar_prefetch = 0 : i64, scratch_operands = 1 : i64, tpu.core_type = #tpu.core_type<tc>, window_params = [{transform_indices = @transform_0, window_bounds = array<i64: 16, 32>}, {pipeline_mode = #tpu.pipeline_mode<synchronous>, transform_indices = @transform_1, window_bounds = array<i64: 1, 32>}, {pipeline_mode = #tpu.pipeline_mode<synchronous>, transform_indices = @transform_2, window_bounds = array<i64: 1, 32>}, {transform_indices = @transform_3, window_bounds = array<i64: 32, 32>}, {transform_indices = @transform_4, window_bounds = array<i64: 1, 32>}, {transform_indices = @transform_5, window_bounds = array<i64: 16, 32>}]} {
    %c0_i32 = arith.constant 0 : i32
    %0 = arith.cmpi eq, %arg1, %c0_i32 : i32
    %1 = arith.extui %0 : i1 to i32
    %c0_i32_0 = arith.constant 0 : i32
    %2 = arith.cmpi ne, %1, %c0_i32_0 : i32
    scf.if %2 {
      %c0_8 = arith.constant 0 : index
      %c0_9 = arith.constant 0 : index
      %10 = vector.load %arg2[%c0_8, %c0_9] : memref<16x32xf32, #tpu.memory_space<vmem>>, vector<16x32xf32>
      %cst_10 = arith.constant dense<0.000000e+00> : vector<16xf32>
      %11 = vector.multi_reduction <add>, %10, %cst_10 [1] : vector<16x32xf32> to vector<16xf32>
      %12 = vector.shape_cast %11 : vector<16xf32> to vector<16x1xf32>
      %cst_11 = arith.constant 3.200000e+01 : f32
      %13 = vector.broadcast %cst_11 : f32 to vector<16x1xf32>
      %14 = arith.divf %12, %13 : vector<16x1xf32>
      %15 = vector.broadcast %14 : vector<16x1xf32> to vector<16x32xf32>
      %16 = arith.subf %10, %15 : vector<16x32xf32>
      %17 = arith.mulf %16, %16 : vector<16x32xf32>
      %cst_12 = arith.constant dense<0.000000e+00> : vector<16xf32>
      %18 = vector.multi_reduction <add>, %17, %cst_12 [1] : vector<16x32xf32> to vector<16xf32>
      %19 = vector.shape_cast %18 : vector<16xf32> to vector<16x1xf32>
      %cst_13 = arith.constant 3.200000e+01 : f32
      %20 = vector.broadcast %cst_13 : f32 to vector<16x1xf32>
      %21 = arith.divf %19, %20 : vector<16x1xf32>
      %22 = vector.broadcast %14 : vector<16x1xf32> to vector<16x32xf32>
      %23 = arith.subf %10, %22 : vector<16x32xf32>
      %cst_14 = arith.constant 9.99999974E-6 : f32
      %24 = vector.broadcast %cst_14 : f32 to vector<16x1xf32>
      %25 = arith.addf %21, %24 : vector<16x1xf32>
      %26 = math.rsqrt %25 : vector<16x1xf32>
      %27 = vector.broadcast %26 : vector<16x1xf32> to vector<16x32xf32>
      %28 = arith.mulf %23, %27 : vector<16x32xf32>
      %c0_15 = arith.constant 0 : index
      %c0_16 = arith.constant 0 : index
      %29 = vector.load %arg3[%c0_15, %c0_16] : memref<1x32xf32, #tpu.memory_space<vmem>>, vector<1x32xf32>
      %30 = vector.broadcast %29 : vector<1x32xf32> to vector<16x32xf32>
      %31 = arith.mulf %28, %30 : vector<16x32xf32>
      %c0_17 = arith.constant 0 : index
      %c0_18 = arith.constant 0 : index
      %32 = vector.load %arg4[%c0_17, %c0_18] : memref<1x32xf32, #tpu.memory_space<vmem>>, vector<1x32xf32>
      %33 = vector.broadcast %32 : vector<1x32xf32> to vector<16x32xf32>
      %34 = arith.addf %31, %33 : vector<16x32xf32>
      %35 = arith.truncf %34 : vector<16x32xf32> to vector<16x32xbf16>
      %c0_19 = arith.constant 0 : index
      %c0_20 = arith.constant 0 : index
      %36 = vector.load %arg8[%c0_19, %c0_20] : memref<16x32xbf16, #tpu.memory_space<vmem>>, vector<16x32xbf16>
      tpu.vector_store %arg8[%c0_19, %c0_20], %35 {strides = array<i32>} : memref<16x32xbf16, #tpu.memory_space<vmem>>, vector<16x32xbf16>,
    } else {
    }
    %c0 = arith.constant 0 : index
    %c0_1 = arith.constant 0 : index
    %3 = vector.load %arg8[%c0, %c0_1] : memref<16x32xbf16, #tpu.memory_space<vmem>>, vector<16x32xbf16>
    %c0_2 = arith.constant 0 : index
    %c0_3 = arith.constant 0 : index
    %4 = vector.load %arg5[%c0_2, %c0_3] : memref<32x32xbf16, #tpu.memory_space<vmem>>, vector<32x32xbf16>
    %cst = arith.constant dense<0.000000e+00> : vector<16x32xf32>
    %5 = tpu.matmul %3, %4, %cst {dimension_numbers = #tpu.dot_dimension_numbers<[1], [0], [0], [1], [0, 0, 1, 1], [], []>} : vector<16x32xbf16>, vector<32x32xbf16>, vector<16x32xf32> -> vector<16x32xf32>
    %c0_4 = arith.constant 0 : index
    %c0_5 = arith.constant 0 : index
    %6 = vector.load %arg6[%c0_4, %c0_5] : memref<1x32xf32, #tpu.memory_space<vmem>>, vector<1x32xf32>
    %7 = vector.broadcast %6 : vector<1x32xf32> to vector<16x32xf32>
    %8 = arith.addf %5, %7 : vector<16x32xf32>
    %c0_6 = arith.constant 0 : index
    %c0_7 = arith.constant 0 : index
    %9 = vector.load %arg7[%c0_6, %c0_7] : memref<16x32xf32, #tpu.memory_space<vmem>>, vector<16x32xf32>
    tpu.vector_store %arg7[%c0_6, %c0_7], %8 {strides = array<i32>} : memref<16x32xf32, #tpu.memory_space<vmem>>, vector<16x32xf32>,
    return
  }
  func.func @transform_0(%arg0: i32, %arg1: i32) -> (i32, i32) {
    %c0_i32 = arith.constant 0 : i32
    %c0_i32_0 = arith.constant 0 : i32
    return %arg0, %c0_i32 : i32, i32
  }
  func.func @transform_1(%arg0: i32, %arg1: i32) -> (i32, i32) {
    %c0_i32 = arith.constant 0 : i32
    %c0_i32_0 = arith.constant 0 : i32
    %c0_i32_1 = arith.constant 0 : i32
    return %c0_i32, %c0_i32_0 : i32, i32
  }
  func.func @transform_2(%arg0: i32, %arg1: i32) -> (i32, i32) {
    %c0_i32 = arith.constant 0 : i32
    %c0_i32_0 = arith.constant 0 : i32
    %c0_i32_1 = arith.constant 0 : i32
    return %c0_i32, %c0_i32_0 : i32, i32
  }
  func.func @transform_3(%arg0: i32, %arg1: i32) -> (i32, i32) {
    %c0_i32 = arith.constant 0 : i32
    %c0_i32_0 = arith.constant 0 : i32
    return %c0_i32, %arg1 : i32, i32
  }
  func.func @transform_4(%arg0: i32, %arg1: i32) -> (i32, i32) {
    %c0_i32 = arith.constant 0 : i32
    %c0_i32_0 = arith.constant 0 : i32
    return %c0_i32, %arg1 : i32, i32
  }
  func.func @transform_5(%arg0: i32, %arg1: i32) -> (i32, i32) {
    %c0_i32 = arith.constant 0 : i32
    return %arg0, %arg1 : i32, i32
  }
}

module attributes {stable_mosaic.version = 11 : i64} {
  func.func @_matmul_bias_residual_kernel(%arg0: i32, %arg1: i32, %arg2: memref<16x32xf32, #tpu.memory_space<vmem>>, %arg3: memref<32x32xbf16, #tpu.memory_space<vmem>>, %arg4: memref<1x32xf32, #tpu.memory_space<vmem>>, %arg5: memref<16x32xf32, #tpu.memory_space<vmem>>, %arg6: memref<16x32xf32, #tpu.memory_space<vmem>>) attributes {dimension_semantics = [#tpu.dimension_semantics<parallel>, #tpu.dimension_semantics<parallel>], iteration_bounds = array<i64: 1, 1>, scalar_prefetch = 0 : i64, scratch_operands = 0 : i64, tpu.core_type = #tpu.core_type<tc>, window_params = [{transform_indices = @transform_0, window_bounds = array<i64: 16, 32>}, {transform_indices = @transform_1, window_bounds = array<i64: 32, 32>}, {transform_indices = @transform_2, window_bounds = array<i64: 1, 32>}, {transform_indices = @transform_3, window_bounds = array<i64: 16, 32>}, {transform_indices = @transform_4, window_bounds = array<i64: 16, 32>}]} {
    %c0 = arith.constant 0 : index
    %c0_0 = arith.constant 0 : index
    %0 = vector.load %arg2[%c0, %c0_0] : memref<16x32xf32, #tpu.memory_space<vmem>>, vector<16x32xf32>
    %1 = arith.truncf %0 : vector<16x32xf32> to vector<16x32xbf16>
    %c0_1 = arith.constant 0 : index
    %c0_2 = arith.constant 0 : index
    %2 = vector.load %arg5[%c0_1, %c0_2] : memref<16x32xf32, #tpu.memory_space<vmem>>, vector<16x32xf32>
    %c0_3 = arith.constant 0 : index
    %c0_4 = arith.constant 0 : index
    %3 = vector.load %arg3[%c0_3, %c0_4] : memref<32x32xbf16, #tpu.memory_space<vmem>>, vector<32x32xbf16>
    %cst = arith.constant dense<0.000000e+00> : vector<16x32xf32>
    %4 = tpu.matmul %1, %3, %cst {dimension_numbers = #tpu.dot_dimension_numbers<[1], [0], [0], [1], [0, 0, 1, 1], [], []>} : vector<16x32xbf16>, vector<32x32xbf16>, vector<16x32xf32> -> vector<16x32xf32>
    %5 = arith.addf %2, %4 : vector<16x32xf32>
    %c0_5 = arith.constant 0 : index
    %c0_6 = arith.constant 0 : index
    %6 = vector.load %arg4[%c0_5, %c0_6] : memref<1x32xf32, #tpu.memory_space<vmem>>, vector<1x32xf32>
    %7 = vector.broadcast %6 : vector<1x32xf32> to vector<16x32xf32>
    %8 = arith.addf %5, %7 : vector<16x32xf32>
    %c0_7 = arith.constant 0 : index
    %c0_8 = arith.constant 0 : index
    %9 = vector.load %arg6[%c0_7, %c0_8] : memref<16x32xf32, #tpu.memory_space<vmem>>, vector<16x32xf32>
    tpu.vector_store %arg6[%c0_7, %c0_8], %8 {strides = array<i32>} : memref<16x32xf32, #tpu.memory_space<vmem>>, vector<16x32xf32>,
    return
  }
  func.func @transform_0(%arg0: i32, %arg1: i32) -> (i32, i32) {
    %c0_i32 = arith.constant 0 : i32
    %c0_i32_0 = arith.constant 0 : i32
    return %arg0, %c0_i32 : i32, i32
  }
  func.func @transform_1(%arg0: i32, %arg1: i32) -> (i32, i32) {
    %c0_i32 = arith.constant 0 : i32
    %c0_i32_0 = arith.constant 0 : i32
    return %c0_i32, %arg1 : i32, i32
  }
  func.func @transform_2(%arg0: i32, %arg1: i32) -> (i32, i32) {
    %c0_i32 = arith.constant 0 : i32
    %c0_i32_0 = arith.constant 0 : i32
    return %c0_i32, %arg1 : i32, i32
  }
  func.func @transform_3(%arg0: i32, %arg1: i32) -> (i32, i32) {
    %c0_i32 = arith.constant 0 : i32
    return %arg0, %arg1 : i32, i32
  }
  func.func @transform_4(%arg0: i32, %arg1: i32) -> (i32, i32) {
    %c0_i32 = arith.constant 0 : i32
    return %arg0, %arg1 : i32, i32
  }
}

module attributes {stable_mosaic.version = 11 : i64} {
  func.func @_matmul_bias_kernel(%arg0: i32, %arg1: i32, %arg2: memref<32x32xf32, #tpu.memory_space<vmem>>, %arg3: memref<32x64xbf16, #tpu.memory_space<vmem>>, %arg4: memref<1x64xf32, #tpu.memory_space<vmem>>, %arg5: memref<32x64xf32, #tpu.memory_space<vmem>>) attributes {dimension_semantics = [#tpu.dimension_semantics<parallel>, #tpu.dimension_semantics<parallel>], iteration_bounds = array<i64: 1, 1>, scalar_prefetch = 0 : i64, scratch_operands = 0 : i64, tpu.core_type = #tpu.core_type<tc>, window_params = [{transform_indices = @transform_0, window_bounds = array<i64: 32, 32>}, {transform_indices = @transform_1, window_bounds = array<i64: 32, 64>}, {transform_indices = @transform_2, window_bounds = array<i64: 1, 64>}, {transform_indices = @transform_3, window_bounds = array<i64: 32, 64>}]} {
    %c0 = arith.constant 0 : index
    %c0_0 = arith.constant 0 : index
    %0 = vector.load %arg2[%c0, %c0_0] : memref<32x32xf32, #tpu.memory_space<vmem>>, vector<32x32xf32>
    %1 = arith.truncf %0 : vector<32x32xf32> to vector<32x32xbf16>
    %c0_1 = arith.constant 0 : index
    %c0_2 = arith.constant 0 : index
    %2 = vector.load %arg3[%c0_1, %c0_2] : memref<32x64xbf16, #tpu.memory_space<vmem>>, vector<32x64xbf16>
    %cst = arith.constant dense<0.000000e+00> : vector<32x64xf32>
    %3 = tpu.matmul %1, %2, %cst {dimension_numbers = #tpu.dot_dimension_numbers<[1], [0], [0], [1], [0, 0, 1, 1], [], []>} : vector<32x32xbf16>, vector<32x64xbf16>, vector<32x64xf32> -> vector<32x64xf32>
    %c0_3 = arith.constant 0 : index
    %c0_4 = arith.constant 0 : index
    %4 = vector.load %arg4[%c0_3, %c0_4] : memref<1x64xf32, #tpu.memory_space<vmem>>, vector<1x64xf32>
    %5 = vector.broadcast %4 : vector<1x64xf32> to vector<32x64xf32>
    %6 = arith.addf %3, %5 : vector<32x64xf32>
    %c0_5 = arith.constant 0 : index
    %c0_6 = arith.constant 0 : index
    %7 = vector.load %arg5[%c0_5, %c0_6] : memref<32x64xf32, #tpu.memory_space<vmem>>, vector<32x64xf32>
    tpu.vector_store %arg5[%c0_5, %c0_6], %6 {strides = array<i32>} : memref<32x64xf32, #tpu.memory_space<vmem>>, vector<32x64xf32>,
    return
  }
  func.func @transform_0(%arg0: i32, %arg1: i32) -> (i32, i32) {
    %c0_i32 = arith.constant 0 : i32
    %c0_i32_0 = arith.constant 0 : i32
    return %arg0, %c0_i32 : i32, i32
  }
  func.func @transform_1(%arg0: i32, %arg1: i32) -> (i32, i32) {
    %c0_i32 = arith.constant 0 : i32
    %c0_i32_0 = arith.constant 0 : i32
    return %c0_i32, %arg1 : i32, i32
  }
  func.func @transform_2(%arg0: i32, %arg1: i32) -> (i32, i32) {
    %c0_i32 = arith.constant 0 : i32
    %c0_i32_0 = arith.constant 0 : i32
    return %c0_i32, %arg1 : i32, i32
  }
  func.func @transform_3(%arg0: i32, %arg1: i32) -> (i32, i32) {
    %c0_i32 = arith.constant 0 : i32
    return %arg0, %arg1 : i32, i32
  }
}

module attributes {stable_mosaic.version = 11 : i64} {
  func.func @_attn_kernel(%arg0: i32, %arg1: i32, %arg2: memref<1x8x32xf32, #tpu.memory_space<vmem>>, %arg3: memref<1x16x32xf32, #tpu.memory_space<vmem>>, %arg4: memref<1x16x32xf32, #tpu.memory_space<vmem>>, %arg5: memref<1x1x16xf32, #tpu.memory_space<vmem>>, %arg6: memref<1x8x32xf32, #tpu.memory_space<vmem>>) attributes {dimension_semantics = [#tpu.dimension_semantics<parallel>, #tpu.dimension_semantics<parallel>], iteration_bounds = array<i64: 2, 1>, scalar_prefetch = 0 : i64, scratch_operands = 0 : i64, tpu.core_type = #tpu.core_type<tc>, window_params = [{transform_indices = @transform_0, window_bounds = array<i64: 1, 8, 32>}, {transform_indices = @transform_1, window_bounds = array<i64: 1, 16, 32>}, {transform_indices = @transform_2, window_bounds = array<i64: 1, 16, 32>}, {transform_indices = @transform_3, window_bounds = array<i64: 1, 1, 16>}, {transform_indices = @transform_4, window_bounds = array<i64: 1, 8, 32>}]} {
    %c0 = arith.constant 0 : index
    %c0_0 = arith.constant 0 : index
    %c0_1 = arith.constant 0 : index
    %0 = vector.load %arg5[%c0, %c0_0, %c0_1] : memref<1x1x16xf32, #tpu.memory_space<vmem>>, vector<1x1x16xf32>
    %1 = vector.shape_cast %0 : vector<1x1x16xf32> to vector<1x16xf32>
    %c0_2 = arith.constant 0 : index
    %c0_3 = arith.constant 0 : index
    %c0_4 = arith.constant 0 : index
    %2 = vector.load %arg2[%c0_2, %c0_3, %c0_4] : memref<1x8x32xf32, #tpu.memory_space<vmem>>, vector<1x8x8xf32>
    %3 = vector.shape_cast %2 : vector<1x8x8xf32> to vector<8x8xf32>
    %cst = arith.constant 0.353553385 : f32
    %4 = vector.broadcast %cst : f32 to vector<8x8xf32>
    %5 = arith.mulf %3, %4 : vector<8x8xf32>
    %6 = arith.truncf %5 : vector<8x8xf32> to vector<8x8xbf16>
    %c0_5 = arith.constant 0 : index
    %c0_6 = arith.constant 0 : index
    %c0_7 = arith.constant 0 : index
    %7 = vector.load %arg3[%c0_5, %c0_6, %c0_7] : memref<1x16x32xf32, #tpu.memory_space<vmem>>, vector<1x16x8xf32>
    %8 = vector.shape_cast %7 : vector<1x16x8xf32> to vector<16x8xf32>
    %9 = arith.truncf %8 : vector<16x8xf32> to vector<16x8xbf16>
    %c0_8 = arith.constant 0 : index
    %c0_9 = arith.constant 0 : index
    %c0_10 = arith.constant 0 : index
    %10 = vector.load %arg4[%c0_8, %c0_9, %c0_10] : memref<1x16x32xf32, #tpu.memory_space<vmem>>, vector<1x16x8xf32>
    %11 = vector.shape_cast %10 : vector<1x16x8xf32> to vector<16x8xf32>
    %12 = arith.truncf %11 : vector<16x8xf32> to vector<16x8xbf16>
    %cst_11 = arith.constant dense<0.000000e+00> : vector<8x16xf32>
    %13 = tpu.matmul %6, %9, %cst_11 {dimension_numbers = #tpu.dot_dimension_numbers<[1], [1], [0], [0], [0, 0, 1, 0], [], []>} : vector<8x8xbf16>, vector<16x8xbf16>, vector<8x16xf32> -> vector<8x16xf32>
    %14 = vector.broadcast %1 : vector<1x16xf32> to vector<8x16xf32>
    %15 = arith.addf %13, %14 : vector<8x16xf32>
    %cst_12 = arith.constant dense<0xFF800000> : vector<8xf32>
    %16 = vector.multi_reduction <maximumf>, %15, %cst_12 [1] : vector<8x16xf32> to vector<8xf32>
    %17 = vector.shape_cast %16 : vector<8xf32> to vector<8x1xf32>
    %18 = vector.broadcast %17 : vector<8x1xf32> to vector<8x16xf32>
    %19 = arith.subf %15, %18 : vector<8x16xf32>
    %20 = math.exp %19 : vector<8x16xf32>
    %cst_13 = arith.constant dense<0.000000e+00> : vector<8xf32>
    %21 = vector.multi_reduction <add>, %20, %cst_13 [1] : vector<8x16xf32> to vector<8xf32>
    %22 = vector.shape_cast %21 : vector<8xf32> to vector<8x1xf32>
    %23 = tpu.reciprocal %22 {approx = true} : vector<8x1xf32> -> vector<8x1xf32>
    %24 = vector.broadcast %23 : vector<8x1xf32> to vector<8x16xf32>
    %25 = arith.mulf %20, %24 : vector<8x16xf32>
    %26 = arith.truncf %25 : vector<8x16xf32> to vector<8x16xbf16>
    %cst_14 = arith.constant dense<0.000000e+00> : vector<8x8xf32>
    %27 = tpu.matmul %26, %12, %cst_14 {dimension_numbers = #tpu.dot_dimension_numbers<[1], [0], [0], [1], [0, 0, 1, 1], [], []>} : vector<8x16xbf16>, vector<16x8xbf16>, vector<8x8xf32> -> vector<8x8xf32>
    %c0_15 = arith.constant 0 : index
    %c0_16 = arith.constant 0 : index
    %c8 = arith.constant 8 : index
    %28 = vector.load %arg2[%c0_15, %c0_16, %c8] : memref<1x8x32xf32, #tpu.memory_space<vmem>>, vector<1x8x8xf32>
    %29 = vector.shape_cast %28 : vector<1x8x8xf32> to vector<8x8xf32>
    %cst_17 = arith.constant 0.353553385 : f32
    %30 = vector.broadcast %cst_17 : f32 to vector<8x8xf32>
    %31 = arith.mulf %29, %30 : vector<8x8xf32>
    %32 = arith.truncf %31 : vector<8x8xf32> to vector<8x8xbf16>
    %c0_18 = arith.constant 0 : index
    %c0_19 = arith.constant 0 : index
    %c8_20 = arith.constant 8 : index
    %33 = vector.load %arg3[%c0_18, %c0_19, %c8_20] : memref<1x16x32xf32, #tpu.memory_space<vmem>>, vector<1x16x8xf32>
    %34 = vector.shape_cast %33 : vector<1x16x8xf32> to vector<16x8xf32>
    %35 = arith.truncf %34 : vector<16x8xf32> to vector<16x8xbf16>
    %c0_21 = arith.constant 0 : index
    %c0_22 = arith.constant 0 : index
    %c8_23 = arith.constant 8 : index
    %36 = vector.load %arg4[%c0_21, %c0_22, %c8_23] : memref<1x16x32xf32, #tpu.memory_space<vmem>>, vector<1x16x8xf32>
    %37 = vector.shape_cast %36 : vector<1x16x8xf32> to vector<16x8xf32>
    %38 = arith.truncf %37 : vector<16x8xf32> to vector<16x8xbf16>
    %cst_24 = arith.constant dense<0.000000e+00> : vector<8x16xf32>
    %39 = tpu.matmul %32, %35, %cst_24 {dimension_numbers = #tpu.dot_dimension_numbers<[1], [1], [0], [0], [0, 0, 1, 0], [], []>} : vector<8x8xbf16>, vector<16x8xbf16>, vector<8x16xf32> -> vector<8x16xf32>
    %40 = vector.broadcast %1 : vector<1x16xf32> to vector<8x16xf32>
    %41 = arith.addf %39, %40 : vector<8x16xf32>
    %cst_25 = arith.constant dense<0xFF800000> : vector<8xf32>
    %42 = vector.multi_reduction <maximumf>, %41, %cst_25 [1] : vector<8x16xf32> to vector<8xf32>
    %43 = vector.shape_cast %42 : vector<8xf32> to vector<8x1xf32>
    %44 = vector.broadcast %43 : vector<8x1xf32> to vector<8x16xf32>
    %45 = arith.subf %41, %44 : vector<8x16xf32>
    %46 = math.exp %45 : vector<8x16xf32>
    %cst_26 = arith.constant dense<0.000000e+00> : vector<8xf32>
    %47 = vector.multi_reduction <add>, %46, %cst_26 [1] : vector<8x16xf32> to vector<8xf32>
    %48 = vector.shape_cast %47 : vector<8xf32> to vector<8x1xf32>
    %49 = tpu.reciprocal %48 {approx = true} : vector<8x1xf32> -> vector<8x1xf32>
    %50 = vector.broadcast %49 : vector<8x1xf32> to vector<8x16xf32>
    %51 = arith.mulf %46, %50 : vector<8x16xf32>
    %52 = arith.truncf %51 : vector<8x16xf32> to vector<8x16xbf16>
    %cst_27 = arith.constant dense<0.000000e+00> : vector<8x8xf32>
    %53 = tpu.matmul %52, %38, %cst_27 {dimension_numbers = #tpu.dot_dimension_numbers<[1], [0], [0], [1], [0, 0, 1, 1], [], []>} : vector<8x16xbf16>, vector<16x8xbf16>, vector<8x8xf32> -> vector<8x8xf32>
    %c0_28 = arith.constant 0 : index
    %c0_29 = arith.constant 0 : index
    %c16 = arith.constant 16 : index
    %54 = vector.load %arg2[%c0_28, %c0_29, %c16] : memref<1x8x32xf32, #tpu.memory_space<vmem>>, vector<1x8x8xf32>
    %55 = vector.shape_cast %54 : vector<1x8x8xf32> to vector<8x8xf32>
    %cst_30 = arith.constant 0.353553385 : f32
    %56 = vector.broadcast %cst_30 : f32 to vector<8x8xf32>
    %57 = arith.mulf %55, %56 : vector<8x8xf32>
    %58 = arith.truncf %57 : vector<8x8xf32> to vector<8x8xbf16>
    %c0_31 = arith.constant 0 : index
    %c0_32 = arith.constant 0 : index
    %c16_33 = arith.constant 16 : index
    %59 = vector.load %arg3[%c0_31, %c0_32, %c16_33] : memref<1x16x32xf32, #tpu.memory_space<vmem>>, vector<1x16x8xf32>
    %60 = vector.shape_cast %59 : vector<1x16x8xf32> to vector<16x8xf32>
    %61 = arith.truncf %60 : vector<16x8xf32> to vector<16x8xbf16>
    %c0_34 = arith.constant 0 : index
    %c0_35 = arith.constant 0 : index
    %c16_36 = arith.constant 16 : index
    %62 = vector.load %arg4[%c0_34, %c0_35, %c16_36] : memref<1x16x32xf32, #tpu.memory_space<vmem>>, vector<1x16x8xf32>
    %63 = vector.shape_cast %62 : vector<1x16x8xf32> to vector<16x8xf32>
    %64 = arith.truncf %63 : vector<16x8xf32> to vector<16x8xbf16>
    %cst_37 = arith.constant dense<0.000000e+00> : vector<8x16xf32>
    %65 = tpu.matmul %58, %61, %cst_37 {dimension_numbers = #tpu.dot_dimension_numbers<[1], [1], [0], [0], [0, 0, 1, 0], [], []>} : vector<8x8xbf16>, vector<16x8xbf16>, vector<8x16xf32> -> vector<8x16xf32>
    %66 = vector.broadcast %1 : vector<1x16xf32> to vector<8x16xf32>
    %67 = arith.addf %65, %66 : vector<8x16xf32>
    %cst_38 = arith.constant dense<0xFF800000> : vector<8xf32>
    %68 = vector.multi_reduction <maximumf>, %67, %cst_38 [1] : vector<8x16xf32> to vector<8xf32>
    %69 = vector.shape_cast %68 : vector<8xf32> to vector<8x1xf32>
    %70 = vector.broadcast %69 : vector<8x1xf32> to vector<8x16xf32>
    %71 = arith.subf %67, %70 : vector<8x16xf32>
    %72 = math.exp %71 : vector<8x16xf32>
    %cst_39 = arith.constant dense<0.000000e+00> : vector<8xf32>
    %73 = vector.multi_reduction <add>, %72, %cst_39 [1] : vector<8x16xf32> to vector<8xf32>
    %74 = vector.shape_cast %73 : vector<8xf32> to vector<8x1xf32>
    %75 = tpu.reciprocal %74 {approx = true} : vector<8x1xf32> -> vector<8x1xf32>
    %76 = vector.broadcast %75 : vector<8x1xf32> to vector<8x16xf32>
    %77 = arith.mulf %72, %76 : vector<8x16xf32>
    %78 = arith.truncf %77 : vector<8x16xf32> to vector<8x16xbf16>
    %cst_40 = arith.constant dense<0.000000e+00> : vector<8x8xf32>
    %79 = tpu.matmul %78, %64, %cst_40 {dimension_numbers = #tpu.dot_dimension_numbers<[1], [0], [0], [1], [0, 0, 1, 1], [], []>} : vector<8x16xbf16>, vector<16x8xbf16>, vector<8x8xf32> -> vector<8x8xf32>
    %c0_41 = arith.constant 0 : index
    %c0_42 = arith.constant 0 : index
    %c24 = arith.constant 24 : index
    %80 = vector.load %arg2[%c0_41, %c0_42, %c24] : memref<1x8x32xf32, #tpu.memory_space<vmem>>, vector<1x8x8xf32>
    %81 = vector.shape_cast %80 : vector<1x8x8xf32> to vector<8x8xf32>
    %cst_43 = arith.constant 0.353553385 : f32
    %82 = vector.broadcast %cst_43 : f32 to vector<8x8xf32>
    %83 = arith.mulf %81, %82 : vector<8x8xf32>
    %84 = arith.truncf %83 : vector<8x8xf32> to vector<8x8xbf16>
    %c0_44 = arith.constant 0 : index
    %c0_45 = arith.constant 0 : index
    %c24_46 = arith.constant 24 : index
    %85 = vector.load %arg3[%c0_44, %c0_45, %c24_46] : memref<1x16x32xf32, #tpu.memory_space<vmem>>, vector<1x16x8xf32>
    %86 = vector.shape_cast %85 : vector<1x16x8xf32> to vector<16x8xf32>
    %87 = arith.truncf %86 : vector<16x8xf32> to vector<16x8xbf16>
    %c0_47 = arith.constant 0 : index
    %c0_48 = arith.constant 0 : index
    %c24_49 = arith.constant 24 : index
    %88 = vector.load %arg4[%c0_47, %c0_48, %c24_49] : memref<1x16x32xf32, #tpu.memory_space<vmem>>, vector<1x16x8xf32>
    %89 = vector.shape_cast %88 : vector<1x16x8xf32> to vector<16x8xf32>
    %90 = arith.truncf %89 : vector<16x8xf32> to vector<16x8xbf16>
    %cst_50 = arith.constant dense<0.000000e+00> : vector<8x16xf32>
    %91 = tpu.matmul %84, %87, %cst_50 {dimension_numbers = #tpu.dot_dimension_numbers<[1], [1], [0], [0], [0, 0, 1, 0], [], []>} : vector<8x8xbf16>, vector<16x8xbf16>, vector<8x16xf32> -> vector<8x16xf32>
    %92 = vector.broadcast %1 : vector<1x16xf32> to vector<8x16xf32>
    %93 = arith.addf %91, %92 : vector<8x16xf32>
    %cst_51 = arith.constant dense<0xFF800000> : vector<8xf32>
    %94 = vector.multi_reduction <maximumf>, %93, %cst_51 [1] : vector<8x16xf32> to vector<8xf32>
    %95 = vector.shape_cast %94 : vector<8xf32> to vector<8x1xf32>
    %96 = vector.broadcast %95 : vector<8x1xf32> to vector<8x16xf32>
    %97 = arith.subf %93, %96 : vector<8x16xf32>
    %98 = math.exp %97 : vector<8x16xf32>
    %cst_52 = arith.constant dense<0.000000e+00> : vector<8xf32>
    %99 = vector.multi_reduction <add>, %98, %cst_52 [1] : vector<8x16xf32> to vector<8xf32>
    %100 = vector.shape_cast %99 : vector<8xf32> to vector<8x1xf32>
    %101 = tpu.reciprocal %100 {approx = true} : vector<8x1xf32> -> vector<8x1xf32>
    %102 = vector.broadcast %101 : vector<8x1xf32> to vector<8x16xf32>
    %103 = arith.mulf %98, %102 : vector<8x16xf32>
    %104 = arith.truncf %103 : vector<8x16xf32> to vector<8x16xbf16>
    %cst_53 = arith.constant dense<0.000000e+00> : vector<8x8xf32>
    %105 = tpu.matmul %104, %90, %cst_53 {dimension_numbers = #tpu.dot_dimension_numbers<[1], [0], [0], [1], [0, 0, 1, 1], [], []>} : vector<8x16xbf16>, vector<16x8xbf16>, vector<8x8xf32> -> vector<8x8xf32>
    %106 = tpu.concatenate %27, %53, %79, %105 in 1 : vector<8x8xf32>, vector<8x8xf32>, vector<8x8xf32>, vector<8x8xf32> -> vector<8x32xf32>
    %c0_54 = arith.constant 0 : index
    %c0_55 = arith.constant 0 : index
    %c0_56 = arith.constant 0 : index
    %107 = vector.load %arg6[%c0_54, %c0_55, %c0_56] : memref<1x8x32xf32, #tpu.memory_space<vmem>>, vector<1x8x32xf32>
    %108 = vector.shape_cast %107 : vector<1x8x32xf32> to vector<8x32xf32>
    %109 = vector.shape_cast %106 : vector<8x32xf32> to vector<1x8x32xf32>
    tpu.vector_store %arg6[%c0_54, %c0_55, %c0_56], %109 {strides = array<i32>} : memref<1x8x32xf32, #tpu.memory_space<vmem>>, vector<1x8x32xf32>,
    return
  }
  func.func @transform_0(%arg0: i32, %arg1: i32) -> (i32, i32, i32) {
    %c0_i32 = arith.constant 0 : i32
    %c0_i32_0 = arith.constant 0 : i32
    return %arg0, %arg1, %c0_i32 : i32, i32, i32
  }
  func.func @transform_1(%arg0: i32, %arg1: i32) -> (i32, i32, i32) {
    %c0_i32 = arith.constant 0 : i32
    %c0_i32_0 = arith.constant 0 : i32
    %c0_i32_1 = arith.constant 0 : i32
    return %arg0, %c0_i32, %c0_i32_0 : i32, i32, i32
  }
  func.func @transform_2(%arg0: i32, %arg1: i32) -> (i32, i32, i32) {
    %c0_i32 = arith.constant 0 : i32
    %c0_i32_0 = arith.constant 0 : i32
    %c0_i32_1 = arith.constant 0 : i32
    return %arg0, %c0_i32, %c0_i32_0 : i32, i32, i32
  }
  func.func @transform_3(%arg0: i32, %arg1: i32) -> (i32, i32, i32) {
    %c0_i32 = arith.constant 0 : i32
    %c0_i32_0 = arith.constant 0 : i32
    %c0_i32_1 = arith.constant 0 : i32
    return %arg0, %c0_i32, %c0_i32_0 : i32, i32, i32
  }
  func.func @transform_4(%arg0: i32, %arg1: i32) -> (i32, i32, i32) {
    %c0_i32 = arith.constant 0 : i32
    %c0_i32_0 = arith.constant 0 : i32
    return %arg0, %arg1, %c0_i32 : i32, i32, i32
  }
}

module attributes {stable_mosaic.version = 11 : i64} {
  func.func @_ln_ffn_residual_kernel(%arg0: i32, %arg1: i32, %arg2: memref<16x32xf32, #tpu.memory_space<vmem>>, %arg3: memref<1x32xf32, #tpu.memory_space<vmem>>, %arg4: memref<1x32xf32, #tpu.memory_space<vmem>>, %arg5: memref<32x128xbf16, #tpu.memory_space<vmem>>, %arg6: memref<1x128xf32, #tpu.memory_space<vmem>>, %arg7: memref<128x32xbf16, #tpu.memory_space<vmem>>, %arg8: memref<1x32xf32, #tpu.memory_space<vmem>>, %arg9: memref<16x32xf32, #tpu.memory_space<vmem>>, %arg10: memref<16x32xbf16, #tpu.memory_space<vmem>>, %arg11: memref<16x32xf32, #tpu.memory_space<vmem>>) attributes {dimension_semantics = [#tpu.dimension_semantics<parallel>, #tpu.dimension_semantics<arbitrary>], iteration_bounds = array<i64: 1, 1>, scalar_prefetch = 0 : i64, scratch_operands = 2 : i64, tpu.core_type = #tpu.core_type<tc>, window_params = [{transform_indices = @transform_0, window_bounds = array<i64: 16, 32>}, {pipeline_mode = #tpu.pipeline_mode<synchronous>, transform_indices = @transform_1, window_bounds = array<i64: 1, 32>}, {pipeline_mode = #tpu.pipeline_mode<synchronous>, transform_indices = @transform_2, window_bounds = array<i64: 1, 32>}, {transform_indices = @transform_3, window_bounds = array<i64: 32, 128>}, {transform_indices = @transform_4, window_bounds = array<i64: 1, 128>}, {transform_indices = @transform_5, window_bounds = array<i64: 128, 32>}, {pipeline_mode = #tpu.pipeline_mode<synchronous>, transform_indices = @transform_6, window_bounds = array<i64: 1, 32>}, {transform_indices = @transform_7, window_bounds = array<i64: 16, 32>}]} {
    %c0_i32 = arith.constant 0 : i32
    %0 = arith.cmpi eq, %arg1, %c0_i32 : i32
    %1 = arith.extui %0 : i1 to i32
    %c0_i32_0 = arith.constant 0 : i32
    %2 = arith.cmpi ne, %1, %c0_i32_0 : i32
    scf.if %2 {
      %c0_16 = arith.constant 0 : index
      %c0_17 = arith.constant 0 : index
      %20 = vector.load %arg2[%c0_16, %c0_17] : memref<16x32xf32, #tpu.memory_space<vmem>>, vector<16x32xf32>
      %cst_18 = arith.constant dense<0.000000e+00> : vector<16xf32>
      %21 = vector.multi_reduction <add>, %20, %cst_18 [1] : vector<16x32xf32> to vector<16xf32>
      %22 = vector.shape_cast %21 : vector<16xf32> to vector<16x1xf32>
      %cst_19 = arith.constant 3.200000e+01 : f32
      %23 = vector.broadcast %cst_19 : f32 to vector<16x1xf32>
      %24 = arith.divf %22, %23 : vector<16x1xf32>
      %25 = vector.broadcast %24 : vector<16x1xf32> to vector<16x32xf32>
      %26 = arith.subf %20, %25 : vector<16x32xf32>
      %27 = arith.mulf %26, %26 : vector<16x32xf32>
      %cst_20 = arith.constant dense<0.000000e+00> : vector<16xf32>
      %28 = vector.multi_reduction <add>, %27, %cst_20 [1] : vector<16x32xf32> to vector<16xf32>
      %29 = vector.shape_cast %28 : vector<16xf32> to vector<16x1xf32>
      %cst_21 = arith.constant 3.200000e+01 : f32
      %30 = vector.broadcast %cst_21 : f32 to vector<16x1xf32>
      %31 = arith.divf %29, %30 : vector<16x1xf32>
      %32 = vector.broadcast %24 : vector<16x1xf32> to vector<16x32xf32>
      %33 = arith.subf %20, %32 : vector<16x32xf32>
      %cst_22 = arith.constant 9.99999974E-6 : f32
      %34 = vector.broadcast %cst_22 : f32 to vector<16x1xf32>
      %35 = arith.addf %31, %34 : vector<16x1xf32>
      %36 = math.rsqrt %35 : vector<16x1xf32>
      %37 = vector.broadcast %36 : vector<16x1xf32> to vector<16x32xf32>
      %38 = arith.mulf %33, %37 : vector<16x32xf32>
      %c0_23 = arith.constant 0 : index
      %c0_24 = arith.constant 0 : index
      %39 = vector.load %arg3[%c0_23, %c0_24] : memref<1x32xf32, #tpu.memory_space<vmem>>, vector<1x32xf32>
      %40 = vector.broadcast %39 : vector<1x32xf32> to vector<16x32xf32>
      %41 = arith.mulf %38, %40 : vector<16x32xf32>
      %c0_25 = arith.constant 0 : index
      %c0_26 = arith.constant 0 : index
      %42 = vector.load %arg4[%c0_25, %c0_26] : memref<1x32xf32, #tpu.memory_space<vmem>>, vector<1x32xf32>
      %43 = vector.broadcast %42 : vector<1x32xf32> to vector<16x32xf32>
      %44 = arith.addf %41, %43 : vector<16x32xf32>
      %45 = arith.truncf %44 : vector<16x32xf32> to vector<16x32xbf16>
      %c0_27 = arith.constant 0 : index
      %c0_28 = arith.constant 0 : index
      %46 = vector.load %arg10[%c0_27, %c0_28] : memref<16x32xbf16, #tpu.memory_space<vmem>>, vector<16x32xbf16>
      tpu.vector_store %arg10[%c0_27, %c0_28], %45 {strides = array<i32>} : memref<16x32xbf16, #tpu.memory_space<vmem>>, vector<16x32xbf16>,
      %c0_29 = arith.constant 0 : index
      %c0_30 = arith.constant 0 : index
      %47 = vector.load %arg8[%c0_29, %c0_30] : memref<1x32xf32, #tpu.memory_space<vmem>>, vector<1x32xf32>
      %48 = vector.broadcast %47 : vector<1x32xf32> to vector<16x32xf32>
      %49 = arith.addf %20, %48 : vector<16x32xf32>
      %c0_31 = arith.constant 0 : index
      %c0_32 = arith.constant 0 : index
      %50 = vector.load %arg11[%c0_31, %c0_32] : memref<16x32xf32, #tpu.memory_space<vmem>>, vector<16x32xf32>
      tpu.vector_store %arg11[%c0_31, %c0_32], %49 {strides = array<i32>} : memref<16x32xf32, #tpu.memory_space<vmem>>, vector<16x32xf32>,
    } else {
    }
    %c0 = arith.constant 0 : index
    %c0_1 = arith.constant 0 : index
    %3 = vector.load %arg10[%c0, %c0_1] : memref<16x32xbf16, #tpu.memory_space<vmem>>, vector<16x32xbf16>
    %c0_2 = arith.constant 0 : index
    %c0_3 = arith.constant 0 : index
    %4 = vector.load %arg5[%c0_2, %c0_3] : memref<32x128xbf16, #tpu.memory_space<vmem>>, vector<32x128xbf16>
    %cst = arith.constant dense<0.000000e+00> : vector<16x128xf32>
    %5 = tpu.matmul %3, %4, %cst {dimension_numbers = #tpu.dot_dimension_numbers<[1], [0], [0], [1], [0, 0, 1, 1], [], []>} : vector<16x32xbf16>, vector<32x128xbf16>, vector<16x128xf32> -> vector<16x128xf32>
    %c0_4 = arith.constant 0 : index
    %c0_5 = arith.constant 0 : index
    %6 = vector.load %arg6[%c0_4, %c0_5] : memref<1x128xf32, #tpu.memory_space<vmem>>, vector<1x128xf32>
    %7 = vector.broadcast %6 : vector<1x128xf32> to vector<16x128xf32>
    %8 = arith.addf %5, %7 : vector<16x128xf32>
    %cst_6 = arith.constant 0.000000e+00 : f32
    %9 = vector.broadcast %cst_6 : f32 to vector<16x128xf32>
    %10 = arith.maximumf %8, %9 : vector<16x128xf32>
    %c0_7 = arith.constant 0 : index
    %c0_8 = arith.constant 0 : index
    %11 = vector.load %arg11[%c0_7, %c0_8] : memref<16x32xf32, #tpu.memory_space<vmem>>, vector<16x32xf32>
    %12 = arith.truncf %10 : vector<16x128xf32> to vector<16x128xbf16>
    %c0_9 = arith.constant 0 : index
    %c0_10 = arith.constant 0 : index
    %13 = vector.load %arg7[%c0_9, %c0_10] : memref<128x32xbf16, #tpu.memory_space<vmem>>, vector<128x32xbf16>
    %cst_11 = arith.constant dense<0.000000e+00> : vector<16x32xf32>
    %14 = tpu.matmul %12, %13, %cst_11 {dimension_numbers = #tpu.dot_dimension_numbers<[1], [0], [0], [1], [0, 0, 1, 1], [], []>} : vector<16x128xbf16>, vector<128x32xbf16>, vector<16x32xf32> -> vector<16x32xf32>
    %15 = arith.addf %11, %14 : vector<16x32xf32>
    %c0_12 = arith.constant 0 : index
    %c0_13 = arith.constant 0 : index
    %16 = vector.load %arg11[%c0_12, %c0_13] : memref<16x32xf32, #tpu.memory_space<vmem>>, vector<16x32xf32>
    tpu.vector_store %arg11[%c0_12, %c0_13], %15 {strides = array<i32>} : memref<16x32xf32, #tpu.memory_space<vmem>>, vector<16x32xf32>,
    %c0_i32_14 = arith.constant 0 : i32
    %17 = arith.cmpi eq, %arg1, %c0_i32_14 : i32
    %18 = arith.extui %17 : i1 to i32
    %c0_i32_15 = arith.constant 0 : i32
    %19 = arith.cmpi ne, %18, %c0_i32_15 : i32
    scf.if %19 {
      %c0_16 = arith.constant 0 : index
      %c0_17 = arith.constant 0 : index
      %20 = vector.load %arg11[%c0_16, %c0_17] : memref<16x32xf32, #tpu.memory_space<vmem>>, vector<16x32xf32>
      %c0_18 = arith.constant 0 : index
      %c0_19 = arith.constant 0 : index
      %21 = vector.load %arg9[%c0_18, %c0_19] : memref<16x32xf32, #tpu.memory_space<vmem>>, vector<16x32xf32>
      tpu.vector_store %arg9[%c0_18, %c0_19], %20 {strides = array<i32>} : memref<16x32xf32, #tpu.memory_space<vmem>>, vector<16x32xf32>,
    } else {
    }
    return
  }
  func.func @transform_0(%arg0: i32, %arg1: i32) -> (i32, i32) {
    %c0_i32 = arith.constant 0 : i32
    %c0_i32_0 = arith.constant 0 : i32
    return %arg0, %c0_i32 : i32, i32
  }
  func.func @transform_1(%arg0: i32, %arg1: i32) -> (i32, i32) {
    %c0_i32 = arith.constant 0 : i32
    %c0_i32_0 = arith.constant 0 : i32
    %c0_i32_1 = arith.constant 0 : i32
    return %c0_i32, %c0_i32_0 : i32, i32
  }
  func.func @transform_2(%arg0: i32, %arg1: i32) -> (i32, i32) {
    %c0_i32 = arith.constant 0 : i32
    %c0_i32_0 = arith.constant 0 : i32
    %c0_i32_1 = arith.constant 0 : i32
    return %c0_i32, %c0_i32_0 : i32, i32
  }
  func.func @transform_3(%arg0: i32, %arg1: i32) -> (i32, i32) {
    %c0_i32 = arith.constant 0 : i32
    %c0_i32_0 = arith.constant 0 : i32
    return %c0_i32, %arg1 : i32, i32
  }
  func.func @transform_4(%arg0: i32, %arg1: i32) -> (i32, i32) {
    %c0_i32 = arith.constant 0 : i32
    %c0_i32_0 = arith.constant 0 : i32
    return %c0_i32, %arg1 : i32, i32
  }
  func.func @transform_5(%arg0: i32, %arg1: i32) -> (i32, i32) {
    %c0_i32 = arith.constant 0 : i32
    %c0_i32_0 = arith.constant 0 : i32
    return %arg1, %c0_i32 : i32, i32
  }
  func.func @transform_6(%arg0: i32, %arg1: i32) -> (i32, i32) {
    %c0_i32 = arith.constant 0 : i32
    %c0_i32_0 = arith.constant 0 : i32
    %c0_i32_1 = arith.constant 0 : i32
    return %c0_i32, %c0_i32_0 : i32, i32
  }
  func.func @transform_7(%arg0: i32, %arg1: i32) -> (i32, i32) {
    %c0_i32 = arith.constant 0 : i32
    %c0_i32_0 = arith.constant 0 : i32
    return %arg0, %c0_i32 : i32, i32
  }
}

module attributes {stable_mosaic.version = 11 : i64} {
  func.func @_ln_ffn_residual_kernel(%arg0: i32, %arg1: i32, %arg2: memref<16x32xf32, #tpu.memory_space<vmem>>, %arg3: memref<1x32xf32, #tpu.memory_space<vmem>>, %arg4: memref<1x32xf32, #tpu.memory_space<vmem>>, %arg5: memref<32x128xbf16, #tpu.memory_space<vmem>>, %arg6: memref<1x128xf32, #tpu.memory_space<vmem>>, %arg7: memref<128x32xbf16, #tpu.memory_space<vmem>>, %arg8: memref<1x32xf32, #tpu.memory_space<vmem>>, %arg9: memref<16x32xf32, #tpu.memory_space<vmem>>, %arg10: memref<16x32xbf16, #tpu.memory_space<vmem>>, %arg11: memref<16x32xf32, #tpu.memory_space<vmem>>) attributes {dimension_semantics = [#tpu.dimension_semantics<parallel>, #tpu.dimension_semantics<arbitrary>], iteration_bounds = array<i64: 1, 1>, scalar_prefetch = 0 : i64, scratch_operands = 2 : i64, tpu.core_type = #tpu.core_type<tc>, window_params = [{transform_indices = @transform_0, window_bounds = array<i64: 16, 32>}, {pipeline_mode = #tpu.pipeline_mode<synchronous>, transform_indices = @transform_1, window_bounds = array<i64: 1, 32>}, {pipeline_mode = #tpu.pipeline_mode<synchronous>, transform_indices = @transform_2, window_bounds = array<i64: 1, 32>}, {transform_indices = @transform_3, window_bounds = array<i64: 32, 128>}, {transform_indices = @transform_4, window_bounds = array<i64: 1, 128>}, {transform_indices = @transform_5, window_bounds = array<i64: 128, 32>}, {pipeline_mode = #tpu.pipeline_mode<synchronous>, transform_indices = @transform_6, window_bounds = array<i64: 1, 32>}, {transform_indices = @transform_7, window_bounds = array<i64: 16, 32>}]} {
    %c0_i32 = arith.constant 0 : i32
    %0 = arith.cmpi eq, %arg1, %c0_i32 : i32
    %1 = arith.extui %0 : i1 to i32
    %c0_i32_0 = arith.constant 0 : i32
    %2 = arith.cmpi ne, %1, %c0_i32_0 : i32
    scf.if %2 {
      %c0_16 = arith.constant 0 : index
      %c0_17 = arith.constant 0 : index
      %20 = vector.load %arg2[%c0_16, %c0_17] : memref<16x32xf32, #tpu.memory_space<vmem>>, vector<16x32xf32>
      %cst_18 = arith.constant dense<0.000000e+00> : vector<16xf32>
      %21 = vector.multi_reduction <add>, %20, %cst_18 [1] : vector<16x32xf32> to vector<16xf32>
      %22 = vector.shape_cast %21 : vector<16xf32> to vector<16x1xf32>
      %cst_19 = arith.constant 3.200000e+01 : f32
      %23 = vector.broadcast %cst_19 : f32 to vector<16x1xf32>
      %24 = arith.divf %22, %23 : vector<16x1xf32>
      %25 = vector.broadcast %24 : vector<16x1xf32> to vector<16x32xf32>
      %26 = arith.subf %20, %25 : vector<16x32xf32>
      %27 = arith.mulf %26, %26 : vector<16x32xf32>
      %cst_20 = arith.constant dense<0.000000e+00> : vector<16xf32>
      %28 = vector.multi_reduction <add>, %27, %cst_20 [1] : vector<16x32xf32> to vector<16xf32>
      %29 = vector.shape_cast %28 : vector<16xf32> to vector<16x1xf32>
      %cst_21 = arith.constant 3.200000e+01 : f32
      %30 = vector.broadcast %cst_21 : f32 to vector<16x1xf32>
      %31 = arith.divf %29, %30 : vector<16x1xf32>
      %32 = vector.broadcast %24 : vector<16x1xf32> to vector<16x32xf32>
      %33 = arith.subf %20, %32 : vector<16x32xf32>
      %cst_22 = arith.constant 9.99999974E-6 : f32
      %34 = vector.broadcast %cst_22 : f32 to vector<16x1xf32>
      %35 = arith.addf %31, %34 : vector<16x1xf32>
      %36 = math.rsqrt %35 : vector<16x1xf32>
      %37 = vector.broadcast %36 : vector<16x1xf32> to vector<16x32xf32>
      %38 = arith.mulf %33, %37 : vector<16x32xf32>
      %c0_23 = arith.constant 0 : index
      %c0_24 = arith.constant 0 : index
      %39 = vector.load %arg3[%c0_23, %c0_24] : memref<1x32xf32, #tpu.memory_space<vmem>>, vector<1x32xf32>
      %40 = vector.broadcast %39 : vector<1x32xf32> to vector<16x32xf32>
      %41 = arith.mulf %38, %40 : vector<16x32xf32>
      %c0_25 = arith.constant 0 : index
      %c0_26 = arith.constant 0 : index
      %42 = vector.load %arg4[%c0_25, %c0_26] : memref<1x32xf32, #tpu.memory_space<vmem>>, vector<1x32xf32>
      %43 = vector.broadcast %42 : vector<1x32xf32> to vector<16x32xf32>
      %44 = arith.addf %41, %43 : vector<16x32xf32>
      %45 = arith.truncf %44 : vector<16x32xf32> to vector<16x32xbf16>
      %c0_27 = arith.constant 0 : index
      %c0_28 = arith.constant 0 : index
      %46 = vector.load %arg10[%c0_27, %c0_28] : memref<16x32xbf16, #tpu.memory_space<vmem>>, vector<16x32xbf16>
      tpu.vector_store %arg10[%c0_27, %c0_28], %45 {strides = array<i32>} : memref<16x32xbf16, #tpu.memory_space<vmem>>, vector<16x32xbf16>,
      %c0_29 = arith.constant 0 : index
      %c0_30 = arith.constant 0 : index
      %47 = vector.load %arg8[%c0_29, %c0_30] : memref<1x32xf32, #tpu.memory_space<vmem>>, vector<1x32xf32>
      %48 = vector.broadcast %47 : vector<1x32xf32> to vector<16x32xf32>
      %49 = arith.addf %20, %48 : vector<16x32xf32>
      %c0_31 = arith.constant 0 : index
      %c0_32 = arith.constant 0 : index
      %50 = vector.load %arg11[%c0_31, %c0_32] : memref<16x32xf32, #tpu.memory_space<vmem>>, vector<16x32xf32>
      tpu.vector_store %arg11[%c0_31, %c0_32], %49 {strides = array<i32>} : memref<16x32xf32, #tpu.memory_space<vmem>>, vector<16x32xf32>,
    } else {
    }
    %c0 = arith.constant 0 : index
    %c0_1 = arith.constant 0 : index
    %3 = vector.load %arg10[%c0, %c0_1] : memref<16x32xbf16, #tpu.memory_space<vmem>>, vector<16x32xbf16>
    %c0_2 = arith.constant 0 : index
    %c0_3 = arith.constant 0 : index
    %4 = vector.load %arg5[%c0_2, %c0_3] : memref<32x128xbf16, #tpu.memory_space<vmem>>, vector<32x128xbf16>
    %cst = arith.constant dense<0.000000e+00> : vector<16x128xf32>
    %5 = tpu.matmul %3, %4, %cst {dimension_numbers = #tpu.dot_dimension_numbers<[1], [0], [0], [1], [0, 0, 1, 1], [], []>} : vector<16x32xbf16>, vector<32x128xbf16>, vector<16x128xf32> -> vector<16x128xf32>
    %c0_4 = arith.constant 0 : index
    %c0_5 = arith.constant 0 : index
    %6 = vector.load %arg6[%c0_4, %c0_5] : memref<1x128xf32, #tpu.memory_space<vmem>>, vector<1x128xf32>
    %7 = vector.broadcast %6 : vector<1x128xf32> to vector<16x128xf32>
    %8 = arith.addf %5, %7 : vector<16x128xf32>
    %cst_6 = arith.constant 0.000000e+00 : f32
    %9 = vector.broadcast %cst_6 : f32 to vector<16x128xf32>
    %10 = arith.maximumf %8, %9 : vector<16x128xf32>
    %c0_7 = arith.constant 0 : index
    %c0_8 = arith.constant 0 : index
    %11 = vector.load %arg11[%c0_7, %c0_8] : memref<16x32xf32, #tpu.memory_space<vmem>>, vector<16x32xf32>
    %12 = arith.truncf %10 : vector<16x128xf32> to vector<16x128xbf16>
    %c0_9 = arith.constant 0 : index
    %c0_10 = arith.constant 0 : index
    %13 = vector.load %arg7[%c0_9, %c0_10] : memref<128x32xbf16, #tpu.memory_space<vmem>>, vector<128x32xbf16>
    %cst_11 = arith.constant dense<0.000000e+00> : vector<16x32xf32>
    %14 = tpu.matmul %12, %13, %cst_11 {dimension_numbers = #tpu.dot_dimension_numbers<[1], [0], [0], [1], [0, 0, 1, 1], [], []>} : vector<16x128xbf16>, vector<128x32xbf16>, vector<16x32xf32> -> vector<16x32xf32>
    %15 = arith.addf %11, %14 : vector<16x32xf32>
    %c0_12 = arith.constant 0 : index
    %c0_13 = arith.constant 0 : index
    %16 = vector.load %arg11[%c0_12, %c0_13] : memref<16x32xf32, #tpu.memory_space<vmem>>, vector<16x32xf32>
    tpu.vector_store %arg11[%c0_12, %c0_13], %15 {strides = array<i32>} : memref<16x32xf32, #tpu.memory_space<vmem>>, vector<16x32xf32>,
    %c0_i32_14 = arith.constant 0 : i32
    %17 = arith.cmpi eq, %arg1, %c0_i32_14 : i32
    %18 = arith.extui %17 : i1 to i32
    %c0_i32_15 = arith.constant 0 : i32
    %19 = arith.cmpi ne, %18, %c0_i32_15 : i32
    scf.if %19 {
      %c0_16 = arith.constant 0 : index
      %c0_17 = arith.constant 0 : index
      %20 = vector.load %arg11[%c0_16, %c0_17] : memref<16x32xf32, #tpu.memory_space<vmem>>, vector<16x32xf32>
      %c0_18 = arith.constant 0 : index
      %c0_19 = arith.constant 0 : index
      %21 = vector.load %arg9[%c0_18, %c0_19] : memref<16x32xf32, #tpu.memory_space<vmem>>, vector<16x32xf32>
      tpu.vector_store %arg9[%c0_18, %c0_19], %20 {strides = array<i32>} : memref<16x32xf32, #tpu.memory_space<vmem>>, vector<16x32xf32>,
    } else {
    }
    return
  }
  func.func @transform_0(%arg0: i32, %arg1: i32) -> (i32, i32) {
    %c0_i32 = arith.constant 0 : i32
    %c0_i32_0 = arith.constant 0 : i32
    return %arg0, %c0_i32 : i32, i32
  }
  func.func @transform_1(%arg0: i32, %arg1: i32) -> (i32, i32) {
    %c0_i32 = arith.constant 0 : i32
    %c0_i32_0 = arith.constant 0 : i32
    %c0_i32_1 = arith.constant 0 : i32
    return %c0_i32, %c0_i32_0 : i32, i32
  }
  func.func @transform_2(%arg0: i32, %arg1: i32) -> (i32, i32) {
    %c0_i32 = arith.constant 0 : i32
    %c0_i32_0 = arith.constant 0 : i32
    %c0_i32_1 = arith.constant 0 : i32
    return %c0_i32, %c0_i32_0 : i32, i32
  }
  func.func @transform_3(%arg0: i32, %arg1: i32) -> (i32, i32) {
    %c0_i32 = arith.constant 0 : i32
    %c0_i32_0 = arith.constant 0 : i32
    return %c0_i32, %arg1 : i32, i32
  }
  func.func @transform_4(%arg0: i32, %arg1: i32) -> (i32, i32) {
    %c0_i32 = arith.constant 0 : i32
    %c0_i32_0 = arith.constant 0 : i32
    return %c0_i32, %arg1 : i32, i32
  }
  func.func @transform_5(%arg0: i32, %arg1: i32) -> (i32, i32) {
    %c0_i32 = arith.constant 0 : i32
    %c0_i32_0 = arith.constant 0 : i32
    return %arg1, %c0_i32 : i32, i32
  }
  func.func @transform_6(%arg0: i32, %arg1: i32) -> (i32, i32) {
    %c0_i32 = arith.constant 0 : i32
    %c0_i32_0 = arith.constant 0 : i32
    %c0_i32_1 = arith.constant 0 : i32
    return %c0_i32, %c0_i32_0 : i32, i32
  }
  func.func @transform_7(%arg0: i32, %arg1: i32) -> (i32, i32) {
    %c0_i32 = arith.constant 0 : i32
    %c0_i32_0 = arith.constant 0 : i32
    return %arg0, %c0_i32 : i32, i32
  }
}

</mosaic_0001>

<llo_original>
// kernel: decoder_forward.16
$region0: #{decoder_forward.16}
  #allocation0 [shape = 'u32[]', space=smem, size = 0x4, offset = 0x4, fixed_abs, tag = 'smem constant byte address 0x4 - core index']
  #allocation1 [shape = 'u32[144,128]{1,0:T(1,128)}', space=vmem, size = 0x12000, scoped, tag = 'internal scratch']
  #allocation2 [shape = 'bf16[16,32]{1,0:T(16,128)(2,1)}', space=vmem, size = 0x1000, scoped, tag = 'scratch operand']
  %s0 = inlined_call_operand.vmem [shape: f32[16,32], index: 0, kind: input, shape index: {}]
  %s1 = inlined_call_operand.vmem [shape: f32[1,32], index: 1, kind: input, shape index: {}]
  %s2 = inlined_call_operand.vmem [shape: f32[1,32], index: 2, kind: input, shape index: {}]
  %s3 = inlined_call_operand.vmem [shape: bf16[32,96], index: 3, kind: input, shape index: {}]
  %s4 = inlined_call_operand.vmem [shape: f32[1,96], index: 4, kind: input, shape index: {}]
  %s5 = inlined_call_operand.vmem [shape: f32[16,96], index: 5, kind: output, shape index: {}]
  %s6 = sld [smem:[#allocation0]]
  $region34: #{decoder_forward.16} parent=0
    _
  %s8 = ssub.s32 1, %s6
  %s9 = scalar_select 0, %s8, %s6
  // Predicated region
  $region2: #{decoder_forward.16} parent=0 // pred_check
    _
  $region3: #{decoder_forward.16} parent=0 // pred_check_branch
    %11 = sbr.rel (0) target = $region5
  $region4: #{decoder_forward.16} parent=0 // pred_region
    _
  $region5: #{decoder_forward.16} parent=0 // pred_fallthru
    _
  // Predicated region
  $region6: #{decoder_forward.16} parent=0 // pred_check
    _
  $region7: #{decoder_forward.16} parent=0 // pred_check_branch
    %13 = sbr.rel (0) target = $region9
  $region8: #{decoder_forward.16} parent=0 // pred_region
    _
  $region9: #{decoder_forward.16} parent=0 // pred_fallthru
    _
  // Predicated region
  $region10: #{decoder_forward.16} parent=0 // pred_check
    _
  $region11: #{decoder_forward.16} parent=0 // pred_check_branch
    %15 = sbr.rel (0) target = $region13
  $region12: #{decoder_forward.16} parent=0 // pred_region
    _
  $region13: #{decoder_forward.16} parent=0 // pred_fallthru
    _
  // Predicated region
  $region14: #{decoder_forward.16} parent=0 // pred_check
    _
  $region15: #{decoder_forward.16} parent=0 // pred_check_branch
    %17 = sbr.rel (0) target = $region17
  $region16: #{decoder_forward.16} parent=0 // pred_region
    _
  $region17: #{decoder_forward.16} parent=0 // pred_fallthru
    _
  // Predicated region
  $region18: #{decoder_forward.16} parent=0 // pred_check
    _
  $region19: #{decoder_forward.16} parent=0 // pred_check_branch
    %19 = sbr.rel (0) target = $region21
  $region20: #{decoder_forward.16} parent=0 // pred_region
    _
  $region21: #{decoder_forward.16} parent=0 // pred_fallthru
    _
  %p21 = scmp.eq.s32.totalorder 0, 0
  // Predicated region
  $region22: #{decoder_forward.16} parent=0 // pred_check
    %p22 = pneg %p21
  $region23: #{decoder_forward.16} parent=0 // pred_check_branch
    %24 = sbr.rel (%p22) target = $region25
  $region24: #{decoder_forward.16} parent=0 // pred_region
    %v25 = vld [vmem:[%s0] sm:$0xff]
    %v26 = vld [vmem:[%s0 + $0x8] sm:$0xff]
    %vm27 = vcmask 261120
    %v28 = vsel %vm27, %v25, 0.0
    %29 = vadd.xlane.f32.xlu0 %v28
    %v30 = vpop.xlane.xlu0 %29
    %v31 = vsel %vm27, %v26, 0.0
    %32 = vadd.xlane.f32.xlu0 %v31
    %v33 = vpop.xlane.xlu0 %32
    %v34 = vrcp.pop 32.0
    %v35 = vmul.f32 %v30, %v34
    %v36 = vmul.f32 %v33, %v34
    %v37 = vsub.f32 %v25, %v35
    %v38 = vsub.f32 %v26, %v36
    %v39 = vmul.f32 %v37, %v37
    %v40 = vmul.f32 %v38, %v38
    %v41 = vsel %vm27, %v39, 0.0
    %42 = vadd.xlane.f32.xlu0 %v41
    %v43 = vpop.xlane.xlu0 %42
    %v44 = vsel %vm27, %v40, 0.0
    %45 = vadd.xlane.f32.xlu0 %v44
    %v46 = vpop.xlane.xlu0 %45
    %v47 = vmul.f32 %v43, %v34
    %v48 = vmul.f32 %v46, %v34
    %v49 = vadd.f32 %v47, 1e-05
    %v50 = vadd.f32 %v48, 1e-05
    %v51 = vrsqrt.pop %v49
    %v52 = vrsqrt.pop %v50
    %v53 = vmul.f32 %v37, %v51
    %v54 = vmul.f32 %v38, %v52
    %v55 = vld [vmem:[%s1] sm:$0x1]
    %v57 = vlaneseq
    %v58 = vshrl.u32 %v57, 7
    %v59 = vsub.s32 0, %v58
    %v60 = vrot.slane %v55, %v59
    %v62 = vmul.f32 %v53, %v60
    %v63 = vmul.f32 %v54, %v60
    %v64 = vld [vmem:[%s2] sm:$0x1]
    %v66 = vlaneseq
    %v67 = vshrl.u32 %v66, 7
    %v68 = vsub.s32 0, %v67
    %v69 = vrot.slane %v64, %v68
    %v71 = vadd.f32 %v62, %v69
    %v72 = vadd.f32 %v63, %v69
    %v73 = vpack.c.bf16 %v72, %v71
    %74 = vst.msk [vmem:[#allocation2] sm:$0xff] %vm27, %v73
  $region25: #{decoder_forward.16} parent=0 // pred_fallthru
    _
  %v75 = vld [vmem:[#allocation2] sm:$0xff]
  %v76 = vld [vmem:[%s3] sm:$0xf]
  %v77 = vld [vmem:[%s3 + $0x4] sm:$0xf]
  %v78 = vld [vmem:[%s3 + $0x8] sm:$0xf]
  %v79 = vld [vmem:[%s3 + $0xc] sm:$0xf]
  %v80 = vld [vmem:[%s4] sm:$0x1]
  %v82 = vlaneseq
  %v83 = vshrl.u32 %v82, 7
  %v84 = vsub.s32 0, %v83
  %v85 = vrot.slane %v80, %v84
  %v91 = vunpack.c.l.b16 %v76
  %v92 = vunpack.c.l.b16 %v77
  %v93 = vunpack.c.l.b16 %v78
  %v94 = vunpack.c.l.b16 %v79
  %v95 = vpack.c.b16 %v92, %v91
  %v96 = vpack.c.b16 %v94, %v93
  %vm99 = vcmask 261120
  %v101 = vsel %vm99, %v75, 0
  %103 = vmatprep.subr.bf16.mxu0 0
  %104 = vmatpush1.bf16.msra.mxu0 %v95
  %105 = vmatprep.subr.bf16.mxu0 0
  %106 = vmatpush1.bf16.msra.mxu0 %v96
  %107 = vmatprep.subr.bf16.mxu0 0
  %108 = vmatpush1.bf16.msra.mxu0 0
  %109 = vmatprep.subr.bf16.mxu0 0
  %110 = vmatpush1.bf16.msra.mxu0 0
  %111 = vmatprep.subr.bf16.mxu0 0
  %112 = vmatpush1.bf16.msra.mxu0 0
  %113 = vmatprep.subr.bf16.mxu0 0
  %114 = vmatpush1.bf16.msra.mxu0 0
  %115 = vmatprep.subr.bf16.mxu0 0
  %116 = vmatpush1.bf16.msra.mxu0 0
  %117 = vmatprep.subr.bf16.mxu0 0
  %118 = vmatpush1.bf16.msra.mxu0 0
  %119 = vmatprep.subr.bf16.mxu0 0
  %120 = vmatpush1.bf16.msra.mxu0 0
  %121 = vmatprep.subr.bf16.mxu0 0
  %122 = vmatpush1.bf16.msra.mxu0 0
  %123 = vmatprep.subr.bf16.mxu0 0
  %124 = vmatpush1.bf16.msra.mxu0 0
  %125 = vmatprep.subr.bf16.mxu0 0
  %126 = vmatpush1.bf16.msra.mxu0 0
  %127 = vmatprep.subr.bf16.mxu0 0
  %128 = vmatpush1.bf16.msra.mxu0 0
  %129 = vmatprep.subr.bf16.mxu0 0
  %130 = vmatpush1.bf16.msra.mxu0 0
  %131 = vmatprep.subr.bf16.mxu0 0
  %132 = vmatpush1.bf16.msra.mxu0 0
  %133 = vmatprep.subr.bf16.mxu0 0
  %134 = vmatpush1.bf16.msra.mxu0 0
  %135 = vmatprep.mubr.bf16.mxu0 0
  %136 = vmatmul.mubr.bf16.gmra.mrb[0].mxu0 %v101
  %v137 = vpop.f32.mrb[0].mxu0
  %v138 = vadd.f32 %v85, %v137
  %v139 = vpop.f32.mrb[0].mxu0
  %v140 = vpop.f32.mrb[0].mxu0
  %v141 = vadd.f32 %v85, %v140
  %v142 = vpop.f32.mrb[0].mxu0
  %143 = vdwg.mxu0
  %vm144 = vcmask 785408
  %145 = vst.msk [vmem:[%s5] sm:$0xff] %vm144, %v138
  %146 = vst.msk [vmem:[%s5 + $0x8] sm:$0xff] %vm144, %v141
  // Predicated region
  $region26: #{decoder_forward.16} parent=0 // pred_check
    _
  $region27: #{decoder_forward.16} parent=0 // pred_check_branch
    %148 = sbr.rel (0) target = $region29
  $region28: #{decoder_forward.16} parent=0 // pred_region
    _
  $region29: #{decoder_forward.16} parent=0 // pred_fallthru
    _
  // Predicated region
  $region30: #{decoder_forward.16} parent=0 // pred_check
    _
  $region31: #{decoder_forward.16} parent=0 // pred_check_branch
    %150 = sbr.rel (0) target = $region33
  $region32: #{decoder_forward.16} parent=0 // pred_region
    _
  $region33: #{decoder_forward.16} parent=0 // pred_fallthru
    _

// kernel: decoder_forward.17
$region0: #{decoder_forward.17}
  #allocation0 [shape = 'u32[]', space=smem, size = 0x4, offset = 0x4, fixed_abs, tag = 'smem constant byte address 0x4 - core index']
  #allocation1 [shape = 'u32[144,128]{1,0:T(1,128)}', space=vmem, size = 0x12000, scoped, tag = 'internal scratch']
  %s0 = inlined_call_operand.vmem [shape: f32[2,8,32], index: 0, kind: input, shape index: {}]
  %s1 = inlined_call_operand.vmem [shape: f32[2,8,32], index: 1, kind: input, shape index: {}]
  %s2 = inlined_call_operand.vmem [shape: f32[2,8,32], index: 2, kind: input, shape index: {}]
  %s3 = inlined_call_operand.vmem [shape: f32[2,1,8], index: 3, kind: input, shape index: {}]
  %s4 = inlined_call_operand.vmem [shape: f32[2,8,32], index: 4, kind: output, shape index: {}]
  %s5 = sld [smem:[#allocation0]]
  $region49: #{decoder_forward.17} parent=0
    _
  %s7 = ssub.s32 1, %s5
  %s8 = scalar_select 0, %s7, %s5
  loop: start=0, step=1, limit=4
  $region2: #{decoder_forward.17} parent=0 // loop_pre_header
    _
  $region3: #{decoder_forward.17} parent=0 // loop_header
    %s10 = sphi 0, %s14
    %p11 = scmp.ge.s32.totalorder %s10, 4
    %s17 = sphi 0, %s29
    %s18 = sphi 0, %s25
    %s19 = sphi 0, %s17
    %s20 = sphi 0, %s18
    %s21 = sphi 0, %s19
    %s22 = sphi 0, %s20
    %s34 = sphi 0, %s36
    %s37 = sphi 0, %s34
    %s38 = sphi 0, %s37
    %s54 = sphi 0, %s38
    %s60 = sphi 0, %s62
    %s63 = sphi 0, %s60
    %s64 = sphi 0, %s63
    %s80 = sphi 0, %s64
    %s86 = sphi 0, %s88
    %s89 = sphi 0, %s86
    %s90 = sphi 0, %s89
    %s106 = sphi 0, %s90
    %s112 = sphi 0, %s114
    %s115 = sphi 0, %s112
    %s116 = sphi 0, %s115
    %s132 = sphi 0, %s116
    %s140 = sphi 0, %s142
    %s143 = sphi 0, %s140
    %s144 = sphi 0, %s143
    %s160 = sphi 0, %s144
  $region4: #{decoder_forward.17} parent=0 // loop_header_branch
    %13 = sbr.rel (%p11) target = $region8
  $region5: #{decoder_forward.17} parent=0 // loop_body
    %s15 = ssub.s32 %s10, 1
    %s16 = ssub.s32 %s10, 2
    %s23 = sadd.s32 1, %s18
    %p24 = scmp.ge.s32.totalorder %s23, 1
    %s25 = scalar_select %p24, 0, %s23
    %s26 = sadd.s32 1, %s17
    %s27 = scalar_select %p24, %s26, %s17
    %p28 = scmp.ge.s32.totalorder %s27, 2
    %s29 = scalar_select %p28, 0, %s27
    %s30 = ssub.s32 %s17, %s29
    %s31 = ssub.s32 %s18, %s25
    %s32 = sor.u32 %s30, %s31
    %p33 = scmp.eq.s32.totalorder %s32, 0
    %s35 = sadd.s32 %s34, 1
    %s36 = scalar_select %p33, %s34, %s35
    %p39 = pneg %p33
    %p40 = scmp.eq.s32.totalorder %s10, 1
    %p41 = por %p39, %p40
    %p42 = scmp.ne.s32.totalorder %s34, %s37
    %p43 = scmp.eq.s32.totalorder %s10, 0
    %p44 = por %p42, %p43
    %p45 = scmp.ne.s32.totalorder %s34, %s37
    %p46 = scmp.eq.s32.totalorder %s15, 1
    %p47 = por %p45, %p46
    %p48 = scmp.ne.s32.totalorder %s37, %s38
    %p49 = scmp.eq.s32.totalorder %s15, 0
    %p50 = por %p48, %p49
    %p51 = scmp.ne.s32.totalorder %s37, %s38
    %p52 = scmp.eq.s32.totalorder %s16, 1
    %p53 = por %p51, %p52
    %p55 = scmp.ne.s32.totalorder %s38, %s54
    %p56 = scmp.eq.s32.totalorder %s16, 0
    %p57 = por %p55, %p56
    %s58 = ssub.s32 %s17, %s29
    %p59 = scmp.eq.s32.totalorder %s58, 0
    %s61 = sadd.s32 %s60, 1
    %s62 = scalar_select %p59, %s60, %s61
    %p65 = pneg %p59
    %p66 = scmp.eq.s32.totalorder %s10, 1
    %p67 = por %p65, %p66
    %p68 = scmp.ne.s32.totalorder %s60, %s63
    %p69 = scmp.eq.s32.totalorder %s10, 0
    %p70 = por %p68, %p69
    %p71 = scmp.ne.s32.totalorder %s60, %s63
    %p72 = scmp.eq.s32.totalorder %s15, 1
    %p73 = por %p71, %p72
    %p74 = scmp.ne.s32.totalorder %s63, %s64
    %p75 = scmp.eq.s32.totalorder %s15, 0
    %p76 = por %p74, %p75
    %p77 = scmp.ne.s32.totalorder %s63, %s64
    %p78 = scmp.eq.s32.totalorder %s16, 1
    %p79 = por %p77, %p78
    %p81 = scmp.ne.s32.totalorder %s64, %s80
    %p82 = scmp.eq.s32.totalorder %s16, 0
    %p83 = por %p81, %p82
    %s84 = ssub.s32 %s17, %s29
    %p85 = scmp.eq.s32.totalorder %s84, 0
    %s87 = sadd.s32 %s86, 1
    %s88 = scalar_select %p85, %s86, %s87
    %p91 = pneg %p85
    %p92 = scmp.eq.s32.totalorder %s10, 1
    %p93 = por %p91, %p92
    %p94 = scmp.ne.s32.totalorder %s86, %s89
    %p95 = scmp.eq.s32.totalorder %s10, 0
    %p96 = por %p94, %p95
    %p97 = scmp.ne.s32.totalorder %s86, %s89
    %p98 = scmp.eq.s32.totalorder %s15, 1
    %p99 = por %p97, %p98
    %p100 = scmp.ne.s32.totalorder %s89, %s90
    %p101 = scmp.eq.s32.totalorder %s15, 0
    %p102 = por %p100, %p101
    %p103 = scmp.ne.s32.totalorder %s89, %s90
    %p104 = scmp.eq.s32.totalorder %s16, 1
    %p105 = por %p103, %p104
    %p107 = scmp.ne.s32.totalorder %s90, %s106
    %p108 = scmp.eq.s32.totalorder %s16, 0
    %p109 = por %p107, %p108
    %s110 = ssub.s32 %s17, %s29
    %p111 = scmp.eq.s32.totalorder %s110, 0
    %s113 = sadd.s32 %s112, 1
    %s114 = scalar_select %p111, %s112, %s113
    %p117 = pneg %p111
    %p118 = scmp.eq.s32.totalorder %s10, 1
    %p119 = por %p117, %p118
    %p120 = scmp.ne.s32.totalorder %s112, %s115
    %p121 = scmp.eq.s32.totalorder %s10, 0
    %p122 = por %p120, %p121
    %p123 = scmp.ne.s32.totalorder %s112, %s115
    %p124 = scmp.eq.s32.totalorder %s15, 1
    %p125 = por %p123, %p124
    %p126 = scmp.ne.s32.totalorder %s115, %s116
    %p127 = scmp.eq.s32.totalorder %s15, 0
    %p128 = por %p126, %p127
    %p129 = scmp.ne.s32.totalorder %s115, %s116
    %p130 = scmp.eq.s32.totalorder %s16, 1
    %p131 = por %p129, %p130
    %p133 = scmp.ne.s32.totalorder %s116, %s132
    %p134 = scmp.eq.s32.totalorder %s16, 0
    %p135 = por %p133, %p134
    %s136 = ssub.s32 %s17, %s29
    %s137 = ssub.s32 %s18, %s25
    %s138 = sor.u32 %s136, %s137
    %p139 = scmp.eq.s32.totalorder %s138, 0
    %s141 = sadd.s32 %s140, 1
    %s142 = scalar_select %p139, %s140, %s141
    %p145 = pneg %p139
    %p146 = scmp.eq.s32.totalorder %s10, 1
    %p147 = por %p145, %p146
    %p148 = scmp.ne.s32.totalorder %s140, %s143
    %p149 = scmp.eq.s32.totalorder %s10, 0
    %p150 = por %p148, %p149
    %p151 = scmp.ne.s32.totalorder %s140, %s143
    %p152 = scmp.eq.s32.totalorder %s15, 1
    %p153 = por %p151, %p152
    %p154 = scmp.ne.s32.totalorder %s143, %s144
    %p155 = scmp.eq.s32.totalorder %s15, 0
    %p156 = por %p154, %p155
    %p157 = scmp.ne.s32.totalorder %s143, %s144
    %p158 = scmp.eq.s32.totalorder %s16, 1
    %p159 = por %p157, %p158
    %p161 = scmp.ne.s32.totalorder %s144, %s160
    %p162 = scmp.eq.s32.totalorder %s16, 0
    %p163 = por %p161, %p162
    %p164 = scmp.le.s32.totalorder 1, %s10
    %p165 = scmp.lt.s32.totalorder %s10, 3
    %p166 = pnand %p164, %p165
    %p167 = pneg %p166
    // Predicated region
    $region9: #{decoder_forward.17} parent=5 // pred_check
      _
    $region10: #{decoder_forward.17} parent=5 // pred_check_branch
      %169 = sbr.rel (%p166) target = $region12
    $region11: #{decoder_forward.17} parent=5 // pred_region
      %s170 = ssub.s32 %s10, 1
    $region12: #{decoder_forward.17} parent=5 // pred_fallthru
      _
    %p171 = scmp.lt.s32.totalorder %s10, 2
    // Predicated region
    $region13: #{decoder_forward.17} parent=5 // pred_check
      %p172 = pneg %p171
    $region14: #{decoder_forward.17} parent=5 // pred_check_branch
      %174 = sbr.rel (%p172) target = $region16
    $region15: #{decoder_forward.17} parent=5 // pred_region
      // Predicated region
      $region17: #{decoder_forward.17} parent=15 // pred_check
        %p175 = pneg %p44
      $region18: #{decoder_forward.17} parent=15 // pred_check_branch
        %177 = sbr.rel (%p175) target = $region20
      $region19: #{decoder_forward.17} parent=15 // pred_region
        %p178 = scmp.lt.s32.totalorder %s17, 1
        %s179 = scalar_select %p178, %s17, 1
        %p180 = scmp.lt.s32.totalorder %s18, 0
        %s181 = scalar_select %p180, %s18, 0
        %s182 = sadd.s32 %s181, %s179
        %s183 = smul.addr %s182, 8
        %s184 = scalar_lea.vmem %s0, %s183
      $region20: #{decoder_forward.17} parent=15 // pred_fallthru
        _
      // Predicated region
      $region21: #{decoder_forward.17} parent=15 // pred_check
        %p185 = pneg %p70
      $region22: #{decoder_forward.17} parent=15 // pred_check_branch
        %187 = sbr.rel (%p185) target = $region24
      $region23: #{decoder_forward.17} parent=15 // pred_region
        %p188 = scmp.lt.s32.totalorder %s17, 1
        %s189 = scalar_select %p188, %s17, 1
        %s190 = smul.addr %s189, 8
        %s191 = scalar_lea.vmem %s1, %s190
      $region24: #{decoder_forward.17} parent=15 // pred_fallthru
        _
      // Predicated region
      $region25: #{decoder_forward.17} parent=15 // pred_check
        %p192 = pneg %p96
      $region26: #{decoder_forward.17} parent=15 // pred_check_branch
        %194 = sbr.rel (%p192) target = $region28
      $region27: #{decoder_forward.17} parent=15 // pred_region
        %p195 = scmp.lt.s32.totalorder %s17, 1
        %s196 = scalar_select %p195, %s17, 1
        %s197 = smul.addr %s196, 8
        %s198 = scalar_lea.vmem %s2, %s197
      $region28: #{decoder_forward.17} parent=15 // pred_fallthru
        _
      // Predicated region
      $region29: #{decoder_forward.17} parent=15 // pred_check
        %p199 = pneg %p122
      $region30: #{decoder_forward.17} parent=15 // pred_check_branch
        %201 = sbr.rel (%p199) target = $region32
      $region31: #{decoder_forward.17} parent=15 // pred_region
        %p202 = scmp.lt.s32.totalorder %s17, 1
        %s203 = scalar_select %p202, %s17, 1
        %s204 = scalar_lea.vmem %s3, %s203
      $region32: #{decoder_forward.17} parent=15 // pred_fallthru
        _
    $region16: #{decoder_forward.17} parent=5 // pred_fallthru
      _
    %p205 = scmp.le.s32.totalorder 1, %s10
    %p206 = scmp.lt.s32.totalorder %s10, 3
    %p207 = pnand %p205, %p206
    %p208 = pneg %p207
    // Predicated region
    $region33: #{decoder_forward.17} parent=5 // pred_check
      _
    $region34: #{decoder_forward.17} parent=5 // pred_check_branch
      %210 = sbr.rel (%p207) target = $region36
    $region35: #{decoder_forward.17} parent=5 // pred_region
      %s211 = ssub.s32 %s10, 1
      %p212 = scmp.lt.s32.totalorder %s19, 1
      %s213 = scalar_select %p212, %s19, 1
      %p214 = scmp.lt.s32.totalorder %s20, 0
      %s215 = scalar_select %p214, %s20, 0
      %s216 = sadd.s32 %s215, %s213
      %s217 = smul.addr %s216, 8
      %s218 = scalar_lea.vmem %s0, %s217
      %p219 = pneg %p50
      %p220 = pneg %p47
      %p221 = scmp.lt.s32.totalorder %s19, 1
      %s222 = scalar_select %p221, %s19, 1
      %s223 = smul.addr %s222, 8
      %s224 = scalar_lea.vmem %s1, %s223
      %p225 = pneg %p76
      %p226 = pneg %p73
      %p227 = scmp.lt.s32.totalorder %s19, 1
      %s228 = scalar_select %p227, %s19, 1
      %s229 = smul.addr %s228, 8
      %s230 = scalar_lea.vmem %s2, %s229
      %p231 = pneg %p102
      %p232 = pneg %p99
      %p233 = scmp.lt.s32.totalorder %s19, 1
      %s234 = scalar_select %p233, %s19, 1
      %s235 = scalar_lea.vmem %s3, %s234
      %p236 = pneg %p128
      %p237 = pneg %p125
      %p238 = pneg %p156
      %p239 = pneg %p153
      %p240 = scmp.lt.s32.totalorder %s19, 1
      %s241 = scalar_select %p240, %s19, 1
      %p242 = scmp.lt.s32.totalorder %s20, 0
      %s243 = scalar_select %p242, %s20, 0
      %s244 = sadd.s32 %s243, %s241
      %s245 = smul.addr %s244, 8
      %s246 = scalar_lea.vmem %s4, %s245
      %p247 = scmp.lt.s32.totalorder %s19, 1
      %s248 = scalar_select %p247, %s19, 1
      %p249 = scmp.lt.s32.totalorder %s20, 0
      %s250 = scalar_select %p249, %s20, 0
      %s251 = sadd.s32 %s250, %s248
      %s252 = smul.addr %s251, 8
      %s253 = scalar_lea.vmem %s0, %s252
      %p254 = scmp.lt.s32.totalorder %s19, 1
      %s255 = scalar_select %p254, %s19, 1
      %s256 = smul.addr %s255, 8
      %s257 = scalar_lea.vmem %s1, %s256
      %p258 = scmp.lt.s32.totalorder %s19, 1
      %s259 = scalar_select %p258, %s19, 1
      %s260 = smul.addr %s259, 8
      %s261 = scalar_lea.vmem %s2, %s260
      %p262 = scmp.lt.s32.totalorder %s19, 1
      %s263 = scalar_select %p262, %s19, 1
      %s264 = scalar_lea.vmem %s3, %s263
      %p265 = scmp.lt.s32.totalorder %s19, 1
      %s266 = scalar_select %p265, %s19, 1
      %p267 = scmp.lt.s32.totalorder %s20, 0
      %s268 = scalar_select %p267, %s20, 0
      %s269 = sadd.s32 %s268, %s266
      %s270 = smul.addr %s269, 8
      %s271 = scalar_lea.vmem %s4, %s270
      %v273 = vld [vmem:[%s264] sm:$0x1]
      %v274 = vld [vmem:[%s253] sm:$0xff]
      %v275 = vmul.f32 %v274, 0.35355338
      %v276 = vpack.c.bf16 %v275, %v275
      %v277 = vld [vmem:[%s257] sm:$0xff]
      %v278 = vpack.c.bf16 %v277, %v277
      %v279 = vld [vmem:[%s261] sm:$0xff]
      %v280 = vpack.c.bf16 %v279, %v279
      %v282 = vlaneseq
      %v283 = vshrl.u32 %v282, 7
      %v284 = vsub.s32 0, %v283
      %v285 = vrot.slane %v273, %v284
      %vm287 = vcmask 64512
      %v289 = vsel %vm287, %v276, 0
      %v292 = vsel %vm287, %v278, 0
      %294 = vmatprep.subr.bf16.mxu0 0
      %295 = vmatpush1.bf16.xpose.msra.mxu0 %v292
      %296 = vmatprep.subr.bf16.mxu0 0
      %297 = vmatpush1.bf16.xpose.msra.mxu0 0
      %298 = vmatprep.subr.bf16.mxu0 0
      %299 = vmatpush1.bf16.xpose.msra.mxu0 0
      %300 = vmatprep.subr.bf16.mxu0 0
      %301 = vmatpush1.bf16.xpose.msra.mxu0 0
      %302 = vmatprep.subr.bf16.mxu0 0
      %303 = vmatpush1.bf16.xpose.msra.mxu0 0
      %304 = vmatprep.subr.bf16.mxu0 0
      %305 = vmatpush1.bf16.xpose.msra.mxu0 0
      %306 = vmatprep.subr.bf16.mxu0 0
      %307 = vmatpush1.bf16.xpose.msra.mxu0 0
      %308 = vmatprep.subr.bf16.mxu0 0
      %309 = vmatpush1.bf16.xpose.msra.mxu0 0
      %310 = vmatprep.subr.bf16.mxu0 0
      %311 = vmatpush1.bf16.xpose.msra.mxu0 0
      %312 = vmatprep.subr.bf16.mxu0 0
      %313 = vmatpush1.bf16.xpose.msra.mxu0 0
      %314 = vmatprep.subr.bf16.mxu0 0
      %315 = vmatpush1.bf16.xpose.msra.mxu0 0
      %316 = vmatprep.subr.bf16.mxu0 0
      %317 = vmatpush1.bf16.xpose.msra.mxu0 0
      %318 = vmatprep.subr.bf16.mxu0 0
      %319 = vmatpush1.bf16.xpose.msra.mxu0 0
      %320 = vmatprep.subr.bf16.mxu0 0
      %321 = vmatpush1.bf16.xpose.msra.mxu0 0
      %322 = vmatprep.subr.bf16.mxu0 0
      %323 = vmatpush1.bf16.xpose.msra.mxu0 0
      %324 = vmatprep.subr.bf16.mxu0 0
      %325 = vmatpush1.bf16.xpose.msra.mxu0 0
      %326 = vmatprep.mubr.bf16.mxu0 0
      %327 = vmatmul.mubr.bf16.gmra.mrb[0].mxu0 %v289
      %v328 = vpop.f32.mrb[0].mxu0
      %v329 = vadd.f32 %v285, %v328
      %v330 = vpop.f32.mrb[0].mxu0
      %v331 = vpop.f32.mrb[0].mxu0
      %v332 = vpop.f32.mrb[0].mxu0
      %333 = vdwg.mxu0
      %v334 = vsel %vm287, %v329, -inf
      %335 = vmax.xlane.f32.xlu0 %v334
      %v336 = vpop.xlane.xlu0 %335
      %v337 = vsub.f32 %v329, %v336
      %v338 = vmul.f32 %v337, 1.442695
      %v339 = vpow.pop %v338
      %v340 = vsel %vm287, %v339, 0.0
      %341 = vadd.xlane.f32.xlu0 %v340
      %v342 = vpop.xlane.xlu0 %341
      %v343 = vrcp.pop %v342
      %v344 = vmul.f32 %v339, %v343
      %v345 = vpack.c.bf16 %v344, %v344
      %v347 = vsel %vm287, %v345, 0
      %vm349 = vcmask 1043456
      %v351 = vsel %vm349, %v280, 0
      %353 = vmatprep.subr.bf16.mxu0 0
      %354 = vmatpush1.bf16.msra.mxu0 %v351
      %355 = vmatprep.subr.bf16.mxu0 0
      %356 = vmatpush1.bf16.msra.mxu0 0
      %357 = vmatprep.subr.bf16.mxu0 0
      %358 = vmatpush1.bf16.msra.mxu0 0
      %359 = vmatprep.subr.bf16.mxu0 0
      %360 = vmatpush1.bf16.msra.mxu0 0
      %361 = vmatprep.subr.bf16.mxu0 0
      %362 = vmatpush1.bf16.msra.mxu0 0
      %363 = vmatprep.subr.bf16.mxu0 0
      %364 = vmatpush1.bf16.msra.mxu0 0
      %365 = vmatprep.subr.bf16.mxu0 0
      %366 = vmatpush1.bf16.msra.mxu0 0
      %367 = vmatprep.subr.bf16.mxu0 0
      %368 = vmatpush1.bf16.msra.mxu0 0
      %369 = vmatprep.subr.bf16.mxu0 0
      %370 = vmatpush1.bf16.msra.mxu0 0
      %371 = vmatprep.subr.bf16.mxu0 0
      %372 = vmatpush1.bf16.msra.mxu0 0
      %373 = vmatprep.subr.bf16.mxu0 0
      %374 = vmatpush1.bf16.msra.mxu0 0
      %375 = vmatprep.subr.bf16.mxu0 0
      %376 = vmatpush1.bf16.msra.mxu0 0
      %377 = vmatprep.subr.bf16.mxu0 0
      %378 = vmatpush1.bf16.msra.mxu0 0
      %379 = vmatprep.subr.bf16.mxu0 0
      %380 = vmatpush1.bf16.msra.mxu0 0
      %381 = vmatprep.subr.bf16.mxu0 0
      %382 = vmatpush1.bf16.msra.mxu0 0
      %383 = vmatprep.subr.bf16.mxu0 0
      %384 = vmatpush1.bf16.msra.mxu0 0
      %385 = vmatprep.mubr.bf16.mxu0 0
      %386 = vmatmul.mubr.bf16.gmra.mrb[0].mxu0 %v347
      %v387 = vpop.f32.mrb[0].mxu0
      %v388 = vadd.f32 0.0, %v387
      %v389 = vpop.f32.mrb[0].mxu0
      %v390 = vpop.f32.mrb[0].mxu0
      %v391 = vpop.f32.mrb[0].mxu0
      %392 = vdwg.mxu0
      %394 = vrot.lane.b32.xlu0 %v276, 120
      %v395 = vpop.permute.xlu0 %394
      %397 = vrot.lane.b32.xlu0 %v278, 120
      %v398 = vpop.permute.xlu0 %397
      %v400 = vsel %vm287, %v395, 0
      %v403 = vsel %vm287, %v398, 0
      %405 = vmatprep.subr.bf16.mxu0 0
      %406 = vmatpush1.bf16.xpose.msra.mxu0 %v403
      %407 = vmatprep.subr.bf16.mxu0 0
      %408 = vmatpush1.bf16.xpose.msra.mxu0 0
      %409 = vmatprep.subr.bf16.mxu0 0
      %410 = vmatpush1.bf16.xpose.msra.mxu0 0
      %411 = vmatprep.subr.bf16.mxu0 0
      %412 = vmatpush1.bf16.xpose.msra.mxu0 0
      %413 = vmatprep.subr.bf16.mxu0 0
      %414 = vmatpush1.bf16.xpose.msra.mxu0 0
      %415 = vmatprep.subr.bf16.mxu0 0
      %416 = vmatpush1.bf16.xpose.msra.mxu0 0
      %417 = vmatprep.subr.bf16.mxu0 0
      %418 = vmatpush1.bf16.xpose.msra.mxu0 0
      %419 = vmatprep.subr.bf16.mxu0 0
      %420 = vmatpush1.bf16.xpose.msra.mxu0 0
      %421 = vmatprep.subr.bf16.mxu0 0
      %422 = vmatpush1.bf16.xpose.msra.mxu0 0
      %423 = vmatprep.subr.bf16.mxu0 0
      %424 = vmatpush1.bf16.xpose.msra.mxu0 0
      %425 = vmatprep.subr.bf16.mxu0 0
      %426 = vmatpush1.bf16.xpose.msra.mxu0 0
      %427 = vmatprep.subr.bf16.mxu0 0
      %428 = vmatpush1.bf16.xpose.msra.mxu0 0
      %429 = vmatprep.subr.bf16.mxu0 0
      %430 = vmatpush1.bf16.xpose.msra.mxu0 0
      %431 = vmatprep.subr.bf16.mxu0 0
      %432 = vmatpush1.bf16.xpose.msra.mxu0 0
      %433 = vmatprep.subr.bf16.mxu0 0
      %434 = vmatpush1.bf16.xpose.msra.mxu0 0
      %435 = vmatprep.subr.bf16.mxu0 0
      %436 = vmatpush1.bf16.xpose.msra.mxu0 0
      %437 = vmatprep.mubr.bf16.mxu0 0
      %438 = vmatmul.mubr.bf16.gmra.mrb[0].mxu0 %v400
      %v439 = vpop.f32.mrb[0].mxu0
      %v440 = vadd.f32 %v285, %v439
      %v441 = vpop.f32.mrb[0].mxu0
      %v442 = vpop.f32.mrb[0].mxu0
      %v443 = vpop.f32.mrb[0].mxu0
      %444 = vdwg.mxu0
      %v445 = vsel %vm287, %v440, -inf
      %446 = vmax.xlane.f32.xlu0 %v445
      %v447 = vpop.xlane.xlu0 %446
      %v448 = vsub.f32 %v440, %v447
      %v449 = vmul.f32 %v448, 1.442695
      %v450 = vpow.pop %v449
      %v451 = vsel %vm287, %v450, 0.0
      %452 = vadd.xlane.f32.xlu0 %v451
      %v453 = vpop.xlane.xlu0 %452
      %v454 = vrcp.pop %v453
      %v455 = vmul.f32 %v450, %v454
      %v456 = vpack.c.bf16 %v455, %v455
      %458 = vrot.lane.b32.xlu0 %v280, 120
      %v459 = vpop.permute.xlu0 %458
      %v461 = vsel %vm287, %v456, 0
      %v464 = vsel %vm349, %v459, 0
      %466 = vmatprep.subr.bf16.mxu0 0
      %467 = vmatpush1.bf16.msra.mxu0 %v464
      %468 = vmatprep.subr.bf16.mxu0 0
      %469 = vmatpush1.bf16.msra.mxu0 0
      %470 = vmatprep.subr.bf16.mxu0 0
      %471 = vmatpush1.bf16.msra.mxu0 0
      %472 = vmatprep.subr.bf16.mxu0 0
      %473 = vmatpush1.bf16.msra.mxu0 0
      %474 = vmatprep.subr.bf16.mxu0 0
      %475 = vmatpush1.bf16.msra.mxu0 0
      %476 = vmatprep.subr.bf16.mxu0 0
      %477 = vmatpush1.bf16.msra.mxu0 0
      %478 = vmatprep.subr.bf16.mxu0 0
      %479 = vmatpush1.bf16.msra.mxu0 0
      %480 = vmatprep.subr.bf16.mxu0 0
      %481 = vmatpush1.bf16.msra.mxu0 0
      %482 = vmatprep.subr.bf16.mxu0 0
      %483 = vmatpush1.bf16.msra.mxu0 0
      %484 = vmatprep.subr.bf16.mxu0 0
      %485 = vmatpush1.bf16.msra.mxu0 0
      %486 = vmatprep.subr.bf16.mxu0 0
      %487 = vmatpush1.bf16.msra.mxu0 0
      %488 = vmatprep.subr.bf16.mxu0 0
      %489 = vmatpush1.bf16.msra.mxu0 0
      %490 = vmatprep.subr.bf16.mxu0 0
      %491 = vmatpush1.bf16.msra.mxu0 0
      %492 = vmatprep.subr.bf16.mxu0 0
      %493 = vmatpush1.bf16.msra.mxu0 0
      %494 = vmatprep.subr.bf16.mxu0 0
      %495 = vmatpush1.bf16.msra.mxu0 0
      %496 = vmatprep.subr.bf16.mxu0 0
      %497 = vmatpush1.bf16.msra.mxu0 0
      %498 = vmatprep.mubr.bf16.mxu0 0
      %499 = vmatmul.mubr.bf16.gmra.mrb[0].mxu0 %v461
      %v500 = vpop.f32.mrb[0].mxu0
      %v501 = vadd.f32 0.0, %v500
      %v502 = vpop.f32.mrb[0].mxu0
      %v503 = vpop.f32.mrb[0].mxu0
      %v504 = vpop.f32.mrb[0].mxu0
      %505 = vdwg.mxu0
      %506 = vrot.lane.b32.xlu0 %v276, 112
      %v507 = vpop.permute.xlu0 %506
      %508 = vrot.lane.b32.xlu0 %v278, 112
      %v509 = vpop.permute.xlu0 %508
      %v511 = vsel %vm287, %v507, 0
      %v514 = vsel %vm287, %v509, 0
      %516 = vmatprep.subr.bf16.mxu0 0
      %517 = vmatpush1.bf16.xpose.msra.mxu0 %v514
      %518 = vmatprep.subr.bf16.mxu0 0
      %519 = vmatpush1.bf16.xpose.msra.mxu0 0
      %520 = vmatprep.subr.bf16.mxu0 0
      %521 = vmatpush1.bf16.xpose.msra.mxu0 0
      %522 = vmatprep.subr.bf16.mxu0 0
      %523 = vmatpush1.bf16.xpose.msra.mxu0 0
      %524 = vmatprep.subr.bf16.mxu0 0
      %525 = vmatpush1.bf16.xpose.msra.mxu0 0
      %526 = vmatprep.subr.bf16.mxu0 0
      %527 = vmatpush1.bf16.xpose.msra.mxu0 0
      %528 = vmatprep.subr.bf16.mxu0 0
      %529 = vmatpush1.bf16.xpose.msra.mxu0 0
      %530 = vmatprep.subr.bf16.mxu0 0
      %531 = vmatpush1.bf16.xpose.msra.mxu0 0
      %532 = vmatprep.subr.bf16.mxu0 0
      %533 = vmatpush1.bf16.xpose.msra.mxu0 0
      %534 = vmatprep.subr.bf16.mxu0 0
      %535 = vmatpush1.bf16.xpose.msra.mxu0 0
      %536 = vmatprep.subr.bf16.mxu0 0
      %537 = vmatpush1.bf16.xpose.msra.mxu0 0
      %538 = vmatprep.subr.bf16.mxu0 0
      %539 = vmatpush1.bf16.xpose.msra.mxu0 0
      %540 = vmatprep.subr.bf16.mxu0 0
      %541 = vmatpush1.bf16.xpose.msra.mxu0 0
      %542 = vmatprep.subr.bf16.mxu0 0
      %543 = vmatpush1.bf16.xpose.msra.mxu0 0
      %544 = vmatprep.subr.bf16.mxu0 0
      %545 = vmatpush1.bf16.xpose.msra.mxu0 0
      %546 = vmatprep.subr.bf16.mxu0 0
      %547 = vmatpush1.bf16.xpose.msra.mxu0 0
      %548 = vmatprep.mubr.bf16.mxu0 0
      %549 = vmatmul.mubr.bf16.gmra.mrb[0].mxu0 %v511
      %v550 = vpop.f32.mrb[0].mxu0
      %v551 = vadd.f32 %v285, %v550
      %v552 = vpop.f32.mrb[0].mxu0
      %v553 = vpop.f32.mrb[0].mxu0
      %v554 = vpop.f32.mrb[0].mxu0
      %555 = vdwg.mxu0
      %v556 = vsel %vm287, %v551, -inf
      %557 = vmax.xlane.f32.xlu0 %v556
      %v558 = vpop.xlane.xlu0 %557
      %v559 = vsub.f32 %v551, %v558
      %v560 = vmul.f32 %v559, 1.442695
      %v561 = vpow.pop %v560
      %v562 = vsel %vm287, %v561, 0.0
      %563 = vadd.xlane.f32.xlu0 %v562
      %v564 = vpop.xlane.xlu0 %563
      %v565 = vrcp.pop %v564
      %v566 = vmul.f32 %v561, %v565
      %v567 = vpack.c.bf16 %v566, %v566
      %568 = vrot.lane.b32.xlu0 %v280, 112
      %v569 = vpop.permute.xlu0 %568
      %v571 = vsel %vm287, %v567, 0
      %v574 = vsel %vm349, %v569, 0
      %576 = vmatprep.subr.bf16.mxu0 0
      %577 = vmatpush1.bf16.msra.mxu0 %v574
      %578 = vmatprep.subr.bf16.mxu0 0
      %579 = vmatpush1.bf16.msra.mxu0 0
      %580 = vmatprep.subr.bf16.mxu0 0
      %581 = vmatpush1.bf16.msra.mxu0 0
      %582 = vmatprep.subr.bf16.mxu0 0
      %583 = vmatpush1.bf16.msra.mxu0 0
      %584 = vmatprep.subr.bf16.mxu0 0
      %585 = vmatpush1.bf16.msra.mxu0 0
      %586 = vmatprep.subr.bf16.mxu0 0
      %587 = vmatpush1.bf16.msra.mxu0 0
      %588 = vmatprep.subr.bf16.mxu0 0
      %589 = vmatpush1.bf16.msra.mxu0 0
      %590 = vmatprep.subr.bf16.mxu0 0
      %591 = vmatpush1.bf16.msra.mxu0 0
      %592 = vmatprep.subr.bf16.mxu0 0
      %593 = vmatpush1.bf16.msra.mxu0 0
      %594 = vmatprep.subr.bf16.mxu0 0
      %595 = vmatpush1.bf16.msra.mxu0 0
      %596 = vmatprep.subr.bf16.mxu0 0
      %597 = vmatpush1.bf16.msra.mxu0 0
      %598 = vmatprep.subr.bf16.mxu0 0
      %599 = vmatpush1.bf16.msra.mxu0 0
      %600 = vmatprep.subr.bf16.mxu0 0
      %601 = vmatpush1.bf16.msra.mxu0 0
      %602 = vmatprep.subr.bf16.mxu0 0
      %603 = vmatpush1.bf16.msra.mxu0 0
      %604 = vmatprep.subr.bf16.mxu0 0
      %605 = vmatpush1.bf16.msra.mxu0 0
      %606 = vmatprep.subr.bf16.mxu0 0
      %607 = vmatpush1.bf16.msra.mxu0 0
      %608 = vmatprep.mubr.bf16.mxu0 0
      %609 = vmatmul.mubr.bf16.gmra.mrb[0].mxu0 %v571
      %v610 = vpop.f32.mrb[0].mxu0
      %v611 = vadd.f32 0.0, %v610
      %v612 = vpop.f32.mrb[0].mxu0
      %v613 = vpop.f32.mrb[0].mxu0
      %v614 = vpop.f32.mrb[0].mxu0
      %615 = vdwg.mxu0
      %616 = vrot.lane.b32.xlu0 %v276, 104
      %v617 = vpop.permute.xlu0 %616
      %618 = vrot.lane.b32.xlu0 %v278, 104
      %v619 = vpop.permute.xlu0 %618
      %v621 = vsel %vm287, %v617, 0
      %v624 = vsel %vm287, %v619, 0
      %626 = vmatprep.subr.bf16.mxu0 0
      %627 = vmatpush1.bf16.xpose.msra.mxu0 %v624
      %628 = vmatprep.subr.bf16.mxu0 0
      %629 = vmatpush1.bf16.xpose.msra.mxu0 0
      %630 = vmatprep.subr.bf16.mxu0 0
      %631 = vmatpush1.bf16.xpose.msra.mxu0 0
      %632 = vmatprep.subr.bf16.mxu0 0
      %633 = vmatpush1.bf16.xpose.msra.mxu0 0
      %634 = vmatprep.subr.bf16.mxu0 0
      %635 = vmatpush1.bf16.xpose.msra.mxu0 0
      %636 = vmatprep.subr.bf16.mxu0 0
      %637 = vmatpush1.bf16.xpose.msra.mxu0 0
      %638 = vmatprep.subr.bf16.mxu0 0
      %639 = vmatpush1.bf16.xpose.msra.mxu0 0
      %640 = vmatprep.subr.bf16.mxu0 0
      %641 = vmatpush1.bf16.xpose.msra.mxu0 0
      %642 = vmatprep.subr.bf16.mxu0 0
      %643 = vmatpush1.bf16.xpose.msra.mxu0 0
      %644 = vmatprep.subr.bf16.mxu0 0
      %645 = vmatpush1.bf16.xpose.msra.mxu0 0
      %646 = vmatprep.subr.bf16.mxu0 0
      %647 = vmatpush1.bf16.xpose.msra.mxu0 0
      %648 = vmatprep.subr.bf16.mxu0 0
      %649 = vmatpush1.bf16.xpose.msra.mxu0 0
      %650 = vmatprep.subr.bf16.mxu0 0
      %651 = vmatpush1.bf16.xpose.msra.mxu0 0
      %652 = vmatprep.subr.bf16.mxu0 0
      %653 = vmatpush1.bf16.xpose.msra.mxu0 0
      %654 = vmatprep.subr.bf16.mxu0 0
      %655 = vmatpush1.bf16.xpose.msra.mxu0 0
      %656 = vmatprep.subr.bf16.mxu0 0
      %657 = vmatpush1.bf16.xpose.msra.mxu0 0
      %658 = vmatprep.mubr.bf16.mxu0 0
      %659 = vmatmul.mubr.bf16.gmra.mrb[0].mxu0 %v621
      %v660 = vpop.f32.mrb[0].mxu0
      %v661 = vadd.f32 %v285, %v660
      %v662 = vpop.f32.mrb[0].mxu0
      %v663 = vpop.f32.mrb[0].mxu0
      %v664 = vpop.f32.mrb[0].mxu0
      %665 = vdwg.mxu0
      %v666 = vsel %vm287, %v661, -inf
      %667 = vmax.xlane.f32.xlu0 %v666
      %v668 = vpop.xlane.xlu0 %667
      %v669 = vsub.f32 %v661, %v668
      %v670 = vmul.f32 %v669, 1.442695
      %v671 = vpow.pop %v670
      %v672 = vsel %vm287, %v671, 0.0
      %673 = vadd.xlane.f32.xlu0 %v672
      %v674 = vpop.xlane.xlu0 %673
      %v675 = vrcp.pop %v674
      %v676 = vmul.f32 %v671, %v675
      %v677 = vpack.c.bf16 %v676, %v676
      %678 = vrot.lane.b32.xlu0 %v280, 104
      %v679 = vpop.permute.xlu0 %678
      %v681 = vsel %vm287, %v677, 0
      %v684 = vsel %vm349, %v679, 0
      %686 = vmatprep.subr.bf16.mxu0 0
      %687 = vmatpush1.bf16.msra.mxu0 %v684
      %688 = vmatprep.subr.bf16.mxu0 0
      %689 = vmatpush1.bf16.msra.mxu0 0
      %690 = vmatprep.subr.bf16.mxu0 0
      %691 = vmatpush1.bf16.msra.mxu0 0
      %692 = vmatprep.subr.bf16.mxu0 0
      %693 = vmatpush1.bf16.msra.mxu0 0
      %694 = vmatprep.subr.bf16.mxu0 0
      %695 = vmatpush1.bf16.msra.mxu0 0
      %696 = vmatprep.subr.bf16.mxu0 0
      %697 = vmatpush1.bf16.msra.mxu0 0
      %698 = vmatprep.subr.bf16.mxu0 0
      %699 = vmatpush1.bf16.msra.mxu0 0
      %700 = vmatprep.subr.bf16.mxu0 0
      %701 = vmatpush1.bf16.msra.mxu0 0
      %702 = vmatprep.subr.bf16.mxu0 0
      %703 = vmatpush1.bf16.msra.mxu0 0
      %704 = vmatprep.subr.bf16.mxu0 0
      %705 = vmatpush1.bf16.msra.mxu0 0
      %706 = vmatprep.subr.bf16.mxu0 0
      %707 = vmatpush1.bf16.msra.mxu0 0
      %708 = vmatprep.subr.bf16.mxu0 0
      %709 = vmatpush1.bf16.msra.mxu0 0
      %710 = vmatprep.subr.bf16.mxu0 0
      %711 = vmatpush1.bf16.msra.mxu0 0
      %712 = vmatprep.subr.bf16.mxu0 0
      %713 = vmatpush1.bf16.msra.mxu0 0
      %714 = vmatprep.subr.bf16.mxu0 0
      %715 = vmatpush1.bf16.msra.mxu0 0
      %716 = vmatprep.subr.bf16.mxu0 0
      %717 = vmatpush1.bf16.msra.mxu0 0
      %718 = vmatprep.mubr.bf16.mxu0 0
      %719 = vmatmul.mubr.bf16.gmra.mrb[0].mxu0 %v681
      %v720 = vpop.f32.mrb[0].mxu0
      %v721 = vadd.f32 0.0, %v720
      %v722 = vpop.f32.mrb[0].mxu0
      %v723 = vpop.f32.mrb[0].mxu0
      %v724 = vpop.f32.mrb[0].mxu0
      %725 = vdwg.mxu0
      %727 = vrot.lane.b32.xlu0 %v501, 8
      %v728 = vpop.permute.xlu0 %727
      %731 = vrot.lane.b32.xlu0 %v611, 16
      %v732 = vpop.permute.xlu0 %731
      %735 = vrot.lane.b32.xlu0 %v721, 24
      %v736 = vpop.permute.xlu0 %735
      %v738 = vsel %vm287, %v388, %v728
      %vm739 = vcmask 130048
      %v740 = vsel %vm739, %v738, %v732
      %vm741 = vcmask 195584
      %v742 = vsel %vm741, %v740, %v736
      %vm743 = vcmask 261120
      %744 = vst.msk [vmem:[%s271] sm:$0xff] %vm743, %v742
      %p745 = scmp.lt.s32.totalorder %s19, 1
      %s746 = scalar_select %p745, %s19, 1
      %p747 = scmp.lt.s32.totalorder %s20, 0
      %s748 = scalar_select %p747, %s20, 0
      %s749 = sadd.s32 %s748, %s746
      %s750 = smul.addr %s749, 8
      %s751 = scalar_lea.vmem %s4, %s750
      // Predicated region
      $region37: #{decoder_forward.17} parent=35 // pred_check
        %p752 = pneg %p153
      $region38: #{decoder_forward.17} parent=35 // pred_check_branch
        %754 = sbr.rel (%p752) target = $region40
      $region39: #{decoder_forward.17} parent=35 // pred_region
        _
      $region40: #{decoder_forward.17} parent=35 // pred_fallthru
        _
    $region36: #{decoder_forward.17} parent=5 // pred_fallthru
      _
    %p755 = scmp.le.s32.totalorder 2, %s10
    // Predicated region
    $region41: #{decoder_forward.17} parent=5 // pred_check
      %p756 = pneg %p755
    $region42: #{decoder_forward.17} parent=5 // pred_check_branch
      %758 = sbr.rel (%p756) target = $region44
    $region43: #{decoder_forward.17} parent=5 // pred_region
      %s759 = ssub.s32 %s10, 2
      // Predicated region
      $region45: #{decoder_forward.17} parent=43 // pred_check
        %p760 = pneg %p159
      $region46: #{decoder_forward.17} parent=43 // pred_check_branch
        %762 = sbr.rel (%p760) target = $region48
      $region47: #{decoder_forward.17} parent=43 // pred_region
        %p763 = scmp.lt.s32.totalorder %s21, 1
        %s764 = scalar_select %p763, %s21, 1
        %p765 = scmp.lt.s32.totalorder %s22, 0
        %s766 = scalar_select %p765, %s22, 0
        %s767 = sadd.s32 %s766, %s764
        %s768 = smul.addr %s767, 8
        %s769 = scalar_lea.vmem %s4, %s768
      $region48: #{decoder_forward.17} parent=43 // pred_fallthru
        _
    $region44: #{decoder_forward.17} parent=5 // pred_fallthru
      _
  $region6: #{decoder_forward.17} parent=0 // loop_footer
    %s14 = sadd.s32 1, %s10
  $region7: #{decoder_forward.17} parent=0 // loop_footer_branch
    %9 = sbr.rel target = $region3
  $region8: #{decoder_forward.17} parent=0 // loop_exit
    _

// kernel: decoder_forward.18
$region0: #{decoder_forward.18}
  #allocation0 [shape = 'u32[]', space=smem, size = 0x4, offset = 0x4, fixed_abs, tag = 'smem constant byte address 0x4 - core index']
  #allocation1 [shape = 'u32[144,128]{1,0:T(1,128)}', space=vmem, size = 0x12000, scoped, tag = 'internal scratch']
  %s0 = inlined_call_operand.vmem [shape: f32[16,32], index: 0, kind: input, shape index: {}]
  %s1 = inlined_call_operand.vmem [shape: bf16[32,32], index: 1, kind: input, shape index: {}]
  %s2 = inlined_call_operand.vmem [shape: f32[1,32], index: 2, kind: input, shape index: {}]
  %s3 = inlined_call_operand.vmem [shape: f32[16,32], index: 3, kind: input, shape index: {}]
  %s4 = inlined_call_operand.vmem [shape: f32[16,32], index: 4, kind: output, shape index: {}]
  %s5 = sld [smem:[#allocation0]]
  $region26: #{decoder_forward.18} parent=0
    _
  %s7 = ssub.s32 1, %s5
  %s8 = scalar_select 0, %s7, %s5
  // Predicated region
  $region2: #{decoder_forward.18} parent=0 // pred_check
    _
  $region3: #{decoder_forward.18} parent=0 // pred_check_branch
    %10 = sbr.rel (0) target = $region5
  $region4: #{decoder_forward.18} parent=0 // pred_region
    _
  $region5: #{decoder_forward.18} parent=0 // pred_fallthru
    _
  // Predicated region
  $region6: #{decoder_forward.18} parent=0 // pred_check
    _
  $region7: #{decoder_forward.18} parent=0 // pred_check_branch
    %12 = sbr.rel (0) target = $region9
  $region8: #{decoder_forward.18} parent=0 // pred_region
    _
  $region9: #{decoder_forward.18} parent=0 // pred_fallthru
    _
  // Predicated region
  $region10: #{decoder_forward.18} parent=0 // pred_check
    _
  $region11: #{decoder_forward.18} parent=0 // pred_check_branch
    %14 = sbr.rel (0) target = $region13
  $region12: #{decoder_forward.18} parent=0 // pred_region
    _
  $region13: #{decoder_forward.18} parent=0 // pred_fallthru
    _
  // Predicated region
  $region14: #{decoder_forward.18} parent=0 // pred_check
    _
  $region15: #{decoder_forward.18} parent=0 // pred_check_branch
    %16 = sbr.rel (0) target = $region17
  $region16: #{decoder_forward.18} parent=0 // pred_region
    _
  $region17: #{decoder_forward.18} parent=0 // pred_fallthru
    _
  %v18 = vld [vmem:[%s0] sm:$0xff]
  %v19 = vld [vmem:[%s0 + $0x8] sm:$0xff]
  %v20 = vpack.c.bf16 %v19, %v18
  %v21 = vld [vmem:[%s3] sm:$0xff]
  %v22 = vld [vmem:[%s3 + $0x8] sm:$0xff]
  %v23 = vld [vmem:[%s1] sm:$0xf]
  %v24 = vld [vmem:[%s1 + $0x4] sm:$0xf]
  %v25 = vld [vmem:[%s1 + $0x8] sm:$0xf]
  %v26 = vld [vmem:[%s1 + $0xc] sm:$0xf]
  %v31 = vunpack.c.l.b16 %v23
  %v32 = vunpack.c.l.b16 %v24
  %v33 = vunpack.c.l.b16 %v25
  %v34 = vunpack.c.l.b16 %v26
  %v35 = vpack.c.b16 %v32, %v31
  %v36 = vpack.c.b16 %v34, %v33
  %vm39 = vcmask 261120
  %v41 = vsel %vm39, %v20, 0
  %43 = vmatprep.subr.bf16.mxu0 0
  %44 = vmatpush1.bf16.msra.mxu0 %v35
  %45 = vmatprep.subr.bf16.mxu0 0
  %46 = vmatpush1.bf16.msra.mxu0 %v36
  %47 = vmatprep.subr.bf16.mxu0 0
  %48 = vmatpush1.bf16.msra.mxu0 0
  %49 = vmatprep.subr.bf16.mxu0 0
  %50 = vmatpush1.bf16.msra.mxu0 0
  %51 = vmatprep.subr.bf16.mxu0 0
  %52 = vmatpush1.bf16.msra.mxu0 0
  %53 = vmatprep.subr.bf16.mxu0 0
  %54 = vmatpush1.bf16.msra.mxu0 0
  %55 = vmatprep.subr.bf16.mxu0 0
  %56 = vmatpush1.bf16.msra.mxu0 0
  %57 = vmatprep.subr.bf16.mxu0 0
  %58 = vmatpush1.bf16.msra.mxu0 0
  %59 = vmatprep.subr.bf16.mxu0 0
  %60 = vmatpush1.bf16.msra.mxu0 0
  %61 = vmatprep.subr.bf16.mxu0 0
  %62 = vmatpush1.bf16.msra.mxu0 0
  %63 = vmatprep.subr.bf16.mxu0 0
  %64 = vmatpush1.bf16.msra.mxu0 0
  %65 = vmatprep.subr.bf16.mxu0 0
  %66 = vmatpush1.bf16.msra.mxu0 0
  %67 = vmatprep.subr.bf16.mxu0 0
  %68 = vmatpush1.bf16.msra.mxu0 0
  %69 = vmatprep.subr.bf16.mxu0 0
  %70 = vmatpush1.bf16.msra.mxu0 0
  %71 = vmatprep.subr.bf16.mxu0 0
  %72 = vmatpush1.bf16.msra.mxu0 0
  %73 = vmatprep.subr.bf16.mxu0 0
  %74 = vmatpush1.bf16.msra.mxu0 0
  %75 = vmatprep.mubr.bf16.mxu0 0
  %76 = vmatmul.mubr.bf16.gmra.mrb[0].mxu0 %v41
  %v77 = vpop.f32.mrb[0].mxu0
  %v78 = vadd.f32 0.0, %v77
  %v79 = vpop.f32.mrb[0].mxu0
  %v80 = vpop.f32.mrb[0].mxu0
  %v81 = vadd.f32 0.0, %v80
  %v82 = vpop.f32.mrb[0].mxu0
  %83 = vdwg.mxu0
  %v84 = vadd.f32 %v21, %v78
  %v85 = vadd.f32 %v22, %v81
  %v86 = vld [vmem:[%s2] sm:$0x1]
  %v88 = vlaneseq
  %v89 = vshrl.u32 %v88, 7
  %v90 = vsub.s32 0, %v89
  %v91 = vrot.slane %v86, %v90
  %v93 = vadd.f32 %v84, %v91
  %v94 = vadd.f32 %v85, %v91
  %95 = vst.msk [vmem:[%s4] sm:$0xff] %vm39, %v93
  %96 = vst.msk [vmem:[%s4 + $0x8] sm:$0xff] %vm39, %v94
  // Predicated region
  $region18: #{decoder_forward.18} parent=0 // pred_check
    _
  $region19: #{decoder_forward.18} parent=0 // pred_check_branch
    %98 = sbr.rel (0) target = $region21
  $region20: #{decoder_forward.18} parent=0 // pred_region
    _
  $region21: #{decoder_forward.18} parent=0 // pred_fallthru
    _
  // Predicated region
  $region22: #{decoder_forward.18} parent=0 // pred_check
    _
  $region23: #{decoder_forward.18} parent=0 // pred_check_branch
    %100 = sbr.rel (0) target = $region25
  $region24: #{decoder_forward.18} parent=0 // pred_region
    _
  $region25: #{decoder_forward.18} parent=0 // pred_fallthru
    _

// kernel: decoder_forward.19
$region0: #{decoder_forward.19}
  #allocation0 [shape = 'u32[]', space=smem, size = 0x4, offset = 0x4, fixed_abs, tag = 'smem constant byte address 0x4 - core index']
  #allocation1 [shape = 'u32[144,128]{1,0:T(1,128)}', space=vmem, size = 0x12000, scoped, tag = 'internal scratch']
  #allocation2 [shape = 'bf16[16,32]{1,0:T(16,128)(2,1)}', space=vmem, size = 0x1000, scoped, tag = 'scratch operand']
  %s0 = inlined_call_operand.vmem [shape: f32[16,32], index: 0, kind: input, shape index: {}]
  %s1 = inlined_call_operand.vmem [shape: f32[1,32], index: 1, kind: input, shape index: {}]
  %s2 = inlined_call_operand.vmem [shape: f32[1,32], index: 2, kind: input, shape index: {}]
  %s3 = inlined_call_operand.vmem [shape: bf16[32,32], index: 3, kind: input, shape index: {}]
  %s4 = inlined_call_operand.vmem [shape: f32[1,32], index: 4, kind: input, shape index: {}]
  %s5 = inlined_call_operand.vmem [shape: f32[16,32], index: 5, kind: output, shape index: {}]
  %s6 = sld [smem:[#allocation0]]
  $region34: #{decoder_forward.19} parent=0
    _
  %s8 = ssub.s32 1, %s6
  %s9 = scalar_select 0, %s8, %s6
  // Predicated region
  $region2: #{decoder_forward.19} parent=0 // pred_check
    _
  $region3: #{decoder_forward.19} parent=0 // pred_check_branch
    %11 = sbr.rel (0) target = $region5
  $region4: #{decoder_forward.19} parent=0 // pred_region
    _
  $region5: #{decoder_forward.19} parent=0 // pred_fallthru
    _
  // Predicated region
  $region6: #{decoder_forward.19} parent=0 // pred_check
    _
  $region7: #{decoder_forward.19} parent=0 // pred_check_branch
    %13 = sbr.rel (0) target = $region9
  $region8: #{decoder_forward.19} parent=0 // pred_region
    _
  $region9: #{decoder_forward.19} parent=0 // pred_fallthru
    _
  // Predicated region
  $region10: #{decoder_forward.19} parent=0 // pred_check
    _
  $region11: #{decoder_forward.19} parent=0 // pred_check_branch
    %15 = sbr.rel (0) target = $region13
  $region12: #{decoder_forward.19} parent=0 // pred_region
    _
  $region13: #{decoder_forward.19} parent=0 // pred_fallthru
    _
  // Predicated region
  $region14: #{decoder_forward.19} parent=0 // pred_check
    _
  $region15: #{decoder_forward.19} parent=0 // pred_check_branch
    %17 = sbr.rel (0) target = $region17
  $region16: #{decoder_forward.19} parent=0 // pred_region
    _
  $region17: #{decoder_forward.19} parent=0 // pred_fallthru
    _
  // Predicated region
  $region18: #{decoder_forward.19} parent=0 // pred_check
    _
  $region19: #{decoder_forward.19} parent=0 // pred_check_branch
    %19 = sbr.rel (0) target = $region21
  $region20: #{decoder_forward.19} parent=0 // pred_region
    _
  $region21: #{decoder_forward.19} parent=0 // pred_fallthru
    _
  %p21 = scmp.eq.s32.totalorder 0, 0
  // Predicated region
  $region22: #{decoder_forward.19} parent=0 // pred_check
    %p22 = pneg %p21
  $region23: #{decoder_forward.19} parent=0 // pred_check_branch
    %24 = sbr.rel (%p22) target = $region25
  $region24: #{decoder_forward.19} parent=0 // pred_region
    %v25 = vld [vmem:[%s0] sm:$0xff]
    %v26 = vld [vmem:[%s0 + $0x8] sm:$0xff]
    %vm27 = vcmask 261120
    %v28 = vsel %vm27, %v25, 0.0
    %29 = vadd.xlane.f32.xlu0 %v28
    %v30 = vpop.xlane.xlu0 %29
    %v31 = vsel %vm27, %v26, 0.0
    %32 = vadd.xlane.f32.xlu0 %v31
    %v33 = vpop.xlane.xlu0 %32
    %v34 = vrcp.pop 32.0
    %v35 = vmul.f32 %v30, %v34
    %v36 = vmul.f32 %v33, %v34
    %v37 = vsub.f32 %v25, %v35
    %v38 = vsub.f32 %v26, %v36
    %v39 = vmul.f32 %v37, %v37
    %v40 = vmul.f32 %v38, %v38
    %v41 = vsel %vm27, %v39, 0.0
    %42 = vadd.xlane.f32.xlu0 %v41
    %v43 = vpop.xlane.xlu0 %42
    %v44 = vsel %vm27, %v40, 0.0
    %45 = vadd.xlane.f32.xlu0 %v44
    %v46 = vpop.xlane.xlu0 %45
    %v47 = vmul.f32 %v43, %v34
    %v48 = vmul.f32 %v46, %v34
    %v49 = vadd.f32 %v47, 1e-05
    %v50 = vadd.f32 %v48, 1e-05
    %v51 = vrsqrt.pop %v49
    %v52 = vrsqrt.pop %v50
    %v53 = vmul.f32 %v37, %v51
    %v54 = vmul.f32 %v38, %v52
    %v55 = vld [vmem:[%s1] sm:$0x1]
    %v57 = vlaneseq
    %v58 = vshrl.u32 %v57, 7
    %v59 = vsub.s32 0, %v58
    %v60 = vrot.slane %v55, %v59
    %v62 = vmul.f32 %v53, %v60
    %v63 = vmul.f32 %v54, %v60
    %v64 = vld [vmem:[%s2] sm:$0x1]
    %v66 = vlaneseq
    %v67 = vshrl.u32 %v66, 7
    %v68 = vsub.s32 0, %v67
    %v69 = vrot.slane %v64, %v68
    %v71 = vadd.f32 %v62, %v69
    %v72 = vadd.f32 %v63, %v69
    %v73 = vpack.c.bf16 %v72, %v71
    %74 = vst.msk [vmem:[#allocation2] sm:$0xff] %vm27, %v73
  $region25: #{decoder_forward.19} parent=0 // pred_fallthru
    _
  %v75 = vld [vmem:[#allocation2] sm:$0xff]
  %v76 = vld [vmem:[%s3] sm:$0xf]
  %v77 = vld [vmem:[%s3 + $0x4] sm:$0xf]
  %v78 = vld [vmem:[%s3 + $0x8] sm:$0xf]
  %v79 = vld [vmem:[%s3 + $0xc] sm:$0xf]
  %v80 = vld [vmem:[%s4] sm:$0x1]
  %v82 = vlaneseq
  %v83 = vshrl.u32 %v82, 7
  %v84 = vsub.s32 0, %v83
  %v85 = vrot.slane %v80, %v84
  %v91 = vunpack.c.l.b16 %v76
  %v92 = vunpack.c.l.b16 %v77
  %v93 = vunpack.c.l.b16 %v78
  %v94 = vunpack.c.l.b16 %v79
  %v95 = vpack.c.b16 %v92, %v91
  %v96 = vpack.c.b16 %v94, %v93
  %vm99 = vcmask 261120
  %v101 = vsel %vm99, %v75, 0
  %103 = vmatprep.subr.bf16.mxu0 0
  %104 = vmatpush1.bf16.msra.mxu0 %v95
  %105 = vmatprep.subr.bf16.mxu0 0
  %106 = vmatpush1.bf16.msra.mxu0 %v96
  %107 = vmatprep.subr.bf16.mxu0 0
  %108 = vmatpush1.bf16.msra.mxu0 0
  %109 = vmatprep.subr.bf16.mxu0 0
  %110 = vmatpush1.bf16.msra.mxu0 0
  %111 = vmatprep.subr.bf16.mxu0 0
  %112 = vmatpush1.bf16.msra.mxu0 0
  %113 = vmatprep.subr.bf16.mxu0 0
  %114 = vmatpush1.bf16.msra.mxu0 0
  %115 = vmatprep.subr.bf16.mxu0 0
  %116 = vmatpush1.bf16.msra.mxu0 0
  %117 = vmatprep.subr.bf16.mxu0 0
  %118 = vmatpush1.bf16.msra.mxu0 0
  %119 = vmatprep.subr.bf16.mxu0 0
  %120 = vmatpush1.bf16.msra.mxu0 0
  %121 = vmatprep.subr.bf16.mxu0 0
  %122 = vmatpush1.bf16.msra.mxu0 0
  %123 = vmatprep.subr.bf16.mxu0 0
  %124 = vmatpush1.bf16.msra.mxu0 0
  %125 = vmatprep.subr.bf16.mxu0 0
  %126 = vmatpush1.bf16.msra.mxu0 0
  %127 = vmatprep.subr.bf16.mxu0 0
  %128 = vmatpush1.bf16.msra.mxu0 0
  %129 = vmatprep.subr.bf16.mxu0 0
  %130 = vmatpush1.bf16.msra.mxu0 0
  %131 = vmatprep.subr.bf16.mxu0 0
  %132 = vmatpush1.bf16.msra.mxu0 0
  %133 = vmatprep.subr.bf16.mxu0 0
  %134 = vmatpush1.bf16.msra.mxu0 0
  %135 = vmatprep.mubr.bf16.mxu0 0
  %136 = vmatmul.mubr.bf16.gmra.mrb[0].mxu0 %v101
  %v137 = vpop.f32.mrb[0].mxu0
  %v138 = vadd.f32 %v85, %v137
  %v139 = vpop.f32.mrb[0].mxu0
  %v140 = vpop.f32.mrb[0].mxu0
  %v141 = vadd.f32 %v85, %v140
  %v142 = vpop.f32.mrb[0].mxu0
  %143 = vdwg.mxu0
  %144 = vst.msk [vmem:[%s5] sm:$0xff] %vm99, %v138
  %145 = vst.msk [vmem:[%s5 + $0x8] sm:$0xff] %vm99, %v141
  // Predicated region
  $region26: #{decoder_forward.19} parent=0 // pred_check
    _
  $region27: #{decoder_forward.19} parent=0 // pred_check_branch
    %147 = sbr.rel (0) target = $region29
  $region28: #{decoder_forward.19} parent=0 // pred_region
    _
  $region29: #{decoder_forward.19} parent=0 // pred_fallthru
    _
  // Predicated region
  $region30: #{decoder_forward.19} parent=0 // pred_check
    _
  $region31: #{decoder_forward.19} parent=0 // pred_check_branch
    %149 = sbr.rel (0) target = $region33
  $region32: #{decoder_forward.19} parent=0 // pred_region
    _
  $region33: #{decoder_forward.19} parent=0 // pred_fallthru
    _

// kernel: decoder_forward.20
$region0: #{decoder_forward.20}
  #allocation0 [shape = 'u32[]', space=smem, size = 0x4, offset = 0x4, fixed_abs, tag = 'smem constant byte address 0x4 - core index']
  #allocation1 [shape = 'u32[144,128]{1,0:T(1,128)}', space=vmem, size = 0x12000, scoped, tag = 'internal scratch']
  %s0 = inlined_call_operand.vmem [shape: f32[32,32], index: 0, kind: input, shape index: {}]
  %s1 = inlined_call_operand.vmem [shape: bf16[32,64], index: 1, kind: input, shape index: {}]
  %s2 = inlined_call_operand.vmem [shape: f32[1,64], index: 2, kind: input, shape index: {}]
  %s3 = inlined_call_operand.vmem [shape: f32[32,64], index: 3, kind: output, shape index: {}]
  %s4 = sld [smem:[#allocation0]]
  $region22: #{decoder_forward.20} parent=0
    _
  %s6 = ssub.s32 1, %s4
  %s7 = scalar_select 0, %s6, %s4
  // Predicated region
  $region2: #{decoder_forward.20} parent=0 // pred_check
    _
  $region3: #{decoder_forward.20} parent=0 // pred_check_branch
    %9 = sbr.rel (0) target = $region5
  $region4: #{decoder_forward.20} parent=0 // pred_region
    _
  $region5: #{decoder_forward.20} parent=0 // pred_fallthru
    _
  // Predicated region
  $region6: #{decoder_forward.20} parent=0 // pred_check
    _
  $region7: #{decoder_forward.20} parent=0 // pred_check_branch
    %11 = sbr.rel (0) target = $region9
  $region8: #{decoder_forward.20} parent=0 // pred_region
    _
  $region9: #{decoder_forward.20} parent=0 // pred_fallthru
    _
  // Predicated region
  $region10: #{decoder_forward.20} parent=0 // pred_check
    _
  $region11: #{decoder_forward.20} parent=0 // pred_check_branch
    %13 = sbr.rel (0) target = $region13
  $region12: #{decoder_forward.20} parent=0 // pred_region
    _
  $region13: #{decoder_forward.20} parent=0 // pred_fallthru
    _
  %v15 = vld [vmem:[%s0] sm:$0xff]
  %v16 = vld [vmem:[%s0 + $0x8] sm:$0xff]
  %v17 = vld [vmem:[%s0 + $0x10] sm:$0xff]
  %v18 = vld [vmem:[%s0 + $0x18] sm:$0xff]
  %v19 = vpack.c.bf16 %v16, %v15
  %v20 = vpack.c.bf16 %v18, %v17
  %v21 = vld [vmem:[%s1] sm:$0xf]
  %v22 = vld [vmem:[%s1 + $0x4] sm:$0xf]
  %v23 = vld [vmem:[%s1 + $0x8] sm:$0xf]
  %v24 = vld [vmem:[%s1 + $0xc] sm:$0xf]
  %v25 = vld [vmem:[%s2] sm:$0x1]
  %v27 = vlaneseq
  %v28 = vshrl.u32 %v27, 7
  %v29 = vsub.s32 0, %v28
  %v30 = vrot.slane %v25, %v29
  %v36 = vunpack.c.l.b16 %v21
  %v37 = vunpack.c.l.b16 %v22
  %v38 = vunpack.c.l.b16 %v23
  %v39 = vunpack.c.l.b16 %v24
  %v40 = vpack.c.b16 %v37, %v36
  %v41 = vpack.c.b16 %v39, %v38
  %vm44 = vcmask 261120
  %v46 = vsel %vm44, %v19, 0
  %v49 = vsel %vm44, %v20, 0
  %51 = vmatprep.subr.bf16.mxu0 0
  %52 = vmatpush1.bf16.msra.mxu0 %v40
  %53 = vmatprep.subr.bf16.mxu0 0
  %54 = vmatpush1.bf16.msra.mxu0 %v41
  %55 = vmatprep.subr.bf16.mxu0 0
  %56 = vmatpush1.bf16.msra.mxu0 0
  %57 = vmatprep.subr.bf16.mxu0 0
  %58 = vmatpush1.bf16.msra.mxu0 0
  %59 = vmatprep.subr.bf16.mxu0 0
  %60 = vmatpush1.bf16.msra.mxu0 0
  %61 = vmatprep.subr.bf16.mxu0 0
  %62 = vmatpush1.bf16.msra.mxu0 0
  %63 = vmatprep.subr.bf16.mxu0 0
  %64 = vmatpush1.bf16.msra.mxu0 0
  %65 = vmatprep.subr.bf16.mxu0 0
  %66 = vmatpush1.bf16.msra.mxu0 0
  %67 = vmatprep.subr.bf16.mxu0 0
  %68 = vmatpush1.bf16.msra.mxu0 0
  %69 = vmatprep.subr.bf16.mxu0 0
  %70 = vmatpush1.bf16.msra.mxu0 0
  %71 = vmatprep.subr.bf16.mxu0 0
  %72 = vmatpush1.bf16.msra.mxu0 0
  %73 = vmatprep.subr.bf16.mxu0 0
  %74 = vmatpush1.bf16.msra.mxu0 0
  %75 = vmatprep.subr.bf16.mxu0 0
  %76 = vmatpush1.bf16.msra.mxu0 0
  %77 = vmatprep.subr.bf16.mxu0 0
  %78 = vmatpush1.bf16.msra.mxu0 0
  %79 = vmatprep.subr.bf16.mxu0 0
  %80 = vmatpush1.bf16.msra.mxu0 0
  %81 = vmatprep.subr.bf16.mxu0 0
  %82 = vmatpush1.bf16.msra.mxu0 0
  %83 = vmatprep.mubr.bf16.mxu0 0
  %84 = vmatmul.mubr.bf16.gmra.mrb[0].mxu0 %v46
  %v85 = vpop.f32.mrb[0].mxu0
  %v86 = vadd.f32 %v30, %v85
  %v87 = vpop.f32.mrb[0].mxu0
  %v88 = vpop.f32.mrb[0].mxu0
  %v89 = vadd.f32 %v30, %v88
  %v90 = vpop.f32.mrb[0].mxu0
  %91 = vmatprep.mubr.bf16.mxu0 0
  %92 = vmatmul.mubr.bf16.gmra.mrb[0].mxu0 %v49
  %v93 = vpop.f32.mrb[0].mxu0
  %v94 = vadd.f32 %v30, %v93
  %v95 = vpop.f32.mrb[0].mxu0
  %v96 = vpop.f32.mrb[0].mxu0
  %v97 = vadd.f32 %v30, %v96
  %v98 = vpop.f32.mrb[0].mxu0
  %99 = vdwg.mxu0
  %vm100 = vcmask 523264
  %101 = vst.msk [vmem:[%s3] sm:$0xff] %vm100, %v86
  %102 = vst.msk [vmem:[%s3 + $0x8] sm:$0xff] %vm100, %v89
  %103 = vst.msk [vmem:[%s3 + $0x10] sm:$0xff] %vm100, %v94
  %104 = vst.msk [vmem:[%s3 + $0x18] sm:$0xff] %vm100, %v97
  // Predicated region
  $region14: #{decoder_forward.20} parent=0 // pred_check
    _
  $region15: #{decoder_forward.20} parent=0 // pred_check_branch
    %106 = sbr.rel (0) target = $region17
  $region16: #{decoder_forward.20} parent=0 // pred_region
    _
  $region17: #{decoder_forward.20} parent=0 // pred_fallthru
    _
  // Predicated region
  $region18: #{decoder_forward.20} parent=0 // pred_check
    _
  $region19: #{decoder_forward.20} parent=0 // pred_check_branch
    %108 = sbr.rel (0) target = $region21
  $region20: #{decoder_forward.20} parent=0 // pred_region
    _
  $region21: #{decoder_forward.20} parent=0 // pred_fallthru
    _

// kernel: decoder_forward.21
$region0: #{decoder_forward.21}
  #allocation0 [shape = 'u32[]', space=smem, size = 0x4, offset = 0x4, fixed_abs, tag = 'smem constant byte address 0x4 - core index']
  #allocation1 [shape = 'u32[144,128]{1,0:T(1,128)}', space=vmem, size = 0x12000, scoped, tag = 'internal scratch']
  %s0 = inlined_call_operand.vmem [shape: f32[2,8,32], index: 0, kind: input, shape index: {}]
  %s1 = inlined_call_operand.vmem [shape: f32[2,16,32], index: 1, kind: input, shape index: {}]
  %s2 = inlined_call_operand.vmem [shape: f32[2,16,32], index: 2, kind: input, shape index: {}]
  %s3 = inlined_call_operand.vmem [shape: f32[2,1,16], index: 3, kind: input, shape index: {}]
  %s4 = inlined_call_operand.vmem [shape: f32[2,8,32], index: 4, kind: output, shape index: {}]
  %s5 = sld [smem:[#allocation0]]
  $region49: #{decoder_forward.21} parent=0
    _
  %s7 = ssub.s32 1, %s5
  %s8 = scalar_select 0, %s7, %s5
  loop: start=0, step=1, limit=4
  $region2: #{decoder_forward.21} parent=0 // loop_pre_header
    _
  $region3: #{decoder_forward.21} parent=0 // loop_header
    %s10 = sphi 0, %s14
    %p11 = scmp.ge.s32.totalorder %s10, 4
    %s17 = sphi 0, %s29
    %s18 = sphi 0, %s25
    %s19 = sphi 0, %s17
    %s20 = sphi 0, %s18
    %s21 = sphi 0, %s19
    %s22 = sphi 0, %s20
    %s34 = sphi 0, %s36
    %s37 = sphi 0, %s34
    %s38 = sphi 0, %s37
    %s54 = sphi 0, %s38
    %s60 = sphi 0, %s62
    %s63 = sphi 0, %s60
    %s64 = sphi 0, %s63
    %s80 = sphi 0, %s64
    %s86 = sphi 0, %s88
    %s89 = sphi 0, %s86
    %s90 = sphi 0, %s89
    %s106 = sphi 0, %s90
    %s112 = sphi 0, %s114
    %s115 = sphi 0, %s112
    %s116 = sphi 0, %s115
    %s132 = sphi 0, %s116
    %s140 = sphi 0, %s142
    %s143 = sphi 0, %s140
    %s144 = sphi 0, %s143
    %s160 = sphi 0, %s144
  $region4: #{decoder_forward.21} parent=0 // loop_header_branch
    %13 = sbr.rel (%p11) target = $region8
  $region5: #{decoder_forward.21} parent=0 // loop_body
    %s15 = ssub.s32 %s10, 1
    %s16 = ssub.s32 %s10, 2
    %s23 = sadd.s32 1, %s18
    %p24 = scmp.ge.s32.totalorder %s23, 1
    %s25 = scalar_select %p24, 0, %s23
    %s26 = sadd.s32 1, %s17
    %s27 = scalar_select %p24, %s26, %s17
    %p28 = scmp.ge.s32.totalorder %s27, 2
    %s29 = scalar_select %p28, 0, %s27
    %s30 = ssub.s32 %s17, %s29
    %s31 = ssub.s32 %s18, %s25
    %s32 = sor.u32 %s30, %s31
    %p33 = scmp.eq.s32.totalorder %s32, 0
    %s35 = sadd.s32 %s34, 1
    %s36 = scalar_select %p33, %s34, %s35
    %p39 = pneg %p33
    %p40 = scmp.eq.s32.totalorder %s10, 1
    %p41 = por %p39, %p40
    %p42 = scmp.ne.s32.totalorder %s34, %s37
    %p43 = scmp.eq.s32.totalorder %s10, 0
    %p44 = por %p42, %p43
    %p45 = scmp.ne.s32.totalorder %s34, %s37
    %p46 = scmp.eq.s32.totalorder %s15, 1
    %p47 = por %p45, %p46
    %p48 = scmp.ne.s32.totalorder %s37, %s38
    %p49 = scmp.eq.s32.totalorder %s15, 0
    %p50 = por %p48, %p49
    %p51 = scmp.ne.s32.totalorder %s37, %s38
    %p52 = scmp.eq.s32.totalorder %s16, 1
    %p53 = por %p51, %p52
    %p55 = scmp.ne.s32.totalorder %s38, %s54
    %p56 = scmp.eq.s32.totalorder %s16, 0
    %p57 = por %p55, %p56
    %s58 = ssub.s32 %s17, %s29
    %p59 = scmp.eq.s32.totalorder %s58, 0
    %s61 = sadd.s32 %s60, 1
    %s62 = scalar_select %p59, %s60, %s61
    %p65 = pneg %p59
    %p66 = scmp.eq.s32.totalorder %s10, 1
    %p67 = por %p65, %p66
    %p68 = scmp.ne.s32.totalorder %s60, %s63
    %p69 = scmp.eq.s32.totalorder %s10, 0
    %p70 = por %p68, %p69
    %p71 = scmp.ne.s32.totalorder %s60, %s63
    %p72 = scmp.eq.s32.totalorder %s15, 1
    %p73 = por %p71, %p72
    %p74 = scmp.ne.s32.totalorder %s63, %s64
    %p75 = scmp.eq.s32.totalorder %s15, 0
    %p76 = por %p74, %p75
    %p77 = scmp.ne.s32.totalorder %s63, %s64
    %p78 = scmp.eq.s32.totalorder %s16, 1
    %p79 = por %p77, %p78
    %p81 = scmp.ne.s32.totalorder %s64, %s80
    %p82 = scmp.eq.s32.totalorder %s16, 0
    %p83 = por %p81, %p82
    %s84 = ssub.s32 %s17, %s29
    %p85 = scmp.eq.s32.totalorder %s84, 0
    %s87 = sadd.s32 %s86, 1
    %s88 = scalar_select %p85, %s86, %s87
    %p91 = pneg %p85
    %p92 = scmp.eq.s32.totalorder %s10, 1
    %p93 = por %p91, %p92
    %p94 = scmp.ne.s32.totalorder %s86, %s89
    %p95 = scmp.eq.s32.totalorder %s10, 0
    %p96 = por %p94, %p95
    %p97 = scmp.ne.s32.totalorder %s86, %s89
    %p98 = scmp.eq.s32.totalorder %s15, 1
    %p99 = por %p97, %p98
    %p100 = scmp.ne.s32.totalorder %s89, %s90
    %p101 = scmp.eq.s32.totalorder %s15, 0
    %p102 = por %p100, %p101
    %p103 = scmp.ne.s32.totalorder %s89, %s90
    %p104 = scmp.eq.s32.totalorder %s16, 1
    %p105 = por %p103, %p104
    %p107 = scmp.ne.s32.totalorder %s90, %s106
    %p108 = scmp.eq.s32.totalorder %s16, 0
    %p109 = por %p107, %p108
    %s110 = ssub.s32 %s17, %s29
    %p111 = scmp.eq.s32.totalorder %s110, 0
    %s113 = sadd.s32 %s112, 1
    %s114 = scalar_select %p111, %s112, %s113
    %p117 = pneg %p111
    %p118 = scmp.eq.s32.totalorder %s10, 1
    %p119 = por %p117, %p118
    %p120 = scmp.ne.s32.totalorder %s112, %s115
    %p121 = scmp.eq.s32.totalorder %s10, 0
    %p122 = por %p120, %p121
    %p123 = scmp.ne.s32.totalorder %s112, %s115
    %p124 = scmp.eq.s32.totalorder %s15, 1
    %p125 = por %p123, %p124
    %p126 = scmp.ne.s32.totalorder %s115, %s116
    %p127 = scmp.eq.s32.totalorder %s15, 0
    %p128 = por %p126, %p127
    %p129 = scmp.ne.s32.totalorder %s115, %s116
    %p130 = scmp.eq.s32.totalorder %s16, 1
    %p131 = por %p129, %p130
    %p133 = scmp.ne.s32.totalorder %s116, %s132
    %p134 = scmp.eq.s32.totalorder %s16, 0
    %p135 = por %p133, %p134
    %s136 = ssub.s32 %s17, %s29
    %s137 = ssub.s32 %s18, %s25
    %s138 = sor.u32 %s136, %s137
    %p139 = scmp.eq.s32.totalorder %s138, 0
    %s141 = sadd.s32 %s140, 1
    %s142 = scalar_select %p139, %s140, %s141
    %p145 = pneg %p139
    %p146 = scmp.eq.s32.totalorder %s10, 1
    %p147 = por %p145, %p146
    %p148 = scmp.ne.s32.totalorder %s140, %s143
    %p149 = scmp.eq.s32.totalorder %s10, 0
    %p150 = por %p148, %p149
    %p151 = scmp.ne.s32.totalorder %s140, %s143
    %p152 = scmp.eq.s32.totalorder %s15, 1
    %p153 = por %p151, %p152
    %p154 = scmp.ne.s32.totalorder %s143, %s144
    %p155 = scmp.eq.s32.totalorder %s15, 0
    %p156 = por %p154, %p155
    %p157 = scmp.ne.s32.totalorder %s143, %s144
    %p158 = scmp.eq.s32.totalorder %s16, 1
    %p159 = por %p157, %p158
    %p161 = scmp.ne.s32.totalorder %s144, %s160
    %p162 = scmp.eq.s32.totalorder %s16, 0
    %p163 = por %p161, %p162
    %p164 = scmp.le.s32.totalorder 1, %s10
    %p165 = scmp.lt.s32.totalorder %s10, 3
    %p166 = pnand %p164, %p165
    %p167 = pneg %p166
    // Predicated region
    $region9: #{decoder_forward.21} parent=5 // pred_check
      _
    $region10: #{decoder_forward.21} parent=5 // pred_check_branch
      %169 = sbr.rel (%p166) target = $region12
    $region11: #{decoder_forward.21} parent=5 // pred_region
      %s170 = ssub.s32 %s10, 1
    $region12: #{decoder_forward.21} parent=5 // pred_fallthru
      _
    %p171 = scmp.lt.s32.totalorder %s10, 2
    // Predicated region
    $region13: #{decoder_forward.21} parent=5 // pred_check
      %p172 = pneg %p171
    $region14: #{decoder_forward.21} parent=5 // pred_check_branch
      %174 = sbr.rel (%p172) target = $region16
    $region15: #{decoder_forward.21} parent=5 // pred_region
      // Predicated region
      $region17: #{decoder_forward.21} parent=15 // pred_check
        %p175 = pneg %p44
      $region18: #{decoder_forward.21} parent=15 // pred_check_branch
        %177 = sbr.rel (%p175) target = $region20
      $region19: #{decoder_forward.21} parent=15 // pred_region
        %p178 = scmp.lt.s32.totalorder %s17, 1
        %s179 = scalar_select %p178, %s17, 1
        %p180 = scmp.lt.s32.totalorder %s18, 0
        %s181 = scalar_select %p180, %s18, 0
        %s182 = sadd.s32 %s181, %s179
        %s183 = smul.addr %s182, 8
        %s184 = scalar_lea.vmem %s0, %s183
      $region20: #{decoder_forward.21} parent=15 // pred_fallthru
        _
      // Predicated region
      $region21: #{decoder_forward.21} parent=15 // pred_check
        %p185 = pneg %p70
      $region22: #{decoder_forward.21} parent=15 // pred_check_branch
        %187 = sbr.rel (%p185) target = $region24
      $region23: #{decoder_forward.21} parent=15 // pred_region
        %p188 = scmp.lt.s32.totalorder %s17, 1
        %s189 = scalar_select %p188, %s17, 1
        %s190 = smul.addr %s189, 2
        %s191 = smul.addr %s190, 8
        %s192 = scalar_lea.vmem %s1, %s191
      $region24: #{decoder_forward.21} parent=15 // pred_fallthru
        _
      // Predicated region
      $region25: #{decoder_forward.21} parent=15 // pred_check
        %p193 = pneg %p96
      $region26: #{decoder_forward.21} parent=15 // pred_check_branch
        %195 = sbr.rel (%p193) target = $region28
      $region27: #{decoder_forward.21} parent=15 // pred_region
        %p196 = scmp.lt.s32.totalorder %s17, 1
        %s197 = scalar_select %p196, %s17, 1
        %s198 = smul.addr %s197, 2
        %s199 = smul.addr %s198, 8
        %s200 = scalar_lea.vmem %s2, %s199
      $region28: #{decoder_forward.21} parent=15 // pred_fallthru
        _
      // Predicated region
      $region29: #{decoder_forward.21} parent=15 // pred_check
        %p201 = pneg %p122
      $region30: #{decoder_forward.21} parent=15 // pred_check_branch
        %203 = sbr.rel (%p201) target = $region32
      $region31: #{decoder_forward.21} parent=15 // pred_region
        %p204 = scmp.lt.s32.totalorder %s17, 1
        %s205 = scalar_select %p204, %s17, 1
        %s206 = scalar_lea.vmem %s3, %s205
      $region32: #{decoder_forward.21} parent=15 // pred_fallthru
        _
    $region16: #{decoder_forward.21} parent=5 // pred_fallthru
      _
    %p207 = scmp.le.s32.totalorder 1, %s10
    %p208 = scmp.lt.s32.totalorder %s10, 3
    %p209 = pnand %p207, %p208
    %p210 = pneg %p209
    // Predicated region
    $region33: #{decoder_forward.21} parent=5 // pred_check
      _
    $region34: #{decoder_forward.21} parent=5 // pred_check_branch
      %212 = sbr.rel (%p209) target = $region36
    $region35: #{decoder_forward.21} parent=5 // pred_region
      %s213 = ssub.s32 %s10, 1
      %p214 = scmp.lt.s32.totalorder %s19, 1
      %s215 = scalar_select %p214, %s19, 1
      %p216 = scmp.lt.s32.totalorder %s20, 0
      %s217 = scalar_select %p216, %s20, 0
      %s218 = sadd.s32 %s217, %s215
      %s219 = smul.addr %s218, 8
      %s220 = scalar_lea.vmem %s0, %s219
      %p221 = pneg %p50
      %p222 = pneg %p47
      %p223 = scmp.lt.s32.totalorder %s19, 1
      %s224 = scalar_select %p223, %s19, 1
      %s225 = smul.addr %s224, 2
      %s226 = smul.addr %s225, 8
      %s227 = scalar_lea.vmem %s1, %s226
      %p228 = pneg %p76
      %p229 = pneg %p73
      %p230 = scmp.lt.s32.totalorder %s19, 1
      %s231 = scalar_select %p230, %s19, 1
      %s232 = smul.addr %s231, 2
      %s233 = smul.addr %s232, 8
      %s234 = scalar_lea.vmem %s2, %s233
      %p235 = pneg %p102
      %p236 = pneg %p99
      %p237 = scmp.lt.s32.totalorder %s19, 1
      %s238 = scalar_select %p237, %s19, 1
      %s239 = scalar_lea.vmem %s3, %s238
      %p240 = pneg %p128
      %p241 = pneg %p125
      %p242 = pneg %p156
      %p243 = pneg %p153
      %p244 = scmp.lt.s32.totalorder %s19, 1
      %s245 = scalar_select %p244, %s19, 1
      %p246 = scmp.lt.s32.totalorder %s20, 0
      %s247 = scalar_select %p246, %s20, 0
      %s248 = sadd.s32 %s247, %s245
      %s249 = smul.addr %s248, 8
      %s250 = scalar_lea.vmem %s4, %s249
      %p251 = scmp.lt.s32.totalorder %s19, 1
      %s252 = scalar_select %p251, %s19, 1
      %p253 = scmp.lt.s32.totalorder %s20, 0
      %s254 = scalar_select %p253, %s20, 0
      %s255 = sadd.s32 %s254, %s252
      %s256 = smul.addr %s255, 8
      %s257 = scalar_lea.vmem %s0, %s256
      %p258 = scmp.lt.s32.totalorder %s19, 1
      %s259 = scalar_select %p258, %s19, 1
      %s260 = smul.addr %s259, 2
      %s261 = smul.addr %s260, 8
      %s262 = scalar_lea.vmem %s1, %s261
      %p263 = scmp.lt.s32.totalorder %s19, 1
      %s264 = scalar_select %p263, %s19, 1
      %s265 = smul.addr %s264, 2
      %s266 = smul.addr %s265, 8
      %s267 = scalar_lea.vmem %s2, %s266
      %p268 = scmp.lt.s32.totalorder %s19, 1
      %s269 = scalar_select %p268, %s19, 1
      %s270 = scalar_lea.vmem %s3, %s269
      %p271 = scmp.lt.s32.totalorder %s19, 1
      %s272 = scalar_select %p271, %s19, 1
      %p273 = scmp.lt.s32.totalorder %s20, 0
      %s274 = scalar_select %p273, %s20, 0
      %s275 = sadd.s32 %s274, %s272
      %s276 = smul.addr %s275, 8
      %s277 = scalar_lea.vmem %s4, %s276
      %v279 = vld [vmem:[%s270] sm:$0x1]
      %v280 = vld [vmem:[%s257] sm:$0xff]
      %v281 = vmul.f32 %v280, 0.35355338
      %v282 = vpack.c.bf16 %v281, %v281
      %v283 = vld [vmem:[%s262] sm:$0xff]
      %v284 = vld [vmem:[%s262 + $0x8] sm:$0xff]
      %v285 = vpack.c.bf16 %v284, %v283
      %v286 = vld [vmem:[%s267] sm:$0xff]
      %v287 = vld [vmem:[%s267 + $0x8] sm:$0xff]
      %v288 = vpack.c.bf16 %v287, %v286
      %v290 = vlaneseq
      %v291 = vshrl.u32 %v290, 7
      %v292 = vsub.s32 0, %v291
      %v293 = vrot.slane %v279, %v292
      %vm295 = vcmask 64512
      %v297 = vsel %vm295, %v282, 0
      %v300 = vsel %vm295, %v285, 0
      %302 = vmatprep.subr.bf16.mxu0 0
      %303 = vmatpush1.bf16.xpose.msra.mxu0 %v300
      %304 = vmatprep.subr.bf16.mxu0 0
      %305 = vmatpush1.bf16.xpose.msra.mxu0 0
      %306 = vmatprep.subr.bf16.mxu0 0
      %307 = vmatpush1.bf16.xpose.msra.mxu0 0
      %308 = vmatprep.subr.bf16.mxu0 0
      %309 = vmatpush1.bf16.xpose.msra.mxu0 0
      %310 = vmatprep.subr.bf16.mxu0 0
      %311 = vmatpush1.bf16.xpose.msra.mxu0 0
      %312 = vmatprep.subr.bf16.mxu0 0
      %313 = vmatpush1.bf16.xpose.msra.mxu0 0
      %314 = vmatprep.subr.bf16.mxu0 0
      %315 = vmatpush1.bf16.xpose.msra.mxu0 0
      %316 = vmatprep.subr.bf16.mxu0 0
      %317 = vmatpush1.bf16.xpose.msra.mxu0 0
      %318 = vmatprep.subr.bf16.mxu0 0
      %319 = vmatpush1.bf16.xpose.msra.mxu0 0
      %320 = vmatprep.subr.bf16.mxu0 0
      %321 = vmatpush1.bf16.xpose.msra.mxu0 0
      %322 = vmatprep.subr.bf16.mxu0 0
      %323 = vmatpush1.bf16.xpose.msra.mxu0 0
      %324 = vmatprep.subr.bf16.mxu0 0
      %325 = vmatpush1.bf16.xpose.msra.mxu0 0
      %326 = vmatprep.subr.bf16.mxu0 0
      %327 = vmatpush1.bf16.xpose.msra.mxu0 0
      %328 = vmatprep.subr.bf16.mxu0 0
      %329 = vmatpush1.bf16.xpose.msra.mxu0 0
      %330 = vmatprep.subr.bf16.mxu0 0
      %331 = vmatpush1.bf16.xpose.msra.mxu0 0
      %332 = vmatprep.subr.bf16.mxu0 0
      %333 = vmatpush1.bf16.xpose.msra.mxu0 0
      %334 = vmatprep.mubr.bf16.mxu0 0
      %335 = vmatmul.mubr.bf16.gmra.mrb[0].mxu0 %v297
      %v336 = vpop.f32.mrb[0].mxu0
      %v337 = vadd.f32 %v293, %v336
      %v338 = vpop.f32.mrb[0].mxu0
      %v339 = vpop.f32.mrb[0].mxu0
      %v340 = vpop.f32.mrb[0].mxu0
      %341 = vdwg.mxu0
      %vm342 = vcmask 130048
      %v343 = vsel %vm342, %v337, -inf
      %344 = vmax.xlane.f32.xlu0 %v343
      %v345 = vpop.xlane.xlu0 %344
      %v346 = vsub.f32 %v337, %v345
      %v347 = vmul.f32 %v346, 1.442695
      %v348 = vpow.pop %v347
      %v349 = vsel %vm342, %v348, 0.0
      %350 = vadd.xlane.f32.xlu0 %v349
      %v351 = vpop.xlane.xlu0 %350
      %v352 = vrcp.pop %v351
      %v353 = vmul.f32 %v348, %v352
      %v354 = vpack.c.bf16 %v353, %v353
      %v356 = vsel %vm342, %v354, 0
      %358 = vmatprep.subr.bf16.mxu0 0
      %359 = vmatpush1.bf16.msra.mxu0 %v288
      %360 = vmatprep.subr.bf16.mxu0 0
      %361 = vmatpush1.bf16.msra.mxu0 0
      %362 = vmatprep.subr.bf16.mxu0 0
      %363 = vmatpush1.bf16.msra.mxu0 0
      %364 = vmatprep.subr.bf16.mxu0 0
      %365 = vmatpush1.bf16.msra.mxu0 0
      %366 = vmatprep.subr.bf16.mxu0 0
      %367 = vmatpush1.bf16.msra.mxu0 0
      %368 = vmatprep.subr.bf16.mxu0 0
      %369 = vmatpush1.bf16.msra.mxu0 0
      %370 = vmatprep.subr.bf16.mxu0 0
      %371 = vmatpush1.bf16.msra.mxu0 0
      %372 = vmatprep.subr.bf16.mxu0 0
      %373 = vmatpush1.bf16.msra.mxu0 0
      %374 = vmatprep.subr.bf16.mxu0 0
      %375 = vmatpush1.bf16.msra.mxu0 0
      %376 = vmatprep.subr.bf16.mxu0 0
      %377 = vmatpush1.bf16.msra.mxu0 0
      %378 = vmatprep.subr.bf16.mxu0 0
      %379 = vmatpush1.bf16.msra.mxu0 0
      %380 = vmatprep.subr.bf16.mxu0 0
      %381 = vmatpush1.bf16.msra.mxu0 0
      %382 = vmatprep.subr.bf16.mxu0 0
      %383 = vmatpush1.bf16.msra.mxu0 0
      %384 = vmatprep.subr.bf16.mxu0 0
      %385 = vmatpush1.bf16.msra.mxu0 0
      %386 = vmatprep.subr.bf16.mxu0 0
      %387 = vmatpush1.bf16.msra.mxu0 0
      %388 = vmatprep.subr.bf16.mxu0 0
      %389 = vmatpush1.bf16.msra.mxu0 0
      %390 = vmatprep.mubr.bf16.mxu0 0
      %391 = vmatmul.mubr.bf16.gmra.mrb[0].mxu0 %v356
      %v392 = vpop.f32.mrb[0].mxu0
      %v393 = vadd.f32 0.0, %v392
      %v394 = vpop.f32.mrb[0].mxu0
      %v395 = vpop.f32.mrb[0].mxu0
      %v396 = vpop.f32.mrb[0].mxu0
      %397 = vdwg.mxu0
      %399 = vrot.lane.b32.xlu0 %v282, 120
      %v400 = vpop.permute.xlu0 %399
      %402 = vrot.lane.b32.xlu0 %v285, 120
      %v403 = vpop.permute.xlu0 %402
      %v405 = vsel %vm295, %v400, 0
      %v408 = vsel %vm295, %v403, 0
      %410 = vmatprep.subr.bf16.mxu0 0
      %411 = vmatpush1.bf16.xpose.msra.mxu0 %v408
      %412 = vmatprep.subr.bf16.mxu0 0
      %413 = vmatpush1.bf16.xpose.msra.mxu0 0
      %414 = vmatprep.subr.bf16.mxu0 0
      %415 = vmatpush1.bf16.xpose.msra.mxu0 0
      %416 = vmatprep.subr.bf16.mxu0 0
      %417 = vmatpush1.bf16.xpose.msra.mxu0 0
      %418 = vmatprep.subr.bf16.mxu0 0
      %419 = vmatpush1.bf16.xpose.msra.mxu0 0
      %420 = vmatprep.subr.bf16.mxu0 0
      %421 = vmatpush1.bf16.xpose.msra.mxu0 0
      %422 = vmatprep.subr.bf16.mxu0 0
      %423 = vmatpush1.bf16.xpose.msra.mxu0 0
      %424 = vmatprep.subr.bf16.mxu0 0
      %425 = vmatpush1.bf16.xpose.msra.mxu0 0
      %426 = vmatprep.subr.bf16.mxu0 0
      %427 = vmatpush1.bf16.xpose.msra.mxu0 0
      %428 = vmatprep.subr.bf16.mxu0 0
      %429 = vmatpush1.bf16.xpose.msra.mxu0 0
      %430 = vmatprep.subr.bf16.mxu0 0
      %431 = vmatpush1.bf16.xpose.msra.mxu0 0
      %432 = vmatprep.subr.bf16.mxu0 0
      %433 = vmatpush1.bf16.xpose.msra.mxu0 0
      %434 = vmatprep.subr.bf16.mxu0 0
      %435 = vmatpush1.bf16.xpose.msra.mxu0 0
      %436 = vmatprep.subr.bf16.mxu0 0
      %437 = vmatpush1.bf16.xpose.msra.mxu0 0
      %438 = vmatprep.subr.bf16.mxu0 0
      %439 = vmatpush1.bf16.xpose.msra.mxu0 0
      %440 = vmatprep.subr.bf16.mxu0 0
      %441 = vmatpush1.bf16.xpose.msra.mxu0 0
      %442 = vmatprep.mubr.bf16.mxu0 0
      %443 = vmatmul.mubr.bf16.gmra.mrb[0].mxu0 %v405
      %v444 = vpop.f32.mrb[0].mxu0
      %v445 = vadd.f32 %v293, %v444
      %v446 = vpop.f32.mrb[0].mxu0
      %v447 = vpop.f32.mrb[0].mxu0
      %v448 = vpop.f32.mrb[0].mxu0
      %449 = vdwg.mxu0
      %v450 = vsel %vm342, %v445, -inf
      %451 = vmax.xlane.f32.xlu0 %v450
      %v452 = vpop.xlane.xlu0 %451
      %v453 = vsub.f32 %v445, %v452
      %v454 = vmul.f32 %v453, 1.442695
      %v455 = vpow.pop %v454
      %v456 = vsel %vm342, %v455, 0.0
      %457 = vadd.xlane.f32.xlu0 %v456
      %v458 = vpop.xlane.xlu0 %457
      %v459 = vrcp.pop %v458
      %v460 = vmul.f32 %v455, %v459
      %v461 = vpack.c.bf16 %v460, %v460
      %463 = vrot.lane.b32.xlu0 %v288, 120
      %v464 = vpop.permute.xlu0 %463
      %v467 = vsel %vm342, %v461, 0
      %469 = vmatprep.subr.bf16.mxu0 0
      %470 = vmatpush1.bf16.msra.mxu0 %v464
      %471 = vmatprep.subr.bf16.mxu0 0
      %472 = vmatpush1.bf16.msra.mxu0 0
      %473 = vmatprep.subr.bf16.mxu0 0
      %474 = vmatpush1.bf16.msra.mxu0 0
      %475 = vmatprep.subr.bf16.mxu0 0
      %476 = vmatpush1.bf16.msra.mxu0 0
      %477 = vmatprep.subr.bf16.mxu0 0
      %478 = vmatpush1.bf16.msra.mxu0 0
      %479 = vmatprep.subr.bf16.mxu0 0
      %480 = vmatpush1.bf16.msra.mxu0 0
      %481 = vmatprep.subr.bf16.mxu0 0
      %482 = vmatpush1.bf16.msra.mxu0 0
      %483 = vmatprep.subr.bf16.mxu0 0
      %484 = vmatpush1.bf16.msra.mxu0 0
      %485 = vmatprep.subr.bf16.mxu0 0
      %486 = vmatpush1.bf16.msra.mxu0 0
      %487 = vmatprep.subr.bf16.mxu0 0
      %488 = vmatpush1.bf16.msra.mxu0 0
      %489 = vmatprep.subr.bf16.mxu0 0
      %490 = vmatpush1.bf16.msra.mxu0 0
      %491 = vmatprep.subr.bf16.mxu0 0
      %492 = vmatpush1.bf16.msra.mxu0 0
      %493 = vmatprep.subr.bf16.mxu0 0
      %494 = vmatpush1.bf16.msra.mxu0 0
      %495 = vmatprep.subr.bf16.mxu0 0
      %496 = vmatpush1.bf16.msra.mxu0 0
      %497 = vmatprep.subr.bf16.mxu0 0
      %498 = vmatpush1.bf16.msra.mxu0 0
      %499 = vmatprep.subr.bf16.mxu0 0
      %500 = vmatpush1.bf16.msra.mxu0 0
      %501 = vmatprep.mubr.bf16.mxu0 0
      %502 = vmatmul.mubr.bf16.gmra.mrb[0].mxu0 %v467
      %v503 = vpop.f32.mrb[0].mxu0
      %v504 = vadd.f32 0.0, %v503
      %v505 = vpop.f32.mrb[0].mxu0
      %v506 = vpop.f32.mrb[0].mxu0
      %v507 = vpop.f32.mrb[0].mxu0
      %508 = vdwg.mxu0
      %509 = vrot.lane.b32.xlu0 %v282, 112
      %v510 = vpop.permute.xlu0 %509
      %511 = vrot.lane.b32.xlu0 %v285, 112
      %v512 = vpop.permute.xlu0 %511
      %v514 = vsel %vm295, %v510, 0
      %v517 = vsel %vm295, %v512, 0
      %519 = vmatprep.subr.bf16.mxu0 0
      %520 = vmatpush1.bf16.xpose.msra.mxu0 %v517
      %521 = vmatprep.subr.bf16.mxu0 0
      %522 = vmatpush1.bf16.xpose.msra.mxu0 0
      %523 = vmatprep.subr.bf16.mxu0 0
      %524 = vmatpush1.bf16.xpose.msra.mxu0 0
      %525 = vmatprep.subr.bf16.mxu0 0
      %526 = vmatpush1.bf16.xpose.msra.mxu0 0
      %527 = vmatprep.subr.bf16.mxu0 0
      %528 = vmatpush1.bf16.xpose.msra.mxu0 0
      %529 = vmatprep.subr.bf16.mxu0 0
      %530 = vmatpush1.bf16.xpose.msra.mxu0 0
      %531 = vmatprep.subr.bf16.mxu0 0
      %532 = vmatpush1.bf16.xpose.msra.mxu0 0
      %533 = vmatprep.subr.bf16.mxu0 0
      %534 = vmatpush1.bf16.xpose.msra.mxu0 0
      %535 = vmatprep.subr.bf16.mxu0 0
      %536 = vmatpush1.bf16.xpose.msra.mxu0 0
      %537 = vmatprep.subr.bf16.mxu0 0
      %538 = vmatpush1.bf16.xpose.msra.mxu0 0
      %539 = vmatprep.subr.bf16.mxu0 0
      %540 = vmatpush1.bf16.xpose.msra.mxu0 0
      %541 = vmatprep.subr.bf16.mxu0 0
      %542 = vmatpush1.bf16.xpose.msra.mxu0 0
      %543 = vmatprep.subr.bf16.mxu0 0
      %544 = vmatpush1.bf16.xpose.msra.mxu0 0
      %545 = vmatprep.subr.bf16.mxu0 0
      %546 = vmatpush1.bf16.xpose.msra.mxu0 0
      %547 = vmatprep.subr.bf16.mxu0 0
      %548 = vmatpush1.bf16.xpose.msra.mxu0 0
      %549 = vmatprep.subr.bf16.mxu0 0
      %550 = vmatpush1.bf16.xpose.msra.mxu0 0
      %551 = vmatprep.mubr.bf16.mxu0 0
      %552 = vmatmul.mubr.bf16.gmra.mrb[0].mxu0 %v514
      %v553 = vpop.f32.mrb[0].mxu0
      %v554 = vadd.f32 %v293, %v553
      %v555 = vpop.f32.mrb[0].mxu0
      %v556 = vpop.f32.mrb[0].mxu0
      %v557 = vpop.f32.mrb[0].mxu0
      %558 = vdwg.mxu0
      %v559 = vsel %vm342, %v554, -inf
      %560 = vmax.xlane.f32.xlu0 %v559
      %v561 = vpop.xlane.xlu0 %560
      %v562 = vsub.f32 %v554, %v561
      %v563 = vmul.f32 %v562, 1.442695
      %v564 = vpow.pop %v563
      %v565 = vsel %vm342, %v564, 0.0
      %566 = vadd.xlane.f32.xlu0 %v565
      %v567 = vpop.xlane.xlu0 %566
      %v568 = vrcp.pop %v567
      %v569 = vmul.f32 %v564, %v568
      %v570 = vpack.c.bf16 %v569, %v569
      %571 = vrot.lane.b32.xlu0 %v288, 112
      %v572 = vpop.permute.xlu0 %571
      %v575 = vsel %vm342, %v570, 0
      %577 = vmatprep.subr.bf16.mxu0 0
      %578 = vmatpush1.bf16.msra.mxu0 %v572
      %579 = vmatprep.subr.bf16.mxu0 0
      %580 = vmatpush1.bf16.msra.mxu0 0
      %581 = vmatprep.subr.bf16.mxu0 0
      %582 = vmatpush1.bf16.msra.mxu0 0
      %583 = vmatprep.subr.bf16.mxu0 0
      %584 = vmatpush1.bf16.msra.mxu0 0
      %585 = vmatprep.subr.bf16.mxu0 0
      %586 = vmatpush1.bf16.msra.mxu0 0
      %587 = vmatprep.subr.bf16.mxu0 0
      %588 = vmatpush1.bf16.msra.mxu0 0
      %589 = vmatprep.subr.bf16.mxu0 0
      %590 = vmatpush1.bf16.msra.mxu0 0
      %591 = vmatprep.subr.bf16.mxu0 0
      %592 = vmatpush1.bf16.msra.mxu0 0
      %593 = vmatprep.subr.bf16.mxu0 0
      %594 = vmatpush1.bf16.msra.mxu0 0
      %595 = vmatprep.subr.bf16.mxu0 0
      %596 = vmatpush1.bf16.msra.mxu0 0
      %597 = vmatprep.subr.bf16.mxu0 0
      %598 = vmatpush1.bf16.msra.mxu0 0
      %599 = vmatprep.subr.bf16.mxu0 0
      %600 = vmatpush1.bf16.msra.mxu0 0
      %601 = vmatprep.subr.bf16.mxu0 0
      %602 = vmatpush1.bf16.msra.mxu0 0
      %603 = vmatprep.subr.bf16.mxu0 0
      %604 = vmatpush1.bf16.msra.mxu0 0
      %605 = vmatprep.subr.bf16.mxu0 0
      %606 = vmatpush1.bf16.msra.mxu0 0
      %607 = vmatprep.subr.bf16.mxu0 0
      %608 = vmatpush1.bf16.msra.mxu0 0
      %609 = vmatprep.mubr.bf16.mxu0 0
      %610 = vmatmul.mubr.bf16.gmra.mrb[0].mxu0 %v575
      %v611 = vpop.f32.mrb[0].mxu0
      %v612 = vadd.f32 0.0, %v611
      %v613 = vpop.f32.mrb[0].mxu0
      %v614 = vpop.f32.mrb[0].mxu0
      %v615 = vpop.f32.mrb[0].mxu0
      %616 = vdwg.mxu0
      %617 = vrot.lane.b32.xlu0 %v282, 104
      %v618 = vpop.permute.xlu0 %617
      %619 = vrot.lane.b32.xlu0 %v285, 104
      %v620 = vpop.permute.xlu0 %619
      %v622 = vsel %vm295, %v618, 0
      %v625 = vsel %vm295, %v620, 0
      %627 = vmatprep.subr.bf16.mxu0 0
      %628 = vmatpush1.bf16.xpose.msra.mxu0 %v625
      %629 = vmatprep.subr.bf16.mxu0 0
      %630 = vmatpush1.bf16.xpose.msra.mxu0 0
      %631 = vmatprep.subr.bf16.mxu0 0
      %632 = vmatpush1.bf16.xpose.msra.mxu0 0
      %633 = vmatprep.subr.bf16.mxu0 0
      %634 = vmatpush1.bf16.xpose.msra.mxu0 0
      %635 = vmatprep.subr.bf16.mxu0 0
      %636 = vmatpush1.bf16.xpose.msra.mxu0 0
      %637 = vmatprep.subr.bf16.mxu0 0
      %638 = vmatpush1.bf16.xpose.msra.mxu0 0
      %639 = vmatprep.subr.bf16.mxu0 0
      %640 = vmatpush1.bf16.xpose.msra.mxu0 0
      %641 = vmatprep.subr.bf16.mxu0 0
      %642 = vmatpush1.bf16.xpose.msra.mxu0 0
      %643 = vmatprep.subr.bf16.mxu0 0
      %644 = vmatpush1.bf16.xpose.msra.mxu0 0
      %645 = vmatprep.subr.bf16.mxu0 0
      %646 = vmatpush1.bf16.xpose.msra.mxu0 0
      %647 = vmatprep.subr.bf16.mxu0 0
      %648 = vmatpush1.bf16.xpose.msra.mxu0 0
      %649 = vmatprep.subr.bf16.mxu0 0
      %650 = vmatpush1.bf16.xpose.msra.mxu0 0
      %651 = vmatprep.subr.bf16.mxu0 0
      %652 = vmatpush1.bf16.xpose.msra.mxu0 0
      %653 = vmatprep.subr.bf16.mxu0 0
      %654 = vmatpush1.bf16.xpose.msra.mxu0 0
      %655 = vmatprep.subr.bf16.mxu0 0
      %656 = vmatpush1.bf16.xpose.msra.mxu0 0
      %657 = vmatprep.subr.bf16.mxu0 0
      %658 = vmatpush1.bf16.xpose.msra.mxu0 0
      %659 = vmatprep.mubr.bf16.mxu0 0
      %660 = vmatmul.mubr.bf16.gmra.mrb[0].mxu0 %v622
      %v661 = vpop.f32.mrb[0].mxu0
      %v662 = vadd.f32 %v293, %v661
      %v663 = vpop.f32.mrb[0].mxu0
      %v664 = vpop.f32.mrb[0].mxu0
      %v665 = vpop.f32.mrb[0].mxu0
      %666 = vdwg.mxu0
      %v667 = vsel %vm342, %v662, -inf
      %668 = vmax.xlane.f32.xlu0 %v667
      %v669 = vpop.xlane.xlu0 %668
      %v670 = vsub.f32 %v662, %v669
      %v671 = vmul.f32 %v670, 1.442695
      %v672 = vpow.pop %v671
      %v673 = vsel %vm342, %v672, 0.0
      %674 = vadd.xlane.f32.xlu0 %v673
      %v675 = vpop.xlane.xlu0 %674
      %v676 = vrcp.pop %v675
      %v677 = vmul.f32 %v672, %v676
      %v678 = vpack.c.bf16 %v677, %v677
      %679 = vrot.lane.b32.xlu0 %v288, 104
      %v680 = vpop.permute.xlu0 %679
      %v683 = vsel %vm342, %v678, 0
      %685 = vmatprep.subr.bf16.mxu0 0
      %686 = vmatpush1.bf16.msra.mxu0 %v680
      %687 = vmatprep.subr.bf16.mxu0 0
      %688 = vmatpush1.bf16.msra.mxu0 0
      %689 = vmatprep.subr.bf16.mxu0 0
      %690 = vmatpush1.bf16.msra.mxu0 0
      %691 = vmatprep.subr.bf16.mxu0 0
      %692 = vmatpush1.bf16.msra.mxu0 0
      %693 = vmatprep.subr.bf16.mxu0 0
      %694 = vmatpush1.bf16.msra.mxu0 0
      %695 = vmatprep.subr.bf16.mxu0 0
      %696 = vmatpush1.bf16.msra.mxu0 0
      %697 = vmatprep.subr.bf16.mxu0 0
      %698 = vmatpush1.bf16.msra.mxu0 0
      %699 = vmatprep.subr.bf16.mxu0 0
      %700 = vmatpush1.bf16.msra.mxu0 0
      %701 = vmatprep.subr.bf16.mxu0 0
      %702 = vmatpush1.bf16.msra.mxu0 0
      %703 = vmatprep.subr.bf16.mxu0 0
      %704 = vmatpush1.bf16.msra.mxu0 0
      %705 = vmatprep.subr.bf16.mxu0 0
      %706 = vmatpush1.bf16.msra.mxu0 0
      %707 = vmatprep.subr.bf16.mxu0 0
      %708 = vmatpush1.bf16.msra.mxu0 0
      %709 = vmatprep.subr.bf16.mxu0 0
      %710 = vmatpush1.bf16.msra.mxu0 0
      %711 = vmatprep.subr.bf16.mxu0 0
      %712 = vmatpush1.bf16.msra.mxu0 0
      %713 = vmatprep.subr.bf16.mxu0 0
      %714 = vmatpush1.bf16.msra.mxu0 0
      %715 = vmatprep.subr.bf16.mxu0 0
      %716 = vmatpush1.bf16.msra.mxu0 0
      %717 = vmatprep.mubr.bf16.mxu0 0
      %718 = vmatmul.mubr.bf16.gmra.mrb[0].mxu0 %v683
      %v719 = vpop.f32.mrb[0].mxu0
      %v720 = vadd.f32 0.0, %v719
      %v721 = vpop.f32.mrb[0].mxu0
      %v722 = vpop.f32.mrb[0].mxu0
      %v723 = vpop.f32.mrb[0].mxu0
      %724 = vdwg.mxu0
      %726 = vrot.lane.b32.xlu0 %v504, 8
      %v727 = vpop.permute.xlu0 %726
      %730 = vrot.lane.b32.xlu0 %v612, 16
      %v731 = vpop.permute.xlu0 %730
      %734 = vrot.lane.b32.xlu0 %v720, 24
      %v735 = vpop.permute.xlu0 %734
      %v737 = vsel %vm295, %v393, %v727
      %v738 = vsel %vm342, %v737, %v731
      %vm739 = vcmask 195584
      %v740 = vsel %vm739, %v738, %v735
      %vm741 = vcmask 261120
      %742 = vst.msk [vmem:[%s277] sm:$0xff] %vm741, %v740
      %p743 = scmp.lt.s32.totalorder %s19, 1
      %s744 = scalar_select %p743, %s19, 1
      %p745 = scmp.lt.s32.totalorder %s20, 0
      %s746 = scalar_select %p745, %s20, 0
      %s747 = sadd.s32 %s746, %s744
      %s748 = smul.addr %s747, 8
      %s749 = scalar_lea.vmem %s4, %s748
      // Predicated region
      $region37: #{decoder_forward.21} parent=35 // pred_check
        %p750 = pneg %p153
      $region38: #{decoder_forward.21} parent=35 // pred_check_branch
        %752 = sbr.rel (%p750) target = $region40
      $region39: #{decoder_forward.21} parent=35 // pred_region
        _
      $region40: #{decoder_forward.21} parent=35 // pred_fallthru
        _
    $region36: #{decoder_forward.21} parent=5 // pred_fallthru
      _
    %p753 = scmp.le.s32.totalorder 2, %s10
    // Predicated region
    $region41: #{decoder_forward.21} parent=5 // pred_check
      %p754 = pneg %p753
    $region42: #{decoder_forward.21} parent=5 // pred_check_branch
      %756 = sbr.rel (%p754) target = $region44
    $region43: #{decoder_forward.21} parent=5 // pred_region
      %s757 = ssub.s32 %s10, 2
      // Predicated region
      $region45: #{decoder_forward.21} parent=43 // pred_check
        %p758 = pneg %p159
      $region46: #{decoder_forward.21} parent=43 // pred_check_branch
        %760 = sbr.rel (%p758) target = $region48
      $region47: #{decoder_forward.21} parent=43 // pred_region
        %p761 = scmp.lt.s32.totalorder %s21, 1
        %s762 = scalar_select %p761, %s21, 1
        %p763 = scmp.lt.s32.totalorder %s22, 0
        %s764 = scalar_select %p763, %s22, 0
        %s765 = sadd.s32 %s764, %s762
        %s766 = smul.addr %s765, 8
        %s767 = scalar_lea.vmem %s4, %s766
      $region48: #{decoder_forward.21} parent=43 // pred_fallthru
        _
    $region44: #{decoder_forward.21} parent=5 // pred_fallthru
      _
  $region6: #{decoder_forward.21} parent=0 // loop_footer
    %s14 = sadd.s32 1, %s10
  $region7: #{decoder_forward.21} parent=0 // loop_footer_branch
    %9 = sbr.rel target = $region3
  $region8: #{decoder_forward.21} parent=0 // loop_exit
    _

// kernel: decoder_forward.23
$region0: #{decoder_forward.23}
  #allocation0 [shape = 'u32[]', space=smem, size = 0x4, offset = 0x4, fixed_abs, tag = 'smem constant byte address 0x4 - core index']
  #allocation1 [shape = 'u32[144,128]{1,0:T(1,128)}', space=vmem, size = 0x12000, scoped, tag = 'internal scratch']
  #allocation2 [shape = 'bf16[16,32]{1,0:T(16,128)(2,1)}', space=vmem, size = 0x1000, scoped, tag = 'scratch operand']
  #allocation3 [shape = 'f32[16,32]{1,0:T(8,128)}', space=vmem, size = 0x2000, scoped, tag = 'scratch operand']
  %s0 = inlined_call_operand.vmem [shape: f32[16,32], index: 0, kind: input, shape index: {}]
  %s1 = inlined_call_operand.vmem [shape: f32[1,32], index: 1, kind: input, shape index: {}]
  %s2 = inlined_call_operand.vmem [shape: f32[1,32], index: 2, kind: input, shape index: {}]
  %s3 = inlined_call_operand.vmem [shape: bf16[32,128], index: 3, kind: input, shape index: {}]
  %s4 = inlined_call_operand.vmem [shape: f32[1,128], index: 4, kind: input, shape index: {}]
  %s5 = inlined_call_operand.vmem [shape: bf16[128,32], index: 5, kind: input, shape index: {}]
  %s6 = inlined_call_operand.vmem [shape: f32[1,32], index: 6, kind: input, shape index: {}]
  %s7 = inlined_call_operand.vmem [shape: f32[16,32], index: 7, kind: output, shape index: {}]
  %s8 = sld [smem:[#allocation0]]
  $region46: #{decoder_forward.23} parent=0
    _
  %s10 = ssub.s32 1, %s8
  %s11 = scalar_select 0, %s10, %s8
  // Predicated region
  $region2: #{decoder_forward.23} parent=0 // pred_check
    _
  $region3: #{decoder_forward.23} parent=0 // pred_check_branch
    %13 = sbr.rel (0) target = $region5
  $region4: #{decoder_forward.23} parent=0 // pred_region
    _
  $region5: #{decoder_forward.23} parent=0 // pred_fallthru
    _
  // Predicated region
  $region6: #{decoder_forward.23} parent=0 // pred_check
    _
  $region7: #{decoder_forward.23} parent=0 // pred_check_branch
    %15 = sbr.rel (0) target = $region9
  $region8: #{decoder_forward.23} parent=0 // pred_region
    _
  $region9: #{decoder_forward.23} parent=0 // pred_fallthru
    _
  // Predicated region
  $region10: #{decoder_forward.23} parent=0 // pred_check
    _
  $region11: #{decoder_forward.23} parent=0 // pred_check_branch
    %17 = sbr.rel (0) target = $region13
  $region12: #{decoder_forward.23} parent=0 // pred_region
    _
  $region13: #{decoder_forward.23} parent=0 // pred_fallthru
    _
  // Predicated region
  $region14: #{decoder_forward.23} parent=0 // pred_check
    _
  $region15: #{decoder_forward.23} parent=0 // pred_check_branch
    %19 = sbr.rel (0) target = $region17
  $region16: #{decoder_forward.23} parent=0 // pred_region
    _
  $region17: #{decoder_forward.23} parent=0 // pred_fallthru
    _
  // Predicated region
  $region18: #{decoder_forward.23} parent=0 // pred_check
    _
  $region19: #{decoder_forward.23} parent=0 // pred_check_branch
    %21 = sbr.rel (0) target = $region21
  $region20: #{decoder_forward.23} parent=0 // pred_region
    _
  $region21: #{decoder_forward.23} parent=0 // pred_fallthru
    _
  // Predicated region
  $region22: #{decoder_forward.23} parent=0 // pred_check
    _
  $region23: #{decoder_forward.23} parent=0 // pred_check_branch
    %23 = sbr.rel (0) target = $region25
  $region24: #{decoder_forward.23} parent=0 // pred_region
    _
  $region25: #{decoder_forward.23} parent=0 // pred_fallthru
    _
  // Predicated region
  $region26: #{decoder_forward.23} parent=0 // pred_check
    _
  $region27: #{decoder_forward.23} parent=0 // pred_check_branch
    %25 = sbr.rel (0) target = $region29
  $region28: #{decoder_forward.23} parent=0 // pred_region
    _
  $region29: #{decoder_forward.23} parent=0 // pred_fallthru
    _
  %p27 = scmp.eq.s32.totalorder 0, 0
  // Predicated region
  $region30: #{decoder_forward.23} parent=0 // pred_check
    %p28 = pneg %p27
  $region31: #{decoder_forward.23} parent=0 // pred_check_branch
    %30 = sbr.rel (%p28) target = $region33
  $region32: #{decoder_forward.23} parent=0 // pred_region
    %v31 = vld [vmem:[%s0] sm:$0xff]
    %v32 = vld [vmem:[%s0 + $0x8] sm:$0xff]
    %vm33 = vcmask 261120
    %v34 = vsel %vm33, %v31, 0.0
    %35 = vadd.xlane.f32.xlu0 %v34
    %v36 = vpop.xlane.xlu0 %35
    %v37 = vsel %vm33, %v32, 0.0
    %38 = vadd.xlane.f32.xlu0 %v37
    %v39 = vpop.xlane.xlu0 %38
    %v40 = vrcp.pop 32.0
    %v41 = vmul.f32 %v36, %v40
    %v42 = vmul.f32 %v39, %v40
    %v43 = vsub.f32 %v31, %v41
    %v44 = vsub.f32 %v32, %v42
    %v45 = vmul.f32 %v43, %v43
    %v46 = vmul.f32 %v44, %v44
    %v47 = vsel %vm33, %v45, 0.0
    %48 = vadd.xlane.f32.xlu0 %v47
    %v49 = vpop.xlane.xlu0 %48
    %v50 = vsel %vm33, %v46, 0.0
    %51 = vadd.xlane.f32.xlu0 %v50
    %v52 = vpop.xlane.xlu0 %51
    %v53 = vmul.f32 %v49, %v40
    %v54 = vmul.f32 %v52, %v40
    %v55 = vadd.f32 %v53, 1e-05
    %v56 = vadd.f32 %v54, 1e-05
    %v57 = vrsqrt.pop %v55
    %v58 = vrsqrt.pop %v56
    %v59 = vmul.f32 %v43, %v57
    %v60 = vmul.f32 %v44, %v58
    %v61 = vld [vmem:[%s1] sm:$0x1]
    %v63 = vlaneseq
    %v64 = vshrl.u32 %v63, 7
    %v65 = vsub.s32 0, %v64
    %v66 = vrot.slane %v61, %v65
    %v68 = vmul.f32 %v59, %v66
    %v69 = vmul.f32 %v60, %v66
    %v70 = vld [vmem:[%s2] sm:$0x1]
    %v72 = vlaneseq
    %v73 = vshrl.u32 %v72, 7
    %v74 = vsub.s32 0, %v73
    %v75 = vrot.slane %v70, %v74
    %v77 = vadd.f32 %v68, %v75
    %v78 = vadd.f32 %v69, %v75
    %v79 = vpack.c.bf16 %v78, %v77
    %80 = vst.msk [vmem:[#allocation2] sm:$0xff] %vm33, %v79
    %v81 = vld [vmem:[%s6] sm:$0x1]
    %v83 = vlaneseq
    %v84 = vshrl.u32 %v83, 7
    %v85 = vsub.s32 0, %v84
    %v86 = vrot.slane %v81, %v85
    %v88 = vadd.f32 %v31, %v86
    %v89 = vadd.f32 %v32, %v86
    %90 = vst.msk [vmem:[#allocation3] sm:$0xff] %vm33, %v88
    %91 = vst.msk [vmem:[#allocation3 + $0x8] sm:$0xff] %vm33, %v89
  $region33: #{decoder_forward.23} parent=0 // pred_fallthru
    _
  %v92 = vld [vmem:[#allocation2] sm:$0xff]
  %v93 = vld [vmem:[%s3] sm:$0xf]
  %v94 = vld [vmem:[%s3 + $0x4] sm:$0xf]
  %v95 = vld [vmem:[%s3 + $0x8] sm:$0xf]
  %v96 = vld [vmem:[%s3 + $0xc] sm:$0xf]
  %v97 = vld [vmem:[%s4] sm:$0x1]
  %v99 = vlaneseq
  %v100 = vshrl.u32 %v99, 7
  %v101 = vsub.s32 0, %v100
  %v102 = vrot.slane %v97, %v101
  %v108 = vunpack.c.l.b16 %v93
  %v109 = vunpack.c.l.b16 %v94
  %v110 = vunpack.c.l.b16 %v95
  %v111 = vunpack.c.l.b16 %v96
  %v112 = vpack.c.b16 %v109, %v108
  %v113 = vpack.c.b16 %v111, %v110
  %vm116 = vcmask 261120
  %v118 = vsel %vm116, %v92, 0
  %120 = vmatprep.subr.bf16.mxu0 0
  %121 = vmatpush1.bf16.msra.mxu0 %v112
  %122 = vmatprep.subr.bf16.mxu0 0
  %123 = vmatpush1.bf16.msra.mxu0 %v113
  %124 = vmatprep.subr.bf16.mxu0 0
  %125 = vmatpush1.bf16.msra.mxu0 0
  %126 = vmatprep.subr.bf16.mxu0 0
  %127 = vmatpush1.bf16.msra.mxu0 0
  %128 = vmatprep.subr.bf16.mxu0 0
  %129 = vmatpush1.bf16.msra.mxu0 0
  %130 = vmatprep.subr.bf16.mxu0 0
  %131 = vmatpush1.bf16.msra.mxu0 0
  %132 = vmatprep.subr.bf16.mxu0 0
  %133 = vmatpush1.bf16.msra.mxu0 0
  %134 = vmatprep.subr.bf16.mxu0 0
  %135 = vmatpush1.bf16.msra.mxu0 0
  %136 = vmatprep.subr.bf16.mxu0 0
  %137 = vmatpush1.bf16.msra.mxu0 0
  %138 = vmatprep.subr.bf16.mxu0 0
  %139 = vmatpush1.bf16.msra.mxu0 0
  %140 = vmatprep.subr.bf16.mxu0 0
  %141 = vmatpush1.bf16.msra.mxu0 0
  %142 = vmatprep.subr.bf16.mxu0 0
  %143 = vmatpush1.bf16.msra.mxu0 0
  %144 = vmatprep.subr.bf16.mxu0 0
  %145 = vmatpush1.bf16.msra.mxu0 0
  %146 = vmatprep.subr.bf16.mxu0 0
  %147 = vmatpush1.bf16.msra.mxu0 0
  %148 = vmatprep.subr.bf16.mxu0 0
  %149 = vmatpush1.bf16.msra.mxu0 0
  %150 = vmatprep.subr.bf16.mxu0 0
  %151 = vmatpush1.bf16.msra.mxu0 0
  %152 = vmatprep.mubr.bf16.mxu0 0
  %153 = vmatmul.mubr.bf16.gmra.mrb[0].mxu0 %v118
  %v154 = vpop.f32.mrb[0].mxu0
  %v155 = vadd.f32 %v102, %v154
  %v156 = vpop.f32.mrb[0].mxu0
  %v157 = vpop.f32.mrb[0].mxu0
  %v158 = vadd.f32 %v102, %v157
  %v159 = vpop.f32.mrb[0].mxu0
  %160 = vdwg.mxu0
  %v161 = vmax.f32 %v155, 0.0
  %v162 = vmax.f32 %v158, 0.0
  %v163 = vld [vmem:[#allocation3] sm:$0xff]
  %v164 = vld [vmem:[#allocation3 + $0x8] sm:$0xff]
  %v165 = vpack.c.bf16 %v162, %v161
  %v166 = vld [vmem:[%s5] sm:$0xf]
  %v167 = vld [vmem:[%s5 + $0x4] sm:$0xf]
  %v168 = vld [vmem:[%s5 + $0x8] sm:$0xf]
  %v169 = vld [vmem:[%s5 + $0xc] sm:$0xf]
  %v170 = vld [vmem:[%s5 + $0x10] sm:$0xf]
  %v171 = vld [vmem:[%s5 + $0x14] sm:$0xf]
  %v172 = vld [vmem:[%s5 + $0x18] sm:$0xf]
  %v173 = vld [vmem:[%s5 + $0x1c] sm:$0xf]
  %v174 = vld [vmem:[%s5 + $0x20] sm:$0xf]
  %v175 = vld [vmem:[%s5 + $0x24] sm:$0xf]
  %v176 = vld [vmem:[%s5 + $0x28] sm:$0xf]
  %v177 = vld [vmem:[%s5 + $0x2c] sm:$0xf]
  %v178 = vld [vmem:[%s5 + $0x30] sm:$0xf]
  %v179 = vld [vmem:[%s5 + $0x34] sm:$0xf]
  %v180 = vld [vmem:[%s5 + $0x38] sm:$0xf]
  %v181 = vld [vmem:[%s5 + $0x3c] sm:$0xf]
  %v198 = vunpack.c.l.b16 %v166
  %v199 = vunpack.c.l.b16 %v167
  %v200 = vunpack.c.l.b16 %v168
  %v201 = vunpack.c.l.b16 %v169
  %v202 = vunpack.c.l.b16 %v170
  %v203 = vunpack.c.l.b16 %v171
  %v204 = vunpack.c.l.b16 %v172
  %v205 = vunpack.c.l.b16 %v173
  %v206 = vunpack.c.l.b16 %v174
  %v207 = vunpack.c.l.b16 %v175
  %v208 = vunpack.c.l.b16 %v176
  %v209 = vunpack.c.l.b16 %v177
  %v210 = vunpack.c.l.b16 %v178
  %v211 = vunpack.c.l.b16 %v179
  %v212 = vunpack.c.l.b16 %v180
  %v213 = vunpack.c.l.b16 %v181
  %v214 = vpack.c.b16 %v199, %v198
  %v215 = vpack.c.b16 %v201, %v200
  %v216 = vpack.c.b16 %v203, %v202
  %v217 = vpack.c.b16 %v205, %v204
  %v218 = vpack.c.b16 %v207, %v206
  %v219 = vpack.c.b16 %v209, %v208
  %v220 = vpack.c.b16 %v211, %v210
  %v221 = vpack.c.b16 %v213, %v212
  %230 = vmatprep.subr.bf16.mxu0 0
  %231 = vmatpush1.bf16.msra.mxu0 %v214
  %232 = vmatprep.subr.bf16.mxu0 0
  %233 = vmatpush1.bf16.msra.mxu0 %v215
  %234 = vmatprep.subr.bf16.mxu0 0
  %235 = vmatpush1.bf16.msra.mxu0 %v216
  %236 = vmatprep.subr.bf16.mxu0 0
  %237 = vmatpush1.bf16.msra.mxu0 %v217
  %238 = vmatprep.subr.bf16.mxu0 0
  %239 = vmatpush1.bf16.msra.mxu0 %v218
  %240 = vmatprep.subr.bf16.mxu0 0
  %241 = vmatpush1.bf16.msra.mxu0 %v219
  %242 = vmatprep.subr.bf16.mxu0 0
  %243 = vmatpush1.bf16.msra.mxu0 %v220
  %244 = vmatprep.subr.bf16.mxu0 0
  %245 = vmatpush1.bf16.msra.mxu0 %v221
  %246 = vmatprep.subr.bf16.mxu0 0
  %247 = vmatpush1.bf16.msra.mxu0 0
  %248 = vmatprep.subr.bf16.mxu0 0
  %249 = vmatpush1.bf16.msra.mxu0 0
  %250 = vmatprep.subr.bf16.mxu0 0
  %251 = vmatpush1.bf16.msra.mxu0 0
  %252 = vmatprep.subr.bf16.mxu0 0
  %253 = vmatpush1.bf16.msra.mxu0 0
  %254 = vmatprep.subr.bf16.mxu0 0
  %255 = vmatpush1.bf16.msra.mxu0 0
  %256 = vmatprep.subr.bf16.mxu0 0
  %257 = vmatpush1.bf16.msra.mxu0 0
  %258 = vmatprep.subr.bf16.mxu0 0
  %259 = vmatpush1.bf16.msra.mxu0 0
  %260 = vmatprep.subr.bf16.mxu0 0
  %261 = vmatpush1.bf16.msra.mxu0 0
  %262 = vmatprep.mubr.bf16.mxu0 0
  %263 = vmatmul.mubr.bf16.gmra.mrb[0].mxu0 %v165
  %v264 = vpop.f32.mrb[0].mxu0
  %v265 = vadd.f32 0.0, %v264
  %v266 = vpop.f32.mrb[0].mxu0
  %v267 = vpop.f32.mrb[0].mxu0
  %v268 = vadd.f32 0.0, %v267
  %v269 = vpop.f32.mrb[0].mxu0
  %270 = vdwg.mxu0
  %v271 = vadd.f32 %v163, %v265
  %v272 = vadd.f32 %v164, %v268
  %273 = vst.msk [vmem:[#allocation3] sm:$0xff] %vm116, %v271
  %274 = vst.msk [vmem:[#allocation3 + $0x8] sm:$0xff] %vm116, %v272
  // Predicated region
  $region34: #{decoder_forward.23} parent=0 // pred_check
    %p275 = pneg %p27
  $region35: #{decoder_forward.23} parent=0 // pred_check_branch
    %277 = sbr.rel (%p275) target = $region37
  $region36: #{decoder_forward.23} parent=0 // pred_region
    %v278 = vld [vmem:[#allocation3] sm:$0xff]
    %v279 = vld [vmem:[#allocation3 + $0x8] sm:$0xff]
    %280 = vst.msk [vmem:[%s7] sm:$0xff] %vm116, %v278
    %281 = vst.msk [vmem:[%s7 + $0x8] sm:$0xff] %vm116, %v279
  $region37: #{decoder_forward.23} parent=0 // pred_fallthru
    _
  // Predicated region
  $region38: #{decoder_forward.23} parent=0 // pred_check
    _
  $region39: #{decoder_forward.23} parent=0 // pred_check_branch
    %283 = sbr.rel (0) target = $region41
  $region40: #{decoder_forward.23} parent=0 // pred_region
    _
  $region41: #{decoder_forward.23} parent=0 // pred_fallthru
    _
  // Predicated region
  $region42: #{decoder_forward.23} parent=0 // pred_check
    _
  $region43: #{decoder_forward.23} parent=0 // pred_check_branch
    %285 = sbr.rel (0) target = $region45
  $region44: #{decoder_forward.23} parent=0 // pred_region
    _
  $region45: #{decoder_forward.23} parent=0 // pred_fallthru
    _

// kernel: decoder_forward.31
$region0: #{decoder_forward.31}
  #allocation0 [shape = 'u32[]', space=smem, size = 0x4, offset = 0x4, fixed_abs, tag = 'smem constant byte address 0x4 - core index']
  #allocation1 [shape = 'u32[144,128]{1,0:T(1,128)}', space=vmem, size = 0x12000, scoped, tag = 'internal scratch']
  #allocation2 [shape = 'bf16[16,32]{1,0:T(16,128)(2,1)}', space=vmem, size = 0x1000, scoped, tag = 'scratch operand']
  #allocation3 [shape = 'f32[16,32]{1,0:T(8,128)}', space=vmem, size = 0x2000, scoped, tag = 'scratch operand']
  %s0 = inlined_call_operand.vmem [shape: f32[16,32], index: 0, kind: input, shape index: {}]
  %s1 = inlined_call_operand.vmem [shape: f32[1,32], index: 1, kind: input, shape index: {}]
  %s2 = inlined_call_operand.vmem [shape: f32[1,32], index: 2, kind: input, shape index: {}]
  %s3 = inlined_call_operand.vmem [shape: bf16[32,128], index: 3, kind: input, shape index: {}]
  %s4 = inlined_call_operand.vmem [shape: f32[1,128], index: 4, kind: input, shape index: {}]
  %s5 = inlined_call_operand.vmem [shape: bf16[128,32], index: 5, kind: input, shape index: {}]
  %s6 = inlined_call_operand.vmem [shape: f32[1,32], index: 6, kind: input, shape index: {}]
  %s7 = inlined_call_operand.hbm [shape: f32[16,32], index: 7, kind: output, shape index: {}]
  %s8 = sld [smem:[#allocation0]]
  $region46: #{decoder_forward.31} parent=0
    _
  %s10 = ssub.s32 1, %s8
  %s11 = scalar_select 0, %s10, %s8
  $region1: #{decoder_forward.31} parent=0
    #allocation4 [shape = 'u8[8192]{0}', space=vmem, size = 0x2000, scoped, tag = 'output window, operand 0, single buffered']
    #allocation5 [shape = 's32[1]{0}', space=sflag, size = 0x4, scoped, tag = 'scoped memory for decoder_forward.31']
    %12 = vsyncpa [#allocation5], 0
    // Predicated region
    $region2: #{decoder_forward.31} parent=1 // pred_check
      _
    $region3: #{decoder_forward.31} parent=1 // pred_check_branch
      %14 = sbr.rel (0) target = $region5
    $region4: #{decoder_forward.31} parent=1 // pred_region
      _
    $region5: #{decoder_forward.31} parent=1 // pred_fallthru
      _
    // Predicated region
    $region6: #{decoder_forward.31} parent=1 // pred_check
      _
    $region7: #{decoder_forward.31} parent=1 // pred_check_branch
      %16 = sbr.rel (0) target = $region9
    $region8: #{decoder_forward.31} parent=1 // pred_region
      _
    $region9: #{decoder_forward.31} parent=1 // pred_fallthru
      _
    // Predicated region
    $region10: #{decoder_forward.31} parent=1 // pred_check
      _
    $region11: #{decoder_forward.31} parent=1 // pred_check_branch
      %18 = sbr.rel (0) target = $region13
    $region12: #{decoder_forward.31} parent=1 // pred_region
      _
    $region13: #{decoder_forward.31} parent=1 // pred_fallthru
      _
    // Predicated region
    $region14: #{decoder_forward.31} parent=1 // pred_check
      _
    $region15: #{decoder_forward.31} parent=1 // pred_check_branch
      %20 = sbr.rel (0) target = $region17
    $region16: #{decoder_forward.31} parent=1 // pred_region
      _
    $region17: #{decoder_forward.31} parent=1 // pred_fallthru
      _
    // Predicated region
    $region18: #{decoder_forward.31} parent=1 // pred_check
      _
    $region19: #{decoder_forward.31} parent=1 // pred_check_branch
      %22 = sbr.rel (0) target = $region21
    $region20: #{decoder_forward.31} parent=1 // pred_region
      _
    $region21: #{decoder_forward.31} parent=1 // pred_fallthru
      _
    // Predicated region
    $region22: #{decoder_forward.31} parent=1 // pred_check
      _
    $region23: #{decoder_forward.31} parent=1 // pred_check_branch
      %24 = sbr.rel (0) target = $region25
    $region24: #{decoder_forward.31} parent=1 // pred_region
      _
    $region25: #{decoder_forward.31} parent=1 // pred_fallthru
      _
    // Predicated region
    $region26: #{decoder_forward.31} parent=1 // pred_check
      _
    $region27: #{decoder_forward.31} parent=1 // pred_check_branch
      %26 = sbr.rel (0) target = $region29
    $region28: #{decoder_forward.31} parent=1 // pred_region
      _
    $region29: #{decoder_forward.31} parent=1 // pred_fallthru
      _
    %p28 = scmp.eq.s32.totalorder 0, 0
    // Predicated region
    $region30: #{decoder_forward.31} parent=1 // pred_check
      %p29 = pneg %p28
    $region31: #{decoder_forward.31} parent=1 // pred_check_branch
      %31 = sbr.rel (%p29) target = $region33
    $region32: #{decoder_forward.31} parent=1 // pred_region
      %v32 = vld [vmem:[%s0] sm:$0xff]
      %v33 = vld [vmem:[%s0 + $0x8] sm:$0xff]
      %vm34 = vcmask 261120
      %v35 = vsel %vm34, %v32, 0.0
      %36 = vadd.xlane.f32.xlu0 %v35
      %v37 = vpop.xlane.xlu0 %36
      %v38 = vsel %vm34, %v33, 0.0
      %39 = vadd.xlane.f32.xlu0 %v38
      %v40 = vpop.xlane.xlu0 %39
      %v41 = vrcp.pop 32.0
      %v42 = vmul.f32 %v37, %v41
      %v43 = vmul.f32 %v40, %v41
      %v44 = vsub.f32 %v32, %v42
      %v45 = vsub.f32 %v33, %v43
      %v46 = vmul.f32 %v44, %v44
      %v47 = vmul.f32 %v45, %v45
      %v48 = vsel %vm34, %v46, 0.0
      %49 = vadd.xlane.f32.xlu0 %v48
      %v50 = vpop.xlane.xlu0 %49
      %v51 = vsel %vm34, %v47, 0.0
      %52 = vadd.xlane.f32.xlu0 %v51
      %v53 = vpop.xlane.xlu0 %52
      %v54 = vmul.f32 %v50, %v41
      %v55 = vmul.f32 %v53, %v41
      %v56 = vadd.f32 %v54, 1e-05
      %v57 = vadd.f32 %v55, 1e-05
      %v58 = vrsqrt.pop %v56
      %v59 = vrsqrt.pop %v57
      %v60 = vmul.f32 %v44, %v58
      %v61 = vmul.f32 %v45, %v59
      %v62 = vld [vmem:[%s1] sm:$0x1]
      %v64 = vlaneseq
      %v65 = vshrl.u32 %v64, 7
      %v66 = vsub.s32 0, %v65
      %v67 = vrot.slane %v62, %v66
      %v69 = vmul.f32 %v60, %v67
      %v70 = vmul.f32 %v61, %v67
      %v71 = vld [vmem:[%s2] sm:$0x1]
      %v73 = vlaneseq
      %v74 = vshrl.u32 %v73, 7
      %v75 = vsub.s32 0, %v74
      %v76 = vrot.slane %v71, %v75
      %v78 = vadd.f32 %v69, %v76
      %v79 = vadd.f32 %v70, %v76
      %v80 = vpack.c.bf16 %v79, %v78
      %81 = vst.msk [vmem:[#allocation2] sm:$0xff] %vm34, %v80
      %v82 = vld [vmem:[%s6] sm:$0x1]
      %v84 = vlaneseq
      %v85 = vshrl.u32 %v84, 7
      %v86 = vsub.s32 0, %v85
      %v87 = vrot.slane %v82, %v86
      %v89 = vadd.f32 %v32, %v87
      %v90 = vadd.f32 %v33, %v87
      %91 = vst.msk [vmem:[#allocation3] sm:$0xff] %vm34, %v89
      %92 = vst.msk [vmem:[#allocation3 + $0x8] sm:$0xff] %vm34, %v90
    $region33: #{decoder_forward.31} parent=1 // pred_fallthru
      _
    %v93 = vld [vmem:[#allocation2] sm:$0xff]
    %v94 = vld [vmem:[%s3] sm:$0xf]
    %v95 = vld [vmem:[%s3 + $0x4] sm:$0xf]
    %v96 = vld [vmem:[%s3 + $0x8] sm:$0xf]
    %v97 = vld [vmem:[%s3 + $0xc] sm:$0xf]
    %v98 = vld [vmem:[%s4] sm:$0x1]
    %v100 = vlaneseq
    %v101 = vshrl.u32 %v100, 7
    %v102 = vsub.s32 0, %v101
    %v103 = vrot.slane %v98, %v102
    %v109 = vunpack.c.l.b16 %v94
    %v110 = vunpack.c.l.b16 %v95
    %v111 = vunpack.c.l.b16 %v96
    %v112 = vunpack.c.l.b16 %v97
    %v113 = vpack.c.b16 %v110, %v109
    %v114 = vpack.c.b16 %v112, %v111
    %vm117 = vcmask 261120
    %v119 = vsel %vm117, %v93, 0
    %121 = vmatprep.subr.bf16.mxu0 0
    %122 = vmatpush1.bf16.msra.mxu0 %v113
    %123 = vmatprep.subr.bf16.mxu0 0
    %124 = vmatpush1.bf16.msra.mxu0 %v114
    %125 = vmatprep.subr.bf16.mxu0 0
    %126 = vmatpush1.bf16.msra.mxu0 0
    %127 = vmatprep.subr.bf16.mxu0 0
    %128 = vmatpush1.bf16.msra.mxu0 0
    %129 = vmatprep.subr.bf16.mxu0 0
    %130 = vmatpush1.bf16.msra.mxu0 0
    %131 = vmatprep.subr.bf16.mxu0 0
    %132 = vmatpush1.bf16.msra.mxu0 0
    %133 = vmatprep.subr.bf16.mxu0 0
    %134 = vmatpush1.bf16.msra.mxu0 0
    %135 = vmatprep.subr.bf16.mxu0 0
    %136 = vmatpush1.bf16.msra.mxu0 0
    %137 = vmatprep.subr.bf16.mxu0 0
    %138 = vmatpush1.bf16.msra.mxu0 0
    %139 = vmatprep.subr.bf16.mxu0 0
    %140 = vmatpush1.bf16.msra.mxu0 0
    %141 = vmatprep.subr.bf16.mxu0 0
    %142 = vmatpush1.bf16.msra.mxu0 0
    %143 = vmatprep.subr.bf16.mxu0 0
    %144 = vmatpush1.bf16.msra.mxu0 0
    %145 = vmatprep.subr.bf16.mxu0 0
    %146 = vmatpush1.bf16.msra.mxu0 0
    %147 = vmatprep.subr.bf16.mxu0 0
    %148 = vmatpush1.bf16.msra.mxu0 0
    %149 = vmatprep.subr.bf16.mxu0 0
    %150 = vmatpush1.bf16.msra.mxu0 0
    %151 = vmatprep.subr.bf16.mxu0 0
    %152 = vmatpush1.bf16.msra.mxu0 0
    %153 = vmatprep.mubr.bf16.mxu0 0
    %154 = vmatmul.mubr.bf16.gmra.mrb[0].mxu0 %v119
    %v155 = vpop.f32.mrb[0].mxu0
    %v156 = vadd.f32 %v103, %v155
    %v157 = vpop.f32.mrb[0].mxu0
    %v158 = vpop.f32.mrb[0].mxu0
    %v159 = vadd.f32 %v103, %v158
    %v160 = vpop.f32.mrb[0].mxu0
    %161 = vdwg.mxu0
    %v162 = vmax.f32 %v156, 0.0
    %v163 = vmax.f32 %v159, 0.0
    %v164 = vld [vmem:[#allocation3] sm:$0xff]
    %v165 = vld [vmem:[#allocation3 + $0x8] sm:$0xff]
    %v166 = vpack.c.bf16 %v163, %v162
    %v167 = vld [vmem:[%s5] sm:$0xf]
    %v168 = vld [vmem:[%s5 + $0x4] sm:$0xf]
    %v169 = vld [vmem:[%s5 + $0x8] sm:$0xf]
    %v170 = vld [vmem:[%s5 + $0xc] sm:$0xf]
    %v171 = vld [vmem:[%s5 + $0x10] sm:$0xf]
    %v172 = vld [vmem:[%s5 + $0x14] sm:$0xf]
    %v173 = vld [vmem:[%s5 + $0x18] sm:$0xf]
    %v174 = vld [vmem:[%s5 + $0x1c] sm:$0xf]
    %v175 = vld [vmem:[%s5 + $0x20] sm:$0xf]
    %v176 = vld [vmem:[%s5 + $0x24] sm:$0xf]
    %v177 = vld [vmem:[%s5 + $0x28] sm:$0xf]
    %v178 = vld [vmem:[%s5 + $0x2c] sm:$0xf]
    %v179 = vld [vmem:[%s5 + $0x30] sm:$0xf]
    %v180 = vld [vmem:[%s5 + $0x34] sm:$0xf]
    %v181 = vld [vmem:[%s5 + $0x38] sm:$0xf]
    %v182 = vld [vmem:[%s5 + $0x3c] sm:$0xf]
    %v199 = vunpack.c.l.b16 %v167
    %v200 = vunpack.c.l.b16 %v168
    %v201 = vunpack.c.l.b16 %v169
    %v202 = vunpack.c.l.b16 %v170
    %v203 = vunpack.c.l.b16 %v171
    %v204 = vunpack.c.l.b16 %v172
    %v205 = vunpack.c.l.b16 %v173
    %v206 = vunpack.c.l.b16 %v174
    %v207 = vunpack.c.l.b16 %v175
    %v208 = vunpack.c.l.b16 %v176
    %v209 = vunpack.c.l.b16 %v177
    %v210 = vunpack.c.l.b16 %v178
    %v211 = vunpack.c.l.b16 %v179
    %v212 = vunpack.c.l.b16 %v180
    %v213 = vunpack.c.l.b16 %v181
    %v214 = vunpack.c.l.b16 %v182
    %v215 = vpack.c.b16 %v200, %v199
    %v216 = vpack.c.b16 %v202, %v201
    %v217 = vpack.c.b16 %v204, %v203
    %v218 = vpack.c.b16 %v206, %v205
    %v219 = vpack.c.b16 %v208, %v207
    %v220 = vpack.c.b16 %v210, %v209
    %v221 = vpack.c.b16 %v212, %v211
    %v222 = vpack.c.b16 %v214, %v213
    %231 = vmatprep.subr.bf16.mxu0 0
    %232 = vmatpush1.bf16.msra.mxu0 %v215
    %233 = vmatprep.subr.bf16.mxu0 0
    %234 = vmatpush1.bf16.msra.mxu0 %v216
    %235 = vmatprep.subr.bf16.mxu0 0
    %236 = vmatpush1.bf16.msra.mxu0 %v217
    %237 = vmatprep.subr.bf16.mxu0 0
    %238 = vmatpush1.bf16.msra.mxu0 %v218
    %239 = vmatprep.subr.bf16.mxu0 0
    %240 = vmatpush1.bf16.msra.mxu0 %v219
    %241 = vmatprep.subr.bf16.mxu0 0
    %242 = vmatpush1.bf16.msra.mxu0 %v220
    %243 = vmatprep.subr.bf16.mxu0 0
    %244 = vmatpush1.bf16.msra.mxu0 %v221
    %245 = vmatprep.subr.bf16.mxu0 0
    %246 = vmatpush1.bf16.msra.mxu0 %v222
    %247 = vmatprep.subr.bf16.mxu0 0
    %248 = vmatpush1.bf16.msra.mxu0 0
    %249 = vmatprep.subr.bf16.mxu0 0
    %250 = vmatpush1.bf16.msra.mxu0 0
    %251 = vmatprep.subr.bf16.mxu0 0
    %252 = vmatpush1.bf16.msra.mxu0 0
    %253 = vmatprep.subr.bf16.mxu0 0
    %254 = vmatpush1.bf16.msra.mxu0 0
    %255 = vmatprep.subr.bf16.mxu0 0
    %256 = vmatpush1.bf16.msra.mxu0 0
    %257 = vmatprep.subr.bf16.mxu0 0
    %258 = vmatpush1.bf16.msra.mxu0 0
    %259 = vmatprep.subr.bf16.mxu0 0
    %260 = vmatpush1.bf16.msra.mxu0 0
    %261 = vmatprep.subr.bf16.mxu0 0
    %262 = vmatpush1.bf16.msra.mxu0 0
    %263 = vmatprep.mubr.bf16.mxu0 0
    %264 = vmatmul.mubr.bf16.gmra.mrb[0].mxu0 %v166
    %v265 = vpop.f32.mrb[0].mxu0
    %v266 = vadd.f32 0.0, %v265
    %v267 = vpop.f32.mrb[0].mxu0
    %v268 = vpop.f32.mrb[0].mxu0
    %v269 = vadd.f32 0.0, %v268
    %v270 = vpop.f32.mrb[0].mxu0
    %271 = vdwg.mxu0
    %v272 = vadd.f32 %v164, %v266
    %v273 = vadd.f32 %v165, %v269
    %274 = vst.msk [vmem:[#allocation3] sm:$0xff] %vm117, %v272
    %275 = vst.msk [vmem:[#allocation3 + $0x8] sm:$0xff] %vm117, %v273
    // Predicated region
    $region34: #{decoder_forward.31} parent=1 // pred_check
      %p276 = pneg %p28
    $region35: #{decoder_forward.31} parent=1 // pred_check_branch
      %278 = sbr.rel (%p276) target = $region37
    $region36: #{decoder_forward.31} parent=1 // pred_region
      %v279 = vld [vmem:[#allocation3] sm:$0xff]
      %v280 = vld [vmem:[#allocation3 + $0x8] sm:$0xff]
      %281 = vst.msk [vmem:[#allocation4] sm:$0xff] %vm117, %v279
      %282 = vst.msk [vmem:[#allocation4 + $0x8] sm:$0xff] %vm117, %v280
    $region37: #{decoder_forward.31} parent=1 // pred_fallthru
      _
    // Predicated region
    $region38: #{decoder_forward.31} parent=1 // pred_check
      _
    $region39: #{decoder_forward.31} parent=1 // pred_check_branch
      %284 = sbr.rel (0) target = $region41
    $region40: #{decoder_forward.31} parent=1 // pred_region
      %s286 = ssub.s32 256, 256
      %287 = vsyncadd [#allocation5], %s286
      %s288 = sshll.u32 [#allocation4], 4
      %s289 = int_to_ptr.vmem [resolvable:$true] %s288
      %294 = dma.vmem_to_hbm [thread:$0]  %s289, 256, %s7, [#allocation5], 128, 128, 8
    $region41: #{decoder_forward.31} parent=1 // pred_fallthru
      _
    // Predicated region
    $region42: #{decoder_forward.31} parent=1 // pred_check
      _
    $region43: #{decoder_forward.31} parent=1 // pred_check_branch
      %296 = sbr.rel (0) target = $region45
    $region44: #{decoder_forward.31} parent=1 // pred_region
      %297 = dma.done [#allocation5], 256
    $region45: #{decoder_forward.31} parent=1 // pred_fallthru
      _
    %298 = vsyncpa [#allocation5], 1

</llo_original>
